<compile_context>
chip_gen: v7x
topology: tpu7x:2x2x1
jax: 0.10.0
libtpu: 0.0.40
codegen_flags: <defaults>
</compile_context>

<pallas_src>
import functools
import math

import jax
import jax.numpy as jnp
from jax import lax
from jax.experimental import pallas as pl
from jax.experimental.pallas import tpu as pltpu

EPS = 1e-5
LANE = 128
VMEM_LIMIT = 48 * 1024 * 1024   # fits v7x's 64 MiB physical VMEM with headroom


def _round_up(v, m):
    return (v + m - 1) // m * m


def _stat_rows(a, c):
    """(rows 0/1 = sum / sum-of-squares over axis 0, padded to 8 sublanes)."""
    return jnp.concatenate(
        [jnp.sum(a, 0, keepdims=True),
         jnp.sum(a * a, 0, keepdims=True),
         jnp.zeros((6, c), jnp.float32)], axis=0)


def _accumulate(ref, rows, n):
    @pl.when(n == 0)
    def _():
        ref[...] = rows

    @pl.when(n != 0)
    def _():
        ref[...] = ref[...] + rows


# ---------------------------------------------------------------------------
# Kernel A: conv1 (3x3, stride s) [+ 1x1 projection shortcut] per-image tile,
#           plus per-channel sum / sum-sq accumulation for BN1 (and BN_sc).
# ---------------------------------------------------------------------------
def _make_conv1_kernel(s, Ho, Wo, Cip, Cop, has_proj, cdt):
    Mt = Ho * Wo
    sc_phase = (1 % s) * s + (1 % s)      # stride-phase holding x[::s, ::s]
    sc_off = (1 - 1 % s) // s

    def body(ph_ref, w1_ref, wsc_ref, h1_ref, hs_ref, s1_ref, ssc_ref):
        n = pl.program_id(0)

        acc = jnp.zeros((Mt, Cop), jnp.float32)
        for dy in range(3):                       # 3 matmuls with K = 3*Cip
            taps = []
            for dx in range(3):
                p = (dy % s) * s + (dx % s)
                taps.append(ph_ref[0,
                                   dy // s: dy // s + Ho,
                                   dx // s: dx // s + Wo,
                                   p * Cip:(p + 1) * Cip])
            pat = jnp.concatenate(taps, axis=-1).reshape(Mt, 3 * Cip)
            acc += jnp.dot(pat.astype(cdt), w1_ref[dy],
                           preferred_element_type=jnp.float32)
        h1_ref[0] = acc.reshape(Ho, Wo, Cop)
        _accumulate(s1_ref, _stat_rows(acc, Cop), n)

        if has_proj:
            xs = ph_ref[0, sc_off: sc_off + Ho, sc_off: sc_off + Wo,
                        sc_phase * Cip:(sc_phase + 1) * Cip]
            hs = jnp.dot(xs.reshape(Mt, Cip).astype(cdt), wsc_ref[...],
                         preferred_element_type=jnp.float32)
            hs_ref[0] = hs.reshape(Ho, Wo, Cop)
            _accumulate(ssc_ref, _stat_rows(hs, Cop), n)

    if has_proj:
        return body

    def body_id(ph_ref, w1_ref, h1_ref, s1_ref):      # no dummy shortcut DMAs
        body(ph_ref, w1_ref, None, h1_ref, None, s1_ref, None)

    return body_id


def _conv1_call(phases, w1s, wsc, N, Ho, Wo, Hph, Wph, P, Cip, Cop, s,
                has_proj, cdt):
    kern = _make_conv1_kernel(s, Ho, Wo, Cip, Cop, has_proj, cdt)
    tile4 = pl.BlockSpec((1, Ho, Wo, Cop), lambda n: (n, 0, 0, 0))
    stat = pl.BlockSpec((8, Cop), lambda n: (0, 0))
    in_specs = [pl.BlockSpec((1, Hph, Wph, P * Cip), lambda n: (n, 0, 0, 0)),
                pl.BlockSpec((3, 3 * Cip, Cop), lambda n: (0, 0, 0))]
    args = [phases, w1s]
    h1_sd = jax.ShapeDtypeStruct((N, Ho, Wo, Cop), jnp.float32)
    st_sd = jax.ShapeDtypeStruct((8, Cop), jnp.float32)
    if has_proj:
        in_specs.append(pl.BlockSpec((Cip, Cop), lambda n: (0, 0)))
        args.append(wsc)
        out_specs = [tile4, tile4, stat, stat]
        out_shape = [h1_sd, h1_sd, st_sd, st_sd]
    else:
        out_specs = [tile4, stat]
        out_shape = [h1_sd, st_sd]

    flops = 2 * N * Ho * Wo * Cop * (9 * Cip + (Cip if has_proj else 0))
    bytes_est = (N * Hph * Wph * P * Cip * phases.dtype.itemsize
                 + 9 * Cip * Cop * w1s.dtype.itemsize
                 + (2 if has_proj else 1) * N * Ho * Wo * Cop * 4)
    return pl.pallas_call(
        kern,
        grid=(N,),
        in_specs=in_specs,
        out_specs=out_specs,
        out_shape=out_shape,
        compiler_params=pltpu.CompilerParams(
            dimension_semantics=("arbitrary",),       # BN stats = reduction
            vmem_limit_bytes=VMEM_LIMIT),
        cost_estimate=pl.CostEstimate(flops=int(flops), transcendentals=0,
                                      bytes_accessed=int(bytes_est)),
    )(*args)


# ---------------------------------------------------------------------------
# Kernel B: BN1 + ReLU + conv2 (3x3, stride 1) per-image tile, plus BN2 stats.
# ---------------------------------------------------------------------------
def _make_conv2_kernel(Ho, Wo, Cop, cdt):
    Mt = Ho * Wo

    def body(h1_ref, w2_ref, sc_ref, sh_ref, h2_ref, s2_ref, pad_ref):
        n = pl.program_id(0)

        @pl.when(n == 0)
        def _():
            # Zero only once: halo stays zero, interior is overwritten below.
            pad_ref[...] = jnp.zeros(pad_ref.shape, pad_ref.dtype)

        h1v = h1_ref[0].reshape(Mt, Cop)
        out1 = jnp.maximum(h1v * sc_ref[...] + sh_ref[...], 0.0)     # f32 BN
        pad_ref[1:1 + Ho, 1:1 + Wo, :] = out1.reshape(Ho, Wo, Cop).astype(cdt)

        acc = jnp.zeros((Mt, Cop), jnp.float32)
        for dy in range(3):                       # 3 matmuls with K = 3*Cop
            taps = [pad_ref[dy:dy + Ho, dx:dx + Wo, :] for dx in range(3)]
            pat = jnp.concatenate(taps, axis=-1).reshape(Mt, 3 * Cop)
            acc += jnp.dot(pat.astype(cdt), w2_ref[dy],
                           preferred_element_type=jnp.float32)
        h2_ref[0] = acc.reshape(Ho, Wo, Cop)
        _accumulate(s2_ref, _stat_rows(acc, Cop), n)

    return body


def _conv2_call(h1, w2s, sc1, sh1, N, Ho, Wo, Cop, cdt):
    kern = _make_conv2_kernel(Ho, Wo, Cop, cdt)
    tile4 = pl.BlockSpec((1, Ho, Wo, Cop), lambda n: (n, 0, 0, 0))
    vec = pl.BlockSpec((1, Cop), lambda n: (0, 0))
    flops = 2 * N * Ho * Wo * 9 * Cop * Cop
    bytes_est = 2 * N * Ho * Wo * Cop * 4 + 9 * Cop * Cop * w2s.dtype.itemsize
    return pl.pallas_call(
        kern,
        grid=(N,),
        in_specs=[tile4,
                  pl.BlockSpec((3, 3 * Cop, Cop), lambda n: (0, 0, 0)),
                  vec, vec],
        out_specs=[tile4, pl.BlockSpec((8, Cop), lambda n: (0, 0))],
        out_shape=[jax.ShapeDtypeStruct((N, Ho, Wo, Cop), jnp.float32),
                   jax.ShapeDtypeStruct((8, Cop), jnp.float32)],
        scratch_shapes=[pltpu.VMEM((Ho + 2, Wo + 2, Cop), cdt)],
        compiler_params=pltpu.CompilerParams(
            dimension_semantics=("arbitrary",),
            vmem_limit_bytes=VMEM_LIMIT),
        cost_estimate=pl.CostEstimate(flops=int(flops), transcendentals=0,
                                      bytes_accessed=int(bytes_est)),
    )(h1, w2s, sc1, sh1)


# ---------------------------------------------------------------------------
# Kernel C: BN2 + shortcut (BN_sc or identity) + residual add + ReLU.
# ---------------------------------------------------------------------------
def _make_residual_kernel(Ho, Wo, Cop, has_proj):
    Mt = Ho * Wo

    if has_proj:
        def body(h2_ref, hs_ref, sc2_ref, sh2_ref, scs_ref, shs_ref, y_ref):
            h2 = h2_ref[0].reshape(Mt, Cop)
            hs = hs_ref[0].reshape(Mt, Cop)
            res = hs * scs_ref[...] + shs_ref[...]
            y = jnp.maximum(h2 * sc2_ref[...] + sh2_ref[...] + res, 0.0)
            y_ref[0] = y.reshape(Ho, Wo, Cop)
        return body

    def body_id(h2_ref, x_ref, sc2_ref, sh2_ref, y_ref):
        h2 = h2_ref[0].reshape(Mt, Cop)
        xr = x_ref[0].reshape(Mt, Cop)
        y = jnp.maximum(h2 * sc2_ref[...] + sh2_ref[...] + xr, 0.0)
        y_ref[0] = y.reshape(Ho, Wo, Cop)
    return body_id


def _residual_call(h2, res, sc2, sh2, scs, shs, N, Ho, Wo, Cop, has_proj):
    kern = _make_residual_kernel(Ho, Wo, Cop, has_proj)
    tile4 = pl.BlockSpec((1, Ho, Wo, Cop), lambda n: (n, 0, 0, 0))
    vec = pl.BlockSpec((1, Cop), lambda n: (0, 0))
    in_specs = [tile4, tile4, vec, vec] + ([vec, vec] if has_proj else [])
    args = [h2, res, sc2, sh2] + ([scs, shs] if has_proj else [])
    return pl.pallas_call(
        kern,
        grid=(N,),
        in_specs=in_specs,
        out_specs=tile4,
        out_shape=jax.ShapeDtypeStruct((N, Ho, Wo, Cop), jnp.float32),
        compiler_params=pltpu.CompilerParams(
            dimension_semantics=("parallel",),        # no cross-step state
            vmem_limit_bytes=VMEM_LIMIT),
    )(*args)


# ---------------------------------------------------------------------------
# Python wrapper: layout plumbing only (NCHW->NHWC, channel/phase padding),
# BN finalize is O(C) scalar glue between the two passes.
# ---------------------------------------------------------------------------
@functools.partial(jax.jit, static_argnames=("stride", "compute_dtype"))
def basic_block_forward(x_nchw, params, stride, compute_dtype=jnp.bfloat16):
    x = jnp.transpose(x_nchw, (0, 2, 3, 1)).astype(jnp.float32)   # NHWC
    N, H, W, Cin = x.shape
    Cout = params["w1"].shape[-1]
    s = int(stride)
    Ho = (H - 1) // s + 1
    Wo = (W - 1) // s + 1
    M = float(N * Ho * Wo)
    Cip = _round_up(Cin, LANE)
    Cop = _round_up(Cout, LANE)
    has_proj = (s != 1) or (Cin != Cout)
    cdt = compute_dtype

    # lane-dense channel padding (padded channels are exactly zero end-to-end
    # because the padded gammas/betas/weights are zero).
    xc = jnp.pad(x, ((0, 0), (0, 0), (0, 0), (0, Cip - Cin)))

    # 1-pixel zero border + stride-phase decomposition: 1x HBM traffic,
    # all in-kernel tap reads become plain (unstrided) slices.
    Hph, Wph = Ho + 2 // s, Wo + 2 // s
    PH, PW = s * Hph, s * Wph
    xpad = jnp.pad(xc, ((0, 0), (1, PH - H - 1), (1, PW - W - 1), (0, 0)))
    phases = jnp.concatenate(
        [xpad[:, py::s, px::s, :] for py in range(s) for px in range(s)],
        axis=-1).astype(cdt)                       # (N, Hph, Wph, s*s*Cip)
    P = s * s

    def padc(v):
        return jnp.pad(v.astype(jnp.float32), (0, Cop - v.shape[0]))

    w1s = jnp.pad(params["w1"].astype(jnp.float32),
                  ((0, 0), (0, 0), (0, Cip - Cin), (0, Cop - Cout))
                  ).reshape(3, 3 * Cip, Cop).astype(cdt)
    w2s = jnp.pad(params["w2"].astype(jnp.float32),
                  ((0, 0), (0, 0), (0, Cop - Cout), (0, Cop - Cout))
                  ).reshape(3, 3 * Cop, Cop).astype(cdt)
    g1, b1 = padc(params["g1"]), padc(params["b1"])
    g2, b2 = padc(params["g2"]), padc(params["b2"])

    def bn_affine(sums, gamma, beta):
        mean = sums[0] / M
        var = jnp.maximum(sums[1] / M - mean * mean, 0.0)
        scale = gamma * lax.rsqrt(var + EPS)
        shift = beta - mean * scale
        return scale.reshape(1, Cop), shift.reshape(1, Cop)

    # ---- pass 1: conv1 (+ projection shortcut) and their BN statistics ----
    if has_proj:
        wsc = jnp.pad(params["wsc"].astype(jnp.float32),
                      ((0, 0), (0, 0), (0, Cip - Cin), (0, Cop - Cout))
                      ).reshape(Cip, Cop).astype(cdt)
        gsc, bsc = padc(params["gsc"]), padc(params["bsc"])
        h1, hs, s1, ssc = _conv1_call(phases, w1s, wsc, N, Ho, Wo, Hph, Wph,
                                      P, Cip, Cop, s, True, cdt)
    else:
        h1, s1 = _conv1_call(phases, w1s, None, N, Ho, Wo, Hph, Wph,
                             P, Cip, Cop, s, False, cdt)

    # ---- pass 2: BN1 + ReLU + conv2 and BN2 statistics ----
    sc1, sh1 = bn_affine(s1, g1, b1)
    h2, s2 = _conv2_call(h1, w2s, sc1, sh1, N, Ho, Wo, Cop, cdt)
    sc2, sh2 = bn_affine(s2, g2, b2)

    # ---- pass 3: BN2 + shortcut + add + ReLU ----
    if has_proj:
        scs, shs = bn_affine(ssc, gsc, bsc)
        y = _residual_call(h2, hs, sc2, sh2, scs, shs, N, Ho, Wo, Cop, True)
    else:
        y = _residual_call(h2, xc, sc2, sh2, None, None, N, Ho, Wo, Cop, False)

    out = y[:, :, :, :Cout]
    return jnp.transpose(out, (0, 3, 1, 2))       # back to NCHW


# -------------------- pure-JAX reference (for verification) --------------------
def _bn_train_ref(h, g, b):
    m = h.mean(axis=(0, 1, 2), keepdims=True)
    v = ((h - m) ** 2).mean(axis=(0, 1, 2), keepdims=True)
    return (h - m) * lax.rsqrt(v + EPS) * g.reshape(1, 1, 1, -1) + b.reshape(1, 1, 1, -1)


def basic_block_ref(x_nchw, params, stride):
    dn = ("NHWC", "HWIO", "NHWC")
    conv = functools.partial(lax.conv_general_dilated,
                             dimension_numbers=dn,
                             precision=lax.Precision.HIGHEST)
    x = jnp.transpose(x_nchw, (0, 2, 3, 1)).astype(jnp.float32)
    Cin, Cout = x.shape[-1], params["w1"].shape[-1]
    h1 = conv(x, params["w1"], (stride, stride), ((1, 1), (1, 1)))
    out1 = jnp.maximum(_bn_train_ref(h1, params["g1"], params["b1"]), 0.0)
    h2 = conv(out1, params["w2"], (1, 1), ((1, 1), (1, 1)))
    out2 = _bn_train_ref(h2, params["g2"], params["b2"])
    if stride != 1 or Cin != Cout:
        hs = conv(x, params["wsc"], (stride, stride), ((0, 0), (0, 0)))
        sc = _bn_train_ref(hs, params["gsc"], params["bsc"])
    else:
        sc = x
    out = jnp.maximum(out2 + sc, 0.0)
    return jnp.transpose(out, (0, 3, 1, 2))


def make_params(key, cin, cout, stride):
    k1, k2, k3 = jax.random.split(key, 3)
    p = {
        "w1": 0.1 * jax.random.normal(k1, (3, 3, cin, cout), jnp.float32),
        "w2": 0.1 * jax.random.normal(k2, (3, 3, cout, cout), jnp.float32),
        "g1": jnp.ones((cout,), jnp.float32),   # nn.BatchNorm2d init
        "b1": jnp.zeros((cout,), jnp.float32),
        "g2": jnp.ones((cout,), jnp.float32),
        "b2": jnp.zeros((cout,), jnp.float32),
    }
    if stride != 1 or cin != cout:
        p["wsc"] = 0.1 * jax.random.normal(k3, (1, 1, cin, cout), jnp.float32)
        p["gsc"] = jnp.ones((cout,), jnp.float32)
        p["bsc"] = jnp.zeros((cout,), jnp.float32)
    return p


if __name__ == "__main__":
    key = jax.random.PRNGKey(0)
    kx, kp1, kp2 = jax.random.split(key, 3)

    # Case 1: projection shortcut (stride=2, 4 -> 8 channels), x: (2,4,16,16)
    x = jax.random.normal(kx, (2, 4, 16, 16), jnp.float32)
    params = make_params(kp1, 4, 8, stride=2)
    ref = basic_block_ref(x, params, stride=2)

    out = jax.block_until_ready(
        basic_block_forward(x, params, stride=2, compute_dtype=jnp.float32))
    assert out.shape == (2, 8, 8, 8)
    err = float(jnp.max(jnp.abs(out - ref)))
    assert err < 2e-3, err

    out_bf16 = jax.block_until_ready(
        basic_block_forward(x, params, stride=2, compute_dtype=jnp.bfloat16))
    err_bf = float(jnp.max(jnp.abs(out_bf16 - ref)))
    assert err_bf < 1.5e-1, err_bf

    # Case 2: identity shortcut (stride=1, 8 -> 8 channels), x: (2,8,16,16)
    x2 = jax.random.normal(kx, (2, 8, 16, 16), jnp.float32)
    params2 = make_params(kp2, 8, 8, stride=1)
    ref2 = basic_block_ref(x2, params2, stride=1)
    out2 = jax.block_until_ready(
        basic_block_forward(x2, params2, stride=1, compute_dtype=jnp.float32))
    assert out2.shape == (2, 8, 16, 16)
    err2 = float(jnp.max(jnp.abs(out2 - ref2)))
    assert err2 < 2e-3, err2

    print("KERNEL_OK")
</pallas_src>

<mosaic_0001>
module attributes {stable_mosaic.version = 11 : i64} {
  func.func @body(%arg0: i32, %arg1: memref<1x9x9x512xf32, #tpu.memory_space<vmem>>, %arg2: memref<3x384x128xf32, #tpu.memory_space<vmem>>, %arg3: memref<128x128xf32, #tpu.memory_space<vmem>>, %arg4: memref<1x8x8x128xf32, #tpu.memory_space<vmem>>, %arg5: memref<1x8x8x128xf32, #tpu.memory_space<vmem>>, %arg6: memref<8x128xf32, #tpu.memory_space<vmem>>, %arg7: memref<8x128xf32, #tpu.memory_space<vmem>>) attributes {dimension_semantics = [#tpu.dimension_semantics<arbitrary>], iteration_bounds = array<i64: 2>, scalar_prefetch = 0 : i64, scratch_operands = 0 : i64, tpu.core_type = #tpu.core_type<tc>, window_params = [{transform_indices = @transform_0, window_bounds = array<i64: 1, 9, 9, 512>}, {pipeline_mode = #tpu.pipeline_mode<synchronous>, transform_indices = @transform_1, window_bounds = array<i64: 3, 384, 128>}, {pipeline_mode = #tpu.pipeline_mode<synchronous>, transform_indices = @transform_2, window_bounds = array<i64: 128, 128>}, {transform_indices = @transform_3, window_bounds = array<i64: 1, 8, 8, 128>}, {transform_indices = @transform_4, window_bounds = array<i64: 1, 8, 8, 128>}, {pipeline_mode = #tpu.pipeline_mode<synchronous>, transform_indices = @transform_5, window_bounds = array<i64: 8, 128>}, {pipeline_mode = #tpu.pipeline_mode<synchronous>, transform_indices = @transform_6, window_bounds = array<i64: 8, 128>}]} {
    %cst = arith.constant 0.000000e+00 : f32
    %0 = vector.broadcast %cst : f32 to vector<64x128xf32>
    %c0 = arith.constant 0 : index
    %c0_0 = arith.constant 0 : index
    %c0_1 = arith.constant 0 : index
    %c0_2 = arith.constant 0 : index
    %1 = vector.load %arg1[%c0, %c0_0, %c0_1, %c0_2] : memref<1x9x9x512xf32, #tpu.memory_space<vmem>>, vector<1x8x8x128xf32>
    %2 = vector.shape_cast %1 : vector<1x8x8x128xf32> to vector<8x8x128xf32>
    %c0_3 = arith.constant 0 : index
    %c0_4 = arith.constant 0 : index
    %c0_5 = arith.constant 0 : index
    %c128 = arith.constant 128 : index
    %3 = vector.load %arg1[%c0_3, %c0_4, %c0_5, %c128] : memref<1x9x9x512xf32, #tpu.memory_space<vmem>>, vector<1x8x8x128xf32>
    %4 = vector.shape_cast %3 : vector<1x8x8x128xf32> to vector<8x8x128xf32>
    %c0_6 = arith.constant 0 : index
    %c0_7 = arith.constant 0 : index
    %c1 = arith.constant 1 : index
    %c0_8 = arith.constant 0 : index
    %5 = vector.load %arg1[%c0_6, %c0_7, %c1, %c0_8] : memref<1x9x9x512xf32, #tpu.memory_space<vmem>>, vector<1x8x8x128xf32>
    %6 = vector.shape_cast %5 : vector<1x8x8x128xf32> to vector<8x8x128xf32>
    %7 = tpu.concatenate %2, %4, %6 in 2 : vector<8x8x128xf32>, vector<8x8x128xf32>, vector<8x8x128xf32> -> vector<8x8x384xf32>
    %8 = vector.shape_cast %7 : vector<8x8x384xf32> to vector<64x384xf32>
    %c0_9 = arith.constant 0 : index
    %c0_10 = arith.constant 0 : index
    %c0_11 = arith.constant 0 : index
    %9 = vector.load %arg2[%c0_9, %c0_10, %c0_11] : memref<3x384x128xf32, #tpu.memory_space<vmem>>, vector<1x384x128xf32>
    %10 = vector.shape_cast %9 : vector<1x384x128xf32> to vector<384x128xf32>
    %cst_12 = arith.constant dense<0.000000e+00> : vector<64x128xf32>
    %11 = tpu.matmul %8, %10, %cst_12 {dimension_numbers = #tpu.dot_dimension_numbers<[1], [0], [0], [1], [0, 0, 1, 1], [], []>} : vector<64x384xf32>, vector<384x128xf32>, vector<64x128xf32> -> vector<64x128xf32>
    %12 = arith.addf %0, %11 : vector<64x128xf32>
    %c0_13 = arith.constant 0 : index
    %c0_14 = arith.constant 0 : index
    %c0_15 = arith.constant 0 : index
    %c256 = arith.constant 256 : index
    %13 = vector.load %arg1[%c0_13, %c0_14, %c0_15, %c256] : memref<1x9x9x512xf32, #tpu.memory_space<vmem>>, vector<1x8x8x128xf32>
    %14 = vector.shape_cast %13 : vector<1x8x8x128xf32> to vector<8x8x128xf32>
    %c0_16 = arith.constant 0 : index
    %c0_17 = arith.constant 0 : index
    %c0_18 = arith.constant 0 : index
    %c384 = arith.constant 384 : index
    %15 = vector.load %arg1[%c0_16, %c0_17, %c0_18, %c384] : memref<1x9x9x512xf32, #tpu.memory_space<vmem>>, vector<1x8x8x128xf32>
    %16 = vector.shape_cast %15 : vector<1x8x8x128xf32> to vector<8x8x128xf32>
    %c0_19 = arith.constant 0 : index
    %c0_20 = arith.constant 0 : index
    %c1_21 = arith.constant 1 : index
    %c256_22 = arith.constant 256 : index
    %17 = vector.load %arg1[%c0_19, %c0_20, %c1_21, %c256_22] : memref<1x9x9x512xf32, #tpu.memory_space<vmem>>, vector<1x8x8x128xf32>
    %18 = vector.shape_cast %17 : vector<1x8x8x128xf32> to vector<8x8x128xf32>
    %19 = tpu.concatenate %14, %16, %18 in 2 : vector<8x8x128xf32>, vector<8x8x128xf32>, vector<8x8x128xf32> -> vector<8x8x384xf32>
    %20 = vector.shape_cast %19 : vector<8x8x384xf32> to vector<64x384xf32>
    %c1_23 = arith.constant 1 : index
    %c0_24 = arith.constant 0 : index
    %c0_25 = arith.constant 0 : index
    %21 = vector.load %arg2[%c1_23, %c0_24, %c0_25] : memref<3x384x128xf32, #tpu.memory_space<vmem>>, vector<1x384x128xf32>
    %22 = vector.shape_cast %21 : vector<1x384x128xf32> to vector<384x128xf32>
    %cst_26 = arith.constant dense<0.000000e+00> : vector<64x128xf32>
    %23 = tpu.matmul %20, %22, %cst_26 {dimension_numbers = #tpu.dot_dimension_numbers<[1], [0], [0], [1], [0, 0, 1, 1], [], []>} : vector<64x384xf32>, vector<384x128xf32>, vector<64x128xf32> -> vector<64x128xf32>
    %24 = arith.addf %12, %23 : vector<64x128xf32>
    %c0_27 = arith.constant 0 : index
    %c1_28 = arith.constant 1 : index
    %c0_29 = arith.constant 0 : index
    %c0_30 = arith.constant 0 : index
    %25 = vector.load %arg1[%c0_27, %c1_28, %c0_29, %c0_30] : memref<1x9x9x512xf32, #tpu.memory_space<vmem>>, vector<1x8x8x128xf32>
    %26 = vector.shape_cast %25 : vector<1x8x8x128xf32> to vector<8x8x128xf32>
    %c0_31 = arith.constant 0 : index
    %c1_32 = arith.constant 1 : index
    %c0_33 = arith.constant 0 : index
    %c128_34 = arith.constant 128 : index
    %27 = vector.load %arg1[%c0_31, %c1_32, %c0_33, %c128_34] : memref<1x9x9x512xf32, #tpu.memory_space<vmem>>, vector<1x8x8x128xf32>
    %28 = vector.shape_cast %27 : vector<1x8x8x128xf32> to vector<8x8x128xf32>
    %c0_35 = arith.constant 0 : index
    %c1_36 = arith.constant 1 : index
    %c1_37 = arith.constant 1 : index
    %c0_38 = arith.constant 0 : index
    %29 = vector.load %arg1[%c0_35, %c1_36, %c1_37, %c0_38] : memref<1x9x9x512xf32, #tpu.memory_space<vmem>>, vector<1x8x8x128xf32>
    %30 = vector.shape_cast %29 : vector<1x8x8x128xf32> to vector<8x8x128xf32>
    %31 = tpu.concatenate %26, %28, %30 in 2 : vector<8x8x128xf32>, vector<8x8x128xf32>, vector<8x8x128xf32> -> vector<8x8x384xf32>
    %32 = vector.shape_cast %31 : vector<8x8x384xf32> to vector<64x384xf32>
    %c2 = arith.constant 2 : index
    %c0_39 = arith.constant 0 : index
    %c0_40 = arith.constant 0 : index
    %33 = vector.load %arg2[%c2, %c0_39, %c0_40] : memref<3x384x128xf32, #tpu.memory_space<vmem>>, vector<1x384x128xf32>
    %34 = vector.shape_cast %33 : vector<1x384x128xf32> to vector<384x128xf32>
    %cst_41 = arith.constant dense<0.000000e+00> : vector<64x128xf32>
    %35 = tpu.matmul %32, %34, %cst_41 {dimension_numbers = #tpu.dot_dimension_numbers<[1], [0], [0], [1], [0, 0, 1, 1], [], []>} : vector<64x384xf32>, vector<384x128xf32>, vector<64x128xf32> -> vector<64x128xf32>
    %36 = arith.addf %24, %35 : vector<64x128xf32>
    %37 = vector.shape_cast %36 : vector<64x128xf32> to vector<8x8x128xf32>
    %c0_42 = arith.constant 0 : index
    %c0_43 = arith.constant 0 : index
    %c0_44 = arith.constant 0 : index
    %c0_45 = arith.constant 0 : index
    %38 = vector.load %arg4[%c0_42, %c0_43, %c0_44, %c0_45] : memref<1x8x8x128xf32, #tpu.memory_space<vmem>>, vector<1x8x8x128xf32>
    %39 = vector.shape_cast %38 : vector<1x8x8x128xf32> to vector<8x8x128xf32>
    %40 = vector.shape_cast %37 : vector<8x8x128xf32> to vector<1x8x8x128xf32>
    tpu.vector_store %arg4[%c0_42, %c0_43, %c0_44, %c0_45], %40 {strides = array<i32>} : memref<1x8x8x128xf32, #tpu.memory_space<vmem>>, vector<1x8x8x128xf32>,
    %cst_46 = arith.constant dense<0.000000e+00> : vector<128xf32>
    %41 = vector.multi_reduction <add>, %36, %cst_46 [0] : vector<64x128xf32> to vector<128xf32>
    %42 = vector.shape_cast %41 : vector<128xf32> to vector<1x128xf32>
    %43 = arith.mulf %36, %36 : vector<64x128xf32>
    %cst_47 = arith.constant dense<0.000000e+00> : vector<128xf32>
    %44 = vector.multi_reduction <add>, %43, %cst_47 [0] : vector<64x128xf32> to vector<128xf32>
    %45 = vector.shape_cast %44 : vector<128xf32> to vector<1x128xf32>
    %cst_48 = arith.constant 0.000000e+00 : f32
    %46 = vector.broadcast %cst_48 : f32 to vector<6x128xf32>
    %47 = tpu.concatenate %42, %45, %46 in 0 : vector<1x128xf32>, vector<1x128xf32>, vector<6x128xf32> -> vector<8x128xf32>
    %c0_i32 = arith.constant 0 : i32
    %48 = arith.cmpi eq, %arg0, %c0_i32 : i32
    %49 = arith.extui %48 : i1 to i32
    %c0_i32_49 = arith.constant 0 : i32
    %50 = arith.cmpi ne, %49, %c0_i32_49 : i32
    scf.if %50 {
      %c0_70 = arith.constant 0 : index
      %c0_71 = arith.constant 0 : index
      %76 = vector.load %arg6[%c0_70, %c0_71] : memref<8x128xf32, #tpu.memory_space<vmem>>, vector<8x128xf32>
      tpu.vector_store %arg6[%c0_70, %c0_71], %47 {strides = array<i32>} : memref<8x128xf32, #tpu.memory_space<vmem>>, vector<8x128xf32>,
    } else {
    }
    %c0_i32_50 = arith.constant 0 : i32
    %51 = arith.cmpi ne, %arg0, %c0_i32_50 : i32
    %52 = arith.extui %51 : i1 to i32
    %c0_i32_51 = arith.constant 0 : i32
    %53 = arith.cmpi ne, %52, %c0_i32_51 : i32
    scf.if %53 {
      %c0_70 = arith.constant 0 : index
      %c0_71 = arith.constant 0 : index
      %76 = vector.load %arg6[%c0_70, %c0_71] : memref<8x128xf32, #tpu.memory_space<vmem>>, vector<8x128xf32>
      %77 = arith.addf %76, %47 : vector<8x128xf32>
      %c0_72 = arith.constant 0 : index
      %c0_73 = arith.constant 0 : index
      %78 = vector.load %arg6[%c0_72, %c0_73] : memref<8x128xf32, #tpu.memory_space<vmem>>, vector<8x128xf32>
      tpu.vector_store %arg6[%c0_72, %c0_73], %77 {strides = array<i32>} : memref<8x128xf32, #tpu.memory_space<vmem>>, vector<8x128xf32>,
    } else {
    }
    %c0_52 = arith.constant 0 : index
    %c0_53 = arith.constant 0 : index
    %c0_54 = arith.constant 0 : index
    %c384_55 = arith.constant 384 : index
    %54 = vector.load %arg1[%c0_52, %c0_53, %c0_54, %c384_55] : memref<1x9x9x512xf32, #tpu.memory_space<vmem>>, vector<1x8x8x128xf32>
    %55 = vector.shape_cast %54 : vector<1x8x8x128xf32> to vector<8x8x128xf32>
    %56 = vector.shape_cast %55 : vector<8x8x128xf32> to vector<64x128xf32>
    %c0_56 = arith.constant 0 : index
    %c0_57 = arith.constant 0 : index
    %57 = vector.load %arg3[%c0_56, %c0_57] : memref<128x128xf32, #tpu.memory_space<vmem>>, vector<128x128xf32>
    %cst_58 = arith.constant dense<0.000000e+00> : vector<64x128xf32>
    %58 = tpu.matmul %56, %57, %cst_58 {dimension_numbers = #tpu.dot_dimension_numbers<[1], [0], [0], [1], [0, 0, 1, 1], [], []>} : vector<64x128xf32>, vector<128x128xf32>, vector<64x128xf32> -> vector<64x128xf32>
    %59 = vector.shape_cast %58 : vector<64x128xf32> to vector<8x8x128xf32>
    %c0_59 = arith.constant 0 : index
    %c0_60 = arith.constant 0 : index
    %c0_61 = arith.constant 0 : index
    %c0_62 = arith.constant 0 : index
    %60 = vector.load %arg5[%c0_59, %c0_60, %c0_61, %c0_62] : memref<1x8x8x128xf32, #tpu.memory_space<vmem>>, vector<1x8x8x128xf32>
    %61 = vector.shape_cast %60 : vector<1x8x8x128xf32> to vector<8x8x128xf32>
    %62 = vector.shape_cast %59 : vector<8x8x128xf32> to vector<1x8x8x128xf32>
    tpu.vector_store %arg5[%c0_59, %c0_60, %c0_61, %c0_62], %62 {strides = array<i32>} : memref<1x8x8x128xf32, #tpu.memory_space<vmem>>, vector<1x8x8x128xf32>,
    %cst_63 = arith.constant dense<0.000000e+00> : vector<128xf32>
    %63 = vector.multi_reduction <add>, %58, %cst_63 [0] : vector<64x128xf32> to vector<128xf32>
    %64 = vector.shape_cast %63 : vector<128xf32> to vector<1x128xf32>
    %65 = arith.mulf %58, %58 : vector<64x128xf32>
    %cst_64 = arith.constant dense<0.000000e+00> : vector<128xf32>
    %66 = vector.multi_reduction <add>, %65, %cst_64 [0] : vector<64x128xf32> to vector<128xf32>
    %67 = vector.shape_cast %66 : vector<128xf32> to vector<1x128xf32>
    %cst_65 = arith.constant 0.000000e+00 : f32
    %68 = vector.broadcast %cst_65 : f32 to vector<6x128xf32>
    %69 = tpu.concatenate %64, %67, %68 in 0 : vector<1x128xf32>, vector<1x128xf32>, vector<6x128xf32> -> vector<8x128xf32>
    %c0_i32_66 = arith.constant 0 : i32
    %70 = arith.cmpi eq, %arg0, %c0_i32_66 : i32
    %71 = arith.extui %70 : i1 to i32
    %c0_i32_67 = arith.constant 0 : i32
    %72 = arith.cmpi ne, %71, %c0_i32_67 : i32
    scf.if %72 {
      %c0_70 = arith.constant 0 : index
      %c0_71 = arith.constant 0 : index
      %76 = vector.load %arg7[%c0_70, %c0_71] : memref<8x128xf32, #tpu.memory_space<vmem>>, vector<8x128xf32>
      tpu.vector_store %arg7[%c0_70, %c0_71], %69 {strides = array<i32>} : memref<8x128xf32, #tpu.memory_space<vmem>>, vector<8x128xf32>,
    } else {
    }
    %c0_i32_68 = arith.constant 0 : i32
    %73 = arith.cmpi ne, %arg0, %c0_i32_68 : i32
    %74 = arith.extui %73 : i1 to i32
    %c0_i32_69 = arith.constant 0 : i32
    %75 = arith.cmpi ne, %74, %c0_i32_69 : i32
    scf.if %75 {
      %c0_70 = arith.constant 0 : index
      %c0_71 = arith.constant 0 : index
      %76 = vector.load %arg7[%c0_70, %c0_71] : memref<8x128xf32, #tpu.memory_space<vmem>>, vector<8x128xf32>
      %77 = arith.addf %76, %69 : vector<8x128xf32>
      %c0_72 = arith.constant 0 : index
      %c0_73 = arith.constant 0 : index
      %78 = vector.load %arg7[%c0_72, %c0_73] : memref<8x128xf32, #tpu.memory_space<vmem>>, vector<8x128xf32>
      tpu.vector_store %arg7[%c0_72, %c0_73], %77 {strides = array<i32>} : memref<8x128xf32, #tpu.memory_space<vmem>>, vector<8x128xf32>,
    } else {
    }
    return
  }
  func.func @transform_0(%arg0: i32) -> (i32, i32, i32, i32) {
    %c0_i32 = arith.constant 0 : i32
    %c0_i32_0 = arith.constant 0 : i32
    %c0_i32_1 = arith.constant 0 : i32
    %c0_i32_2 = arith.constant 0 : i32
    return %arg0, %c0_i32, %c0_i32_0, %c0_i32_1 : i32, i32, i32, i32
  }
  func.func @transform_1(%arg0: i32) -> (i32, i32, i32) {
    %c0_i32 = arith.constant 0 : i32
    %c0_i32_0 = arith.constant 0 : i32
    %c0_i32_1 = arith.constant 0 : i32
    %c0_i32_2 = arith.constant 0 : i32
    return %c0_i32, %c0_i32_0, %c0_i32_1 : i32, i32, i32
  }
  func.func @transform_2(%arg0: i32) -> (i32, i32) {
    %c0_i32 = arith.constant 0 : i32
    %c0_i32_0 = arith.constant 0 : i32
    %c0_i32_1 = arith.constant 0 : i32
    return %c0_i32, %c0_i32_0 : i32, i32
  }
  func.func @transform_3(%arg0: i32) -> (i32, i32, i32, i32) {
    %c0_i32 = arith.constant 0 : i32
    %c0_i32_0 = arith.constant 0 : i32
    %c0_i32_1 = arith.constant 0 : i32
    %c0_i32_2 = arith.constant 0 : i32
    return %arg0, %c0_i32, %c0_i32_0, %c0_i32_1 : i32, i32, i32, i32
  }
  func.func @transform_4(%arg0: i32) -> (i32, i32, i32, i32) {
    %c0_i32 = arith.constant 0 : i32
    %c0_i32_0 = arith.constant 0 : i32
    %c0_i32_1 = arith.constant 0 : i32
    %c0_i32_2 = arith.constant 0 : i32
    return %arg0, %c0_i32, %c0_i32_0, %c0_i32_1 : i32, i32, i32, i32
  }
  func.func @transform_5(%arg0: i32) -> (i32, i32) {
    %c0_i32 = arith.constant 0 : i32
    %c0_i32_0 = arith.constant 0 : i32
    %c0_i32_1 = arith.constant 0 : i32
    return %c0_i32, %c0_i32_0 : i32, i32
  }
  func.func @transform_6(%arg0: i32) -> (i32, i32) {
    %c0_i32 = arith.constant 0 : i32
    %c0_i32_0 = arith.constant 0 : i32
    %c0_i32_1 = arith.constant 0 : i32
    return %c0_i32, %c0_i32_0 : i32, i32
  }
}

module attributes {stable_mosaic.version = 11 : i64} {
  func.func @body(%arg0: i32, %arg1: memref<1x8x8x128xf32, #tpu.memory_space<vmem>>, %arg2: memref<3x384x128xf32, #tpu.memory_space<vmem>>, %arg3: memref<1x128xf32, #tpu.memory_space<vmem>>, %arg4: memref<1x128xf32, #tpu.memory_space<vmem>>, %arg5: memref<1x8x8x128xf32, #tpu.memory_space<vmem>>, %arg6: memref<8x128xf32, #tpu.memory_space<vmem>>, %arg7: memref<10x10x128xf32, #tpu.memory_space<vmem>>) attributes {dimension_semantics = [#tpu.dimension_semantics<arbitrary>], iteration_bounds = array<i64: 2>, scalar_prefetch = 0 : i64, scratch_operands = 1 : i64, tpu.core_type = #tpu.core_type<tc>, window_params = [{transform_indices = @transform_0, window_bounds = array<i64: 1, 8, 8, 128>}, {pipeline_mode = #tpu.pipeline_mode<synchronous>, transform_indices = @transform_1, window_bounds = array<i64: 3, 384, 128>}, {pipeline_mode = #tpu.pipeline_mode<synchronous>, transform_indices = @transform_2, window_bounds = array<i64: 1, 128>}, {pipeline_mode = #tpu.pipeline_mode<synchronous>, transform_indices = @transform_3, window_bounds = array<i64: 1, 128>}, {transform_indices = @transform_4, window_bounds = array<i64: 1, 8, 8, 128>}, {pipeline_mode = #tpu.pipeline_mode<synchronous>, transform_indices = @transform_5, window_bounds = array<i64: 8, 128>}]} {
    %c0_i32 = arith.constant 0 : i32
    %0 = arith.cmpi eq, %arg0, %c0_i32 : i32
    %1 = arith.extui %0 : i1 to i32
    %c0_i32_0 = arith.constant 0 : i32
    %2 = arith.cmpi ne, %1, %c0_i32_0 : i32
    scf.if %2 {
      %cst_60 = arith.constant 0.000000e+00 : f32
      %61 = vector.broadcast %cst_60 : f32 to vector<10x10x128xf32>
      %c0_61 = arith.constant 0 : index
      %c0_62 = arith.constant 0 : index
      %c0_63 = arith.constant 0 : index
      %62 = vector.load %arg7[%c0_61, %c0_62, %c0_63] : memref<10x10x128xf32, #tpu.memory_space<vmem>>, vector<10x10x128xf32>
      tpu.vector_store %arg7[%c0_61, %c0_62, %c0_63], %61 {strides = array<i32>} : memref<10x10x128xf32, #tpu.memory_space<vmem>>, vector<10x10x128xf32>,
    } else {
    }
    %c0 = arith.constant 0 : index
    %c0_1 = arith.constant 0 : index
    %c0_2 = arith.constant 0 : index
    %c0_3 = arith.constant 0 : index
    %3 = vector.load %arg1[%c0, %c0_1, %c0_2, %c0_3] : memref<1x8x8x128xf32, #tpu.memory_space<vmem>>, vector<1x8x8x128xf32>
    %4 = vector.shape_cast %3 : vector<1x8x8x128xf32> to vector<8x8x128xf32>
    %5 = vector.shape_cast %4 : vector<8x8x128xf32> to vector<64x128xf32>
    %c0_4 = arith.constant 0 : index
    %c0_5 = arith.constant 0 : index
    %6 = vector.load %arg3[%c0_4, %c0_5] : memref<1x128xf32, #tpu.memory_space<vmem>>, vector<1x128xf32>
    %7 = vector.broadcast %6 : vector<1x128xf32> to vector<64x128xf32>
    %8 = arith.mulf %5, %7 : vector<64x128xf32>
    %c0_6 = arith.constant 0 : index
    %c0_7 = arith.constant 0 : index
    %9 = vector.load %arg4[%c0_6, %c0_7] : memref<1x128xf32, #tpu.memory_space<vmem>>, vector<1x128xf32>
    %10 = vector.broadcast %9 : vector<1x128xf32> to vector<64x128xf32>
    %11 = arith.addf %8, %10 : vector<64x128xf32>
    %cst = arith.constant 0.000000e+00 : f32
    %12 = vector.broadcast %cst : f32 to vector<64x128xf32>
    %13 = arith.maximumf %11, %12 : vector<64x128xf32>
    %14 = vector.shape_cast %13 : vector<64x128xf32> to vector<8x8x128xf32>
    %c1 = arith.constant 1 : index
    %c1_8 = arith.constant 1 : index
    %c0_9 = arith.constant 0 : index
    %15 = vector.load %arg7[%c1, %c1_8, %c0_9] : memref<10x10x128xf32, #tpu.memory_space<vmem>>, vector<8x8x128xf32>
    tpu.vector_store %arg7[%c1, %c1_8, %c0_9], %14 {strides = array<i32>} : memref<10x10x128xf32, #tpu.memory_space<vmem>>, vector<8x8x128xf32>,
    %cst_10 = arith.constant 0.000000e+00 : f32
    %16 = vector.broadcast %cst_10 : f32 to vector<64x128xf32>
    %c0_11 = arith.constant 0 : index
    %c0_12 = arith.constant 0 : index
    %c0_13 = arith.constant 0 : index
    %17 = vector.load %arg7[%c0_11, %c0_12, %c0_13] : memref<10x10x128xf32, #tpu.memory_space<vmem>>, vector<8x8x128xf32>
    %c0_14 = arith.constant 0 : index
    %c1_15 = arith.constant 1 : index
    %c0_16 = arith.constant 0 : index
    %18 = vector.load %arg7[%c0_14, %c1_15, %c0_16] : memref<10x10x128xf32, #tpu.memory_space<vmem>>, vector<8x8x128xf32>
    %c0_17 = arith.constant 0 : index
    %c2 = arith.constant 2 : index
    %c0_18 = arith.constant 0 : index
    %19 = vector.load %arg7[%c0_17, %c2, %c0_18] : memref<10x10x128xf32, #tpu.memory_space<vmem>>, vector<8x8x128xf32>
    %20 = tpu.concatenate %17, %18, %19 in 2 : vector<8x8x128xf32>, vector<8x8x128xf32>, vector<8x8x128xf32> -> vector<8x8x384xf32>
    %21 = vector.shape_cast %20 : vector<8x8x384xf32> to vector<64x384xf32>
    %c0_19 = arith.constant 0 : index
    %c0_20 = arith.constant 0 : index
    %c0_21 = arith.constant 0 : index
    %22 = vector.load %arg2[%c0_19, %c0_20, %c0_21] : memref<3x384x128xf32, #tpu.memory_space<vmem>>, vector<1x384x128xf32>
    %23 = vector.shape_cast %22 : vector<1x384x128xf32> to vector<384x128xf32>
    %cst_22 = arith.constant dense<0.000000e+00> : vector<64x128xf32>
    %24 = tpu.matmul %21, %23, %cst_22 {dimension_numbers = #tpu.dot_dimension_numbers<[1], [0], [0], [1], [0, 0, 1, 1], [], []>} : vector<64x384xf32>, vector<384x128xf32>, vector<64x128xf32> -> vector<64x128xf32>
    %25 = arith.addf %16, %24 : vector<64x128xf32>
    %c1_23 = arith.constant 1 : index
    %c0_24 = arith.constant 0 : index
    %c0_25 = arith.constant 0 : index
    %26 = vector.load %arg7[%c1_23, %c0_24, %c0_25] : memref<10x10x128xf32, #tpu.memory_space<vmem>>, vector<8x8x128xf32>
    %c1_26 = arith.constant 1 : index
    %c1_27 = arith.constant 1 : index
    %c0_28 = arith.constant 0 : index
    %27 = vector.load %arg7[%c1_26, %c1_27, %c0_28] : memref<10x10x128xf32, #tpu.memory_space<vmem>>, vector<8x8x128xf32>
    %c1_29 = arith.constant 1 : index
    %c2_30 = arith.constant 2 : index
    %c0_31 = arith.constant 0 : index
    %28 = vector.load %arg7[%c1_29, %c2_30, %c0_31] : memref<10x10x128xf32, #tpu.memory_space<vmem>>, vector<8x8x128xf32>
    %29 = tpu.concatenate %26, %27, %28 in 2 : vector<8x8x128xf32>, vector<8x8x128xf32>, vector<8x8x128xf32> -> vector<8x8x384xf32>
    %30 = vector.shape_cast %29 : vector<8x8x384xf32> to vector<64x384xf32>
    %c1_32 = arith.constant 1 : index
    %c0_33 = arith.constant 0 : index
    %c0_34 = arith.constant 0 : index
    %31 = vector.load %arg2[%c1_32, %c0_33, %c0_34] : memref<3x384x128xf32, #tpu.memory_space<vmem>>, vector<1x384x128xf32>
    %32 = vector.shape_cast %31 : vector<1x384x128xf32> to vector<384x128xf32>
    %cst_35 = arith.constant dense<0.000000e+00> : vector<64x128xf32>
    %33 = tpu.matmul %30, %32, %cst_35 {dimension_numbers = #tpu.dot_dimension_numbers<[1], [0], [0], [1], [0, 0, 1, 1], [], []>} : vector<64x384xf32>, vector<384x128xf32>, vector<64x128xf32> -> vector<64x128xf32>
    %34 = arith.addf %25, %33 : vector<64x128xf32>
    %c2_36 = arith.constant 2 : index
    %c0_37 = arith.constant 0 : index
    %c0_38 = arith.constant 0 : index
    %35 = vector.load %arg7[%c2_36, %c0_37, %c0_38] : memref<10x10x128xf32, #tpu.memory_space<vmem>>, vector<8x8x128xf32>
    %c2_39 = arith.constant 2 : index
    %c1_40 = arith.constant 1 : index
    %c0_41 = arith.constant 0 : index
    %36 = vector.load %arg7[%c2_39, %c1_40, %c0_41] : memref<10x10x128xf32, #tpu.memory_space<vmem>>, vector<8x8x128xf32>
    %c2_42 = arith.constant 2 : index
    %c2_43 = arith.constant 2 : index
    %c0_44 = arith.constant 0 : index
    %37 = vector.load %arg7[%c2_42, %c2_43, %c0_44] : memref<10x10x128xf32, #tpu.memory_space<vmem>>, vector<8x8x128xf32>
    %38 = tpu.concatenate %35, %36, %37 in 2 : vector<8x8x128xf32>, vector<8x8x128xf32>, vector<8x8x128xf32> -> vector<8x8x384xf32>
    %39 = vector.shape_cast %38 : vector<8x8x384xf32> to vector<64x384xf32>
    %c2_45 = arith.constant 2 : index
    %c0_46 = arith.constant 0 : index
    %c0_47 = arith.constant 0 : index
    %40 = vector.load %arg2[%c2_45, %c0_46, %c0_47] : memref<3x384x128xf32, #tpu.memory_space<vmem>>, vector<1x384x128xf32>
    %41 = vector.shape_cast %40 : vector<1x384x128xf32> to vector<384x128xf32>
    %cst_48 = arith.constant dense<0.000000e+00> : vector<64x128xf32>
    %42 = tpu.matmul %39, %41, %cst_48 {dimension_numbers = #tpu.dot_dimension_numbers<[1], [0], [0], [1], [0, 0, 1, 1], [], []>} : vector<64x384xf32>, vector<384x128xf32>, vector<64x128xf32> -> vector<64x128xf32>
    %43 = arith.addf %34, %42 : vector<64x128xf32>
    %44 = vector.shape_cast %43 : vector<64x128xf32> to vector<8x8x128xf32>
    %c0_49 = arith.constant 0 : index
    %c0_50 = arith.constant 0 : index
    %c0_51 = arith.constant 0 : index
    %c0_52 = arith.constant 0 : index
    %45 = vector.load %arg5[%c0_49, %c0_50, %c0_51, %c0_52] : memref<1x8x8x128xf32, #tpu.memory_space<vmem>>, vector<1x8x8x128xf32>
    %46 = vector.shape_cast %45 : vector<1x8x8x128xf32> to vector<8x8x128xf32>
    %47 = vector.shape_cast %44 : vector<8x8x128xf32> to vector<1x8x8x128xf32>
    tpu.vector_store %arg5[%c0_49, %c0_50, %c0_51, %c0_52], %47 {strides = array<i32>} : memref<1x8x8x128xf32, #tpu.memory_space<vmem>>, vector<1x8x8x128xf32>,
    %cst_53 = arith.constant dense<0.000000e+00> : vector<128xf32>
    %48 = vector.multi_reduction <add>, %43, %cst_53 [0] : vector<64x128xf32> to vector<128xf32>
    %49 = vector.shape_cast %48 : vector<128xf32> to vector<1x128xf32>
    %50 = arith.mulf %43, %43 : vector<64x128xf32>
    %cst_54 = arith.constant dense<0.000000e+00> : vector<128xf32>
    %51 = vector.multi_reduction <add>, %50, %cst_54 [0] : vector<64x128xf32> to vector<128xf32>
    %52 = vector.shape_cast %51 : vector<128xf32> to vector<1x128xf32>
    %cst_55 = arith.constant 0.000000e+00 : f32
    %53 = vector.broadcast %cst_55 : f32 to vector<6x128xf32>
    %54 = tpu.concatenate %49, %52, %53 in 0 : vector<1x128xf32>, vector<1x128xf32>, vector<6x128xf32> -> vector<8x128xf32>
    %c0_i32_56 = arith.constant 0 : i32
    %55 = arith.cmpi eq, %arg0, %c0_i32_56 : i32
    %56 = arith.extui %55 : i1 to i32
    %c0_i32_57 = arith.constant 0 : i32
    %57 = arith.cmpi ne, %56, %c0_i32_57 : i32
    scf.if %57 {
      %c0_60 = arith.constant 0 : index
      %c0_61 = arith.constant 0 : index
      %61 = vector.load %arg6[%c0_60, %c0_61] : memref<8x128xf32, #tpu.memory_space<vmem>>, vector<8x128xf32>
      tpu.vector_store %arg6[%c0_60, %c0_61], %54 {strides = array<i32>} : memref<8x128xf32, #tpu.memory_space<vmem>>, vector<8x128xf32>,
    } else {
    }
    %c0_i32_58 = arith.constant 0 : i32
    %58 = arith.cmpi ne, %arg0, %c0_i32_58 : i32
    %59 = arith.extui %58 : i1 to i32
    %c0_i32_59 = arith.constant 0 : i32
    %60 = arith.cmpi ne, %59, %c0_i32_59 : i32
    scf.if %60 {
      %c0_60 = arith.constant 0 : index
      %c0_61 = arith.constant 0 : index
      %61 = vector.load %arg6[%c0_60, %c0_61] : memref<8x128xf32, #tpu.memory_space<vmem>>, vector<8x128xf32>
      %62 = arith.addf %61, %54 : vector<8x128xf32>
      %c0_62 = arith.constant 0 : index
      %c0_63 = arith.constant 0 : index
      %63 = vector.load %arg6[%c0_62, %c0_63] : memref<8x128xf32, #tpu.memory_space<vmem>>, vector<8x128xf32>
      tpu.vector_store %arg6[%c0_62, %c0_63], %62 {strides = array<i32>} : memref<8x128xf32, #tpu.memory_space<vmem>>, vector<8x128xf32>,
    } else {
    }
    return
  }
  func.func @transform_0(%arg0: i32) -> (i32, i32, i32, i32) {
    %c0_i32 = arith.constant 0 : i32
    %c0_i32_0 = arith.constant 0 : i32
    %c0_i32_1 = arith.constant 0 : i32
    %c0_i32_2 = arith.constant 0 : i32
    return %arg0, %c0_i32, %c0_i32_0, %c0_i32_1 : i32, i32, i32, i32
  }
  func.func @transform_1(%arg0: i32) -> (i32, i32, i32) {
    %c0_i32 = arith.constant 0 : i32
    %c0_i32_0 = arith.constant 0 : i32
    %c0_i32_1 = arith.constant 0 : i32
    %c0_i32_2 = arith.constant 0 : i32
    return %c0_i32, %c0_i32_0, %c0_i32_1 : i32, i32, i32
  }
  func.func @transform_2(%arg0: i32) -> (i32, i32) {
    %c0_i32 = arith.constant 0 : i32
    %c0_i32_0 = arith.constant 0 : i32
    %c0_i32_1 = arith.constant 0 : i32
    return %c0_i32, %c0_i32_0 : i32, i32
  }
  func.func @transform_3(%arg0: i32) -> (i32, i32) {
    %c0_i32 = arith.constant 0 : i32
    %c0_i32_0 = arith.constant 0 : i32
    %c0_i32_1 = arith.constant 0 : i32
    return %c0_i32, %c0_i32_0 : i32, i32
  }
  func.func @transform_4(%arg0: i32) -> (i32, i32, i32, i32) {
    %c0_i32 = arith.constant 0 : i32
    %c0_i32_0 = arith.constant 0 : i32
    %c0_i32_1 = arith.constant 0 : i32
    %c0_i32_2 = arith.constant 0 : i32
    return %arg0, %c0_i32, %c0_i32_0, %c0_i32_1 : i32, i32, i32, i32
  }
  func.func @transform_5(%arg0: i32) -> (i32, i32) {
    %c0_i32 = arith.constant 0 : i32
    %c0_i32_0 = arith.constant 0 : i32
    %c0_i32_1 = arith.constant 0 : i32
    return %c0_i32, %c0_i32_0 : i32, i32
  }
}

module attributes {stable_mosaic.version = 11 : i64} {
  func.func @body(%arg0: i32, %arg1: memref<1x8x8x128xf32, #tpu.memory_space<vmem>>, %arg2: memref<1x8x8x128xf32, #tpu.memory_space<vmem>>, %arg3: memref<1x128xf32, #tpu.memory_space<vmem>>, %arg4: memref<1x128xf32, #tpu.memory_space<vmem>>, %arg5: memref<1x128xf32, #tpu.memory_space<vmem>>, %arg6: memref<1x128xf32, #tpu.memory_space<vmem>>, %arg7: memref<1x8x8x128xf32, #tpu.memory_space<vmem>>) attributes {dimension_semantics = [#tpu.dimension_semantics<parallel>], iteration_bounds = array<i64: 2>, scalar_prefetch = 0 : i64, scratch_operands = 0 : i64, tpu.core_type = #tpu.core_type<tc>, window_params = [{transform_indices = @transform_0, window_bounds = array<i64: 1, 8, 8, 128>}, {transform_indices = @transform_1, window_bounds = array<i64: 1, 8, 8, 128>}, {pipeline_mode = #tpu.pipeline_mode<synchronous>, transform_indices = @transform_2, window_bounds = array<i64: 1, 128>}, {pipeline_mode = #tpu.pipeline_mode<synchronous>, transform_indices = @transform_3, window_bounds = array<i64: 1, 128>}, {pipeline_mode = #tpu.pipeline_mode<synchronous>, transform_indices = @transform_4, window_bounds = array<i64: 1, 128>}, {pipeline_mode = #tpu.pipeline_mode<synchronous>, transform_indices = @transform_5, window_bounds = array<i64: 1, 128>}, {transform_indices = @transform_6, window_bounds = array<i64: 1, 8, 8, 128>}]} {
    %c0 = arith.constant 0 : index
    %c0_0 = arith.constant 0 : index
    %c0_1 = arith.constant 0 : index
    %c0_2 = arith.constant 0 : index
    %0 = vector.load %arg1[%c0, %c0_0, %c0_1, %c0_2] : memref<1x8x8x128xf32, #tpu.memory_space<vmem>>, vector<1x8x8x128xf32>
    %1 = vector.shape_cast %0 : vector<1x8x8x128xf32> to vector<8x8x128xf32>
    %2 = vector.shape_cast %1 : vector<8x8x128xf32> to vector<64x128xf32>
    %c0_3 = arith.constant 0 : index
    %c0_4 = arith.constant 0 : index
    %c0_5 = arith.constant 0 : index
    %c0_6 = arith.constant 0 : index
    %3 = vector.load %arg2[%c0_3, %c0_4, %c0_5, %c0_6] : memref<1x8x8x128xf32, #tpu.memory_space<vmem>>, vector<1x8x8x128xf32>
    %4 = vector.shape_cast %3 : vector<1x8x8x128xf32> to vector<8x8x128xf32>
    %5 = vector.shape_cast %4 : vector<8x8x128xf32> to vector<64x128xf32>
    %c0_7 = arith.constant 0 : index
    %c0_8 = arith.constant 0 : index
    %6 = vector.load %arg5[%c0_7, %c0_8] : memref<1x128xf32, #tpu.memory_space<vmem>>, vector<1x128xf32>
    %7 = vector.broadcast %6 : vector<1x128xf32> to vector<64x128xf32>
    %8 = arith.mulf %5, %7 : vector<64x128xf32>
    %c0_9 = arith.constant 0 : index
    %c0_10 = arith.constant 0 : index
    %9 = vector.load %arg6[%c0_9, %c0_10] : memref<1x128xf32, #tpu.memory_space<vmem>>, vector<1x128xf32>
    %10 = vector.broadcast %9 : vector<1x128xf32> to vector<64x128xf32>
    %11 = arith.addf %8, %10 : vector<64x128xf32>
    %c0_11 = arith.constant 0 : index
    %c0_12 = arith.constant 0 : index
    %12 = vector.load %arg3[%c0_11, %c0_12] : memref<1x128xf32, #tpu.memory_space<vmem>>, vector<1x128xf32>
    %13 = vector.broadcast %12 : vector<1x128xf32> to vector<64x128xf32>
    %14 = arith.mulf %2, %13 : vector<64x128xf32>
    %c0_13 = arith.constant 0 : index
    %c0_14 = arith.constant 0 : index
    %15 = vector.load %arg4[%c0_13, %c0_14] : memref<1x128xf32, #tpu.memory_space<vmem>>, vector<1x128xf32>
    %16 = vector.broadcast %15 : vector<1x128xf32> to vector<64x128xf32>
    %17 = arith.addf %14, %16 : vector<64x128xf32>
    %18 = arith.addf %17, %11 : vector<64x128xf32>
    %cst = arith.constant 0.000000e+00 : f32
    %19 = vector.broadcast %cst : f32 to vector<64x128xf32>
    %20 = arith.maximumf %18, %19 : vector<64x128xf32>
    %21 = vector.shape_cast %20 : vector<64x128xf32> to vector<8x8x128xf32>
    %c0_15 = arith.constant 0 : index
    %c0_16 = arith.constant 0 : index
    %c0_17 = arith.constant 0 : index
    %c0_18 = arith.constant 0 : index
    %22 = vector.load %arg7[%c0_15, %c0_16, %c0_17, %c0_18] : memref<1x8x8x128xf32, #tpu.memory_space<vmem>>, vector<1x8x8x128xf32>
    %23 = vector.shape_cast %22 : vector<1x8x8x128xf32> to vector<8x8x128xf32>
    %24 = vector.shape_cast %21 : vector<8x8x128xf32> to vector<1x8x8x128xf32>
    tpu.vector_store %arg7[%c0_15, %c0_16, %c0_17, %c0_18], %24 {strides = array<i32>} : memref<1x8x8x128xf32, #tpu.memory_space<vmem>>, vector<1x8x8x128xf32>,
    return
  }
  func.func @transform_0(%arg0: i32) -> (i32, i32, i32, i32) {
    %c0_i32 = arith.constant 0 : i32
    %c0_i32_0 = arith.constant 0 : i32
    %c0_i32_1 = arith.constant 0 : i32
    %c0_i32_2 = arith.constant 0 : i32
    return %arg0, %c0_i32, %c0_i32_0, %c0_i32_1 : i32, i32, i32, i32
  }
  func.func @transform_1(%arg0: i32) -> (i32, i32, i32, i32) {
    %c0_i32 = arith.constant 0 : i32
    %c0_i32_0 = arith.constant 0 : i32
    %c0_i32_1 = arith.constant 0 : i32
    %c0_i32_2 = arith.constant 0 : i32
    return %arg0, %c0_i32, %c0_i32_0, %c0_i32_1 : i32, i32, i32, i32
  }
  func.func @transform_2(%arg0: i32) -> (i32, i32) {
    %c0_i32 = arith.constant 0 : i32
    %c0_i32_0 = arith.constant 0 : i32
    %c0_i32_1 = arith.constant 0 : i32
    return %c0_i32, %c0_i32_0 : i32, i32
  }
  func.func @transform_3(%arg0: i32) -> (i32, i32) {
    %c0_i32 = arith.constant 0 : i32
    %c0_i32_0 = arith.constant 0 : i32
    %c0_i32_1 = arith.constant 0 : i32
    return %c0_i32, %c0_i32_0 : i32, i32
  }
  func.func @transform_4(%arg0: i32) -> (i32, i32) {
    %c0_i32 = arith.constant 0 : i32
    %c0_i32_0 = arith.constant 0 : i32
    %c0_i32_1 = arith.constant 0 : i32
    return %c0_i32, %c0_i32_0 : i32, i32
  }
  func.func @transform_5(%arg0: i32) -> (i32, i32) {
    %c0_i32 = arith.constant 0 : i32
    %c0_i32_0 = arith.constant 0 : i32
    %c0_i32_1 = arith.constant 0 : i32
    return %c0_i32, %c0_i32_0 : i32, i32
  }
  func.func @transform_6(%arg0: i32) -> (i32, i32, i32, i32) {
    %c0_i32 = arith.constant 0 : i32
    %c0_i32_0 = arith.constant 0 : i32
    %c0_i32_1 = arith.constant 0 : i32
    %c0_i32_2 = arith.constant 0 : i32
    return %arg0, %c0_i32, %c0_i32_0, %c0_i32_1 : i32, i32, i32, i32
  }
}

</mosaic_0001>

<llo_original>
// kernel: basic_block_forward.5
$region0: #{basic_block_forward.5}
  #allocation0 [shape = 'u32[]', space=smem, size = 0x4, offset = 0x4, fixed_abs, tag = 'smem constant byte address 0x4 - core index']
  #allocation1 [shape = 'u32[144,128]{1,0:T(1,128)}', space=vmem, size = 0x12000, scoped, tag = 'internal scratch']
  %s0 = inlined_call_operand.vmem [shape: f32[2,8,8,128], index: 0, kind: input, shape index: {}]
  %s1 = inlined_call_operand.vmem [shape: f32[2,8,8,128], index: 1, kind: input, shape index: {}]
  %s2 = inlined_call_operand.vmem [shape: f32[1,128], index: 2, kind: input, shape index: {}]
  %s3 = inlined_call_operand.vmem [shape: f32[1,128], index: 3, kind: input, shape index: {}]
  %s4 = inlined_call_operand.vmem [shape: f32[1,128], index: 4, kind: input, shape index: {}]
  %s5 = inlined_call_operand.vmem [shape: f32[1,128], index: 5, kind: input, shape index: {}]
  %s6 = inlined_call_operand.vmem [shape: f32[2,8,8,128], index: 6, kind: output, shape index: {}]
  %s7 = sld [smem:[#allocation0]]
  $region57: #{basic_block_forward.5} parent=0
    _
  %s9 = ssub.s32 1, %s7
  %s10 = scalar_select 0, %s9, %s7
  loop: start=0, step=1, limit=4
  $region2: #{basic_block_forward.5} parent=0 // loop_pre_header
    _
  $region3: #{basic_block_forward.5} parent=0 // loop_header
    %s12 = sphi 0, %s16
    %p13 = scmp.ge.s32.totalorder %s12, 4
    %s22 = sphi 0, %s24
    %s25 = sphi 0, %s22
    %s26 = sphi 0, %s25
    %s42 = sphi 0, %s26
    %s48 = sphi 0, %s50
    %s51 = sphi 0, %s48
    %s52 = sphi 0, %s51
    %s68 = sphi 0, %s52
    %s72 = sphi 0, %s72
    %s74 = sphi 0, %s72
    %s75 = sphi 0, %s74
    %s89 = sphi 0, %s75
    %s93 = sphi 0, %s93
    %s95 = sphi 0, %s93
    %s96 = sphi 0, %s95
    %s110 = sphi 0, %s96
    %s114 = sphi 0, %s114
    %s116 = sphi 0, %s114
    %s117 = sphi 0, %s116
    %s131 = sphi 0, %s117
    %s135 = sphi 0, %s135
    %s137 = sphi 0, %s135
    %s138 = sphi 0, %s137
    %s152 = sphi 0, %s138
    %s158 = sphi 0, %s160
    %s161 = sphi 0, %s158
    %s162 = sphi 0, %s161
    %s178 = sphi 0, %s162
  $region4: #{basic_block_forward.5} parent=0 // loop_header_branch
    %15 = sbr.rel (%p13) target = $region8
  $region5: #{basic_block_forward.5} parent=0 // loop_body
    %s17 = ssub.s32 %s12, 1
    %s18 = ssub.s32 %s12, 2
    %s19 = sadd.s32 %s12, 1
    %s20 = ssub.s32 %s12, %s19
    %p21 = scmp.eq.s32.totalorder %s20, 0
    %s23 = sadd.s32 %s22, 1
    %s24 = scalar_select %p21, %s22, %s23
    %p27 = pneg %p21
    %p28 = scmp.eq.s32.totalorder %s12, 1
    %p29 = por %p27, %p28
    %p30 = scmp.ne.s32.totalorder %s22, %s25
    %p31 = scmp.eq.s32.totalorder %s12, 0
    %p32 = por %p30, %p31
    %p33 = scmp.ne.s32.totalorder %s22, %s25
    %p34 = scmp.eq.s32.totalorder %s17, 1
    %p35 = por %p33, %p34
    %p36 = scmp.ne.s32.totalorder %s25, %s26
    %p37 = scmp.eq.s32.totalorder %s17, 0
    %p38 = por %p36, %p37
    %p39 = scmp.ne.s32.totalorder %s25, %s26
    %p40 = scmp.eq.s32.totalorder %s18, 1
    %p41 = por %p39, %p40
    %p43 = scmp.ne.s32.totalorder %s26, %s42
    %p44 = scmp.eq.s32.totalorder %s18, 0
    %p45 = por %p43, %p44
    %s46 = ssub.s32 %s12, %s19
    %p47 = scmp.eq.s32.totalorder %s46, 0
    %s49 = sadd.s32 %s48, 1
    %s50 = scalar_select %p47, %s48, %s49
    %p53 = pneg %p47
    %p54 = scmp.eq.s32.totalorder %s12, 1
    %p55 = por %p53, %p54
    %p56 = scmp.ne.s32.totalorder %s48, %s51
    %p57 = scmp.eq.s32.totalorder %s12, 0
    %p58 = por %p56, %p57
    %p59 = scmp.ne.s32.totalorder %s48, %s51
    %p60 = scmp.eq.s32.totalorder %s17, 1
    %p61 = por %p59, %p60
    %p62 = scmp.ne.s32.totalorder %s51, %s52
    %p63 = scmp.eq.s32.totalorder %s17, 0
    %p64 = por %p62, %p63
    %p65 = scmp.ne.s32.totalorder %s51, %s52
    %p66 = scmp.eq.s32.totalorder %s18, 1
    %p67 = por %p65, %p66
    %p69 = scmp.ne.s32.totalorder %s52, %s68
    %p70 = scmp.eq.s32.totalorder %s18, 0
    %p71 = por %p69, %p70
    %s73 = sadd.s32 %s72, 1
    %p76 = scmp.eq.s32.totalorder %s12, 1
    %p77 = scmp.ne.s32.totalorder %s72, %s74
    %p78 = scmp.eq.s32.totalorder %s12, 0
    %p79 = por %p77, %p78
    %p80 = scmp.ne.s32.totalorder %s72, %s74
    %p81 = scmp.eq.s32.totalorder %s17, 1
    %p82 = por %p80, %p81
    %p83 = scmp.ne.s32.totalorder %s74, %s75
    %p84 = scmp.eq.s32.totalorder %s17, 0
    %p85 = por %p83, %p84
    %p86 = scmp.ne.s32.totalorder %s74, %s75
    %p87 = scmp.eq.s32.totalorder %s18, 1
    %p88 = por %p86, %p87
    %p90 = scmp.ne.s32.totalorder %s75, %s89
    %p91 = scmp.eq.s32.totalorder %s18, 0
    %p92 = por %p90, %p91
    %s94 = sadd.s32 %s93, 1
    %p97 = scmp.eq.s32.totalorder %s12, 1
    %p98 = scmp.ne.s32.totalorder %s93, %s95
    %p99 = scmp.eq.s32.totalorder %s12, 0
    %p100 = por %p98, %p99
    %p101 = scmp.ne.s32.totalorder %s93, %s95
    %p102 = scmp.eq.s32.totalorder %s17, 1
    %p103 = por %p101, %p102
    %p104 = scmp.ne.s32.totalorder %s95, %s96
    %p105 = scmp.eq.s32.totalorder %s17, 0
    %p106 = por %p104, %p105
    %p107 = scmp.ne.s32.totalorder %s95, %s96
    %p108 = scmp.eq.s32.totalorder %s18, 1
    %p109 = por %p107, %p108
    %p111 = scmp.ne.s32.totalorder %s96, %s110
    %p112 = scmp.eq.s32.totalorder %s18, 0
    %p113 = por %p111, %p112
    %s115 = sadd.s32 %s114, 1
    %p118 = scmp.eq.s32.totalorder %s12, 1
    %p119 = scmp.ne.s32.totalorder %s114, %s116
    %p120 = scmp.eq.s32.totalorder %s12, 0
    %p121 = por %p119, %p120
    %p122 = scmp.ne.s32.totalorder %s114, %s116
    %p123 = scmp.eq.s32.totalorder %s17, 1
    %p124 = por %p122, %p123
    %p125 = scmp.ne.s32.totalorder %s116, %s117
    %p126 = scmp.eq.s32.totalorder %s17, 0
    %p127 = por %p125, %p126
    %p128 = scmp.ne.s32.totalorder %s116, %s117
    %p129 = scmp.eq.s32.totalorder %s18, 1
    %p130 = por %p128, %p129
    %p132 = scmp.ne.s32.totalorder %s117, %s131
    %p133 = scmp.eq.s32.totalorder %s18, 0
    %p134 = por %p132, %p133
    %s136 = sadd.s32 %s135, 1
    %p139 = scmp.eq.s32.totalorder %s12, 1
    %p140 = scmp.ne.s32.totalorder %s135, %s137
    %p141 = scmp.eq.s32.totalorder %s12, 0
    %p142 = por %p140, %p141
    %p143 = scmp.ne.s32.totalorder %s135, %s137
    %p144 = scmp.eq.s32.totalorder %s17, 1
    %p145 = por %p143, %p144
    %p146 = scmp.ne.s32.totalorder %s137, %s138
    %p147 = scmp.eq.s32.totalorder %s17, 0
    %p148 = por %p146, %p147
    %p149 = scmp.ne.s32.totalorder %s137, %s138
    %p150 = scmp.eq.s32.totalorder %s18, 1
    %p151 = por %p149, %p150
    %p153 = scmp.ne.s32.totalorder %s138, %s152
    %p154 = scmp.eq.s32.totalorder %s18, 0
    %p155 = por %p153, %p154
    %s156 = ssub.s32 %s12, %s19
    %p157 = scmp.eq.s32.totalorder %s156, 0
    %s159 = sadd.s32 %s158, 1
    %s160 = scalar_select %p157, %s158, %s159
    %p163 = pneg %p157
    %p164 = scmp.eq.s32.totalorder %s12, 1
    %p165 = por %p163, %p164
    %p166 = scmp.ne.s32.totalorder %s158, %s161
    %p167 = scmp.eq.s32.totalorder %s12, 0
    %p168 = por %p166, %p167
    %p169 = scmp.ne.s32.totalorder %s158, %s161
    %p170 = scmp.eq.s32.totalorder %s17, 1
    %p171 = por %p169, %p170
    %p172 = scmp.ne.s32.totalorder %s161, %s162
    %p173 = scmp.eq.s32.totalorder %s17, 0
    %p174 = por %p172, %p173
    %p175 = scmp.ne.s32.totalorder %s161, %s162
    %p176 = scmp.eq.s32.totalorder %s18, 1
    %p177 = por %p175, %p176
    %p179 = scmp.ne.s32.totalorder %s162, %s178
    %p180 = scmp.eq.s32.totalorder %s18, 0
    %p181 = por %p179, %p180
    %p182 = scmp.le.s32.totalorder 1, %s12
    %p183 = scmp.lt.s32.totalorder %s12, 3
    %p184 = pnand %p182, %p183
    %p185 = pneg %p184
    // Predicated region
    $region9: #{basic_block_forward.5} parent=5 // pred_check
      _
    $region10: #{basic_block_forward.5} parent=5 // pred_check_branch
      %187 = sbr.rel (%p184) target = $region12
    $region11: #{basic_block_forward.5} parent=5 // pred_region
      %s188 = ssub.s32 %s12, 1
      // Predicated region
      $region13: #{basic_block_forward.5} parent=11 // pred_check
        %p189 = pneg %p85
      $region14: #{basic_block_forward.5} parent=11 // pred_check_branch
        %191 = sbr.rel (%p189) target = $region16
      $region15: #{basic_block_forward.5} parent=11 // pred_region
        _
      $region16: #{basic_block_forward.5} parent=11 // pred_fallthru
        _
      // Predicated region
      $region17: #{basic_block_forward.5} parent=11 // pred_check
        %p192 = pneg %p106
      $region18: #{basic_block_forward.5} parent=11 // pred_check_branch
        %194 = sbr.rel (%p192) target = $region20
      $region19: #{basic_block_forward.5} parent=11 // pred_region
        _
      $region20: #{basic_block_forward.5} parent=11 // pred_fallthru
        _
      // Predicated region
      $region21: #{basic_block_forward.5} parent=11 // pred_check
        %p195 = pneg %p127
      $region22: #{basic_block_forward.5} parent=11 // pred_check_branch
        %197 = sbr.rel (%p195) target = $region24
      $region23: #{basic_block_forward.5} parent=11 // pred_region
        _
      $region24: #{basic_block_forward.5} parent=11 // pred_fallthru
        _
      // Predicated region
      $region25: #{basic_block_forward.5} parent=11 // pred_check
        %p198 = pneg %p148
      $region26: #{basic_block_forward.5} parent=11 // pred_check_branch
        %200 = sbr.rel (%p198) target = $region28
      $region27: #{basic_block_forward.5} parent=11 // pred_region
        _
      $region28: #{basic_block_forward.5} parent=11 // pred_fallthru
        _
    $region12: #{basic_block_forward.5} parent=5 // pred_fallthru
      _
    %p201 = scmp.lt.s32.totalorder %s12, 2
    // Predicated region
    $region29: #{basic_block_forward.5} parent=5 // pred_check
      %p202 = pneg %p201
    $region30: #{basic_block_forward.5} parent=5 // pred_check_branch
      %204 = sbr.rel (%p202) target = $region32
    $region31: #{basic_block_forward.5} parent=5 // pred_region
      // Predicated region
      $region33: #{basic_block_forward.5} parent=31 // pred_check
        %p205 = pneg %p32
      $region34: #{basic_block_forward.5} parent=31 // pred_check_branch
        %207 = sbr.rel (%p205) target = $region36
      $region35: #{basic_block_forward.5} parent=31 // pred_region
        %p208 = scmp.lt.s32.totalorder %s12, 1
        %s209 = scalar_select %p208, %s12, 1
        %s210 = smul.addr %s209, 8
        %s211 = smul.addr %s210, 8
        %s212 = scalar_lea.vmem %s0, %s211
      $region36: #{basic_block_forward.5} parent=31 // pred_fallthru
        _
      // Predicated region
      $region37: #{basic_block_forward.5} parent=31 // pred_check
        %p213 = pneg %p58
      $region38: #{basic_block_forward.5} parent=31 // pred_check_branch
        %215 = sbr.rel (%p213) target = $region40
      $region39: #{basic_block_forward.5} parent=31 // pred_region
        %p216 = scmp.lt.s32.totalorder %s12, 1
        %s217 = scalar_select %p216, %s12, 1
        %s218 = smul.addr %s217, 8
        %s219 = smul.addr %s218, 8
        %s220 = scalar_lea.vmem %s1, %s219
      $region40: #{basic_block_forward.5} parent=31 // pred_fallthru
        _
    $region32: #{basic_block_forward.5} parent=5 // pred_fallthru
      _
    %p221 = scmp.le.s32.totalorder 1, %s12
    %p222 = scmp.lt.s32.totalorder %s12, 3
    %p223 = pnand %p221, %p222
    %p224 = pneg %p223
    // Predicated region
    $region41: #{basic_block_forward.5} parent=5 // pred_check
      _
    $region42: #{basic_block_forward.5} parent=5 // pred_check_branch
      %226 = sbr.rel (%p223) target = $region44
    $region43: #{basic_block_forward.5} parent=5 // pred_region
      %s227 = ssub.s32 %s12, 1
      %p228 = scmp.lt.s32.totalorder %s17, 1
      %s229 = scalar_select %p228, %s17, 1
      %s230 = smul.addr %s229, 8
      %s231 = smul.addr %s230, 8
      %s232 = scalar_lea.vmem %s0, %s231
      %p233 = pneg %p38
      %p234 = pneg %p35
      %p235 = scmp.lt.s32.totalorder %s17, 1
      %s236 = scalar_select %p235, %s17, 1
      %s237 = smul.addr %s236, 8
      %s238 = smul.addr %s237, 8
      %s239 = scalar_lea.vmem %s1, %s238
      %p240 = pneg %p64
      %p241 = pneg %p61
      %p242 = pneg %p85
      %p243 = pneg %p82
      %p244 = pneg %p106
      %p245 = pneg %p103
      %p246 = pneg %p127
      %p247 = pneg %p124
      %p248 = pneg %p148
      %p249 = pneg %p145
      %p250 = pneg %p174
      %p251 = pneg %p171
      %p252 = scmp.lt.s32.totalorder %s17, 1
      %s253 = scalar_select %p252, %s17, 1
      %s254 = smul.addr %s253, 8
      %s255 = smul.addr %s254, 8
      %s256 = scalar_lea.vmem %s6, %s255
      %p257 = scmp.lt.s32.totalorder %s17, 1
      %s258 = scalar_select %p257, %s17, 1
      %s259 = smul.addr %s258, 8
      %s260 = smul.addr %s259, 8
      %s261 = scalar_lea.vmem %s0, %s260
      %p262 = scmp.lt.s32.totalorder %s17, 1
      %s263 = scalar_select %p262, %s17, 1
      %s264 = smul.addr %s263, 8
      %s265 = smul.addr %s264, 8
      %s266 = scalar_lea.vmem %s1, %s265
      %p267 = scmp.lt.s32.totalorder %s17, 1
      %s268 = scalar_select %p267, %s17, 1
      %s269 = smul.addr %s268, 8
      %s270 = smul.addr %s269, 8
      %s271 = scalar_lea.vmem %s6, %s270
      %v272 = vld [vmem:[%s261] sm:$0xff]
      %v273 = vld [vmem:[%s261 + $0x8] sm:$0xff]
      %v274 = vld [vmem:[%s261 + $0x10] sm:$0xff]
      %v275 = vld [vmem:[%s261 + $0x18] sm:$0xff]
      %v276 = vld [vmem:[%s261 + $0x20] sm:$0xff]
      %v277 = vld [vmem:[%s261 + $0x28] sm:$0xff]
      %v278 = vld [vmem:[%s261 + $0x30] sm:$0xff]
      %v279 = vld [vmem:[%s261 + $0x38] sm:$0xff]
      %v280 = vld [vmem:[%s266] sm:$0xff]
      %v281 = vld [vmem:[%s266 + $0x8] sm:$0xff]
      %v282 = vld [vmem:[%s266 + $0x10] sm:$0xff]
      %v283 = vld [vmem:[%s266 + $0x18] sm:$0xff]
      %v284 = vld [vmem:[%s266 + $0x20] sm:$0xff]
      %v285 = vld [vmem:[%s266 + $0x28] sm:$0xff]
      %v286 = vld [vmem:[%s266 + $0x30] sm:$0xff]
      %v287 = vld [vmem:[%s266 + $0x38] sm:$0xff]
      %v288 = vld [vmem:[%s4] sm:$0x1]
      %v290 = vlaneseq
      %v291 = vshrl.u32 %v290, 7
      %v292 = vsub.s32 0, %v291
      %v293 = vrot.slane %v288, %v292
      %v295 = vmul.f32 %v280, %v293
      %v296 = vmul.f32 %v281, %v293
      %v297 = vmul.f32 %v282, %v293
      %v298 = vmul.f32 %v283, %v293
      %v299 = vmul.f32 %v284, %v293
      %v300 = vmul.f32 %v285, %v293
      %v301 = vmul.f32 %v286, %v293
      %v302 = vmul.f32 %v287, %v293
      %v303 = vld [vmem:[%s5] sm:$0x1]
      %v305 = vlaneseq
      %v306 = vshrl.u32 %v305, 7
      %v307 = vsub.s32 0, %v306
      %v308 = vrot.slane %v303, %v307
      %v310 = vadd.f32 %v295, %v308
      %v311 = vadd.f32 %v296, %v308
      %v312 = vadd.f32 %v297, %v308
      %v313 = vadd.f32 %v298, %v308
      %v314 = vadd.f32 %v299, %v308
      %v315 = vadd.f32 %v300, %v308
      %v316 = vadd.f32 %v301, %v308
      %v317 = vadd.f32 %v302, %v308
      %v318 = vld [vmem:[%s2] sm:$0x1]
      %v320 = vlaneseq
      %v321 = vshrl.u32 %v320, 7
      %v322 = vsub.s32 0, %v321
      %v323 = vrot.slane %v318, %v322
      %v325 = vmul.f32 %v272, %v323
      %v326 = vmul.f32 %v273, %v323
      %v327 = vmul.f32 %v274, %v323
      %v328 = vmul.f32 %v275, %v323
      %v329 = vmul.f32 %v276, %v323
      %v330 = vmul.f32 %v277, %v323
      %v331 = vmul.f32 %v278, %v323
      %v332 = vmul.f32 %v279, %v323
      %v333 = vld [vmem:[%s3] sm:$0x1]
      %v335 = vlaneseq
      %v336 = vshrl.u32 %v335, 7
      %v337 = vsub.s32 0, %v336
      %v338 = vrot.slane %v333, %v337
      %v340 = vadd.f32 %v325, %v338
      %v341 = vadd.f32 %v326, %v338
      %v342 = vadd.f32 %v327, %v338
      %v343 = vadd.f32 %v328, %v338
      %v344 = vadd.f32 %v329, %v338
      %v345 = vadd.f32 %v330, %v338
      %v346 = vadd.f32 %v331, %v338
      %v347 = vadd.f32 %v332, %v338
      %v348 = vadd.f32 %v340, %v310
      %v349 = vadd.f32 %v341, %v311
      %v350 = vadd.f32 %v342, %v312
      %v351 = vadd.f32 %v343, %v313
      %v352 = vadd.f32 %v344, %v314
      %v353 = vadd.f32 %v345, %v315
      %v354 = vadd.f32 %v346, %v316
      %v355 = vadd.f32 %v347, %v317
      %v356 = vmax.f32 %v348, 0.0
      %v357 = vmax.f32 %v349, 0.0
      %v358 = vmax.f32 %v350, 0.0
      %v359 = vmax.f32 %v351, 0.0
      %v360 = vmax.f32 %v352, 0.0
      %v361 = vmax.f32 %v353, 0.0
      %v362 = vmax.f32 %v354, 0.0
      %v363 = vmax.f32 %v355, 0.0
      %364 = vst [vmem:[%s271] sm:$0xff] %v356
      %365 = vst [vmem:[%s271 + $0x8] sm:$0xff] %v357
      %366 = vst [vmem:[%s271 + $0x10] sm:$0xff] %v358
      %367 = vst [vmem:[%s271 + $0x18] sm:$0xff] %v359
      %368 = vst [vmem:[%s271 + $0x20] sm:$0xff] %v360
      %369 = vst [vmem:[%s271 + $0x28] sm:$0xff] %v361
      %370 = vst [vmem:[%s271 + $0x30] sm:$0xff] %v362
      %371 = vst [vmem:[%s271 + $0x38] sm:$0xff] %v363
      %p372 = scmp.lt.s32.totalorder %s17, 1
      %s373 = scalar_select %p372, %s17, 1
      %s374 = smul.addr %s373, 8
      %s375 = smul.addr %s374, 8
      %s376 = scalar_lea.vmem %s6, %s375
      // Predicated region
      $region45: #{basic_block_forward.5} parent=43 // pred_check
        %p377 = pneg %p171
      $region46: #{basic_block_forward.5} parent=43 // pred_check_branch
        %379 = sbr.rel (%p377) target = $region48
      $region47: #{basic_block_forward.5} parent=43 // pred_region
        _
      $region48: #{basic_block_forward.5} parent=43 // pred_fallthru
        _
    $region44: #{basic_block_forward.5} parent=5 // pred_fallthru
      _
    %p380 = scmp.le.s32.totalorder 2, %s12
    // Predicated region
    $region49: #{basic_block_forward.5} parent=5 // pred_check
      %p381 = pneg %p380
    $region50: #{basic_block_forward.5} parent=5 // pred_check_branch
      %383 = sbr.rel (%p381) target = $region52
    $region51: #{basic_block_forward.5} parent=5 // pred_region
      %s384 = ssub.s32 %s12, 2
      // Predicated region
      $region53: #{basic_block_forward.5} parent=51 // pred_check
        %p385 = pneg %p177
      $region54: #{basic_block_forward.5} parent=51 // pred_check_branch
        %387 = sbr.rel (%p385) target = $region56
      $region55: #{basic_block_forward.5} parent=51 // pred_region
        %p388 = scmp.lt.s32.totalorder %s18, 1
        %s389 = scalar_select %p388, %s18, 1
        %s390 = smul.addr %s389, 8
        %s391 = smul.addr %s390, 8
        %s392 = scalar_lea.vmem %s6, %s391
      $region56: #{basic_block_forward.5} parent=51 // pred_fallthru
        _
    $region52: #{basic_block_forward.5} parent=5 // pred_fallthru
      _
  $region6: #{basic_block_forward.5} parent=0 // loop_footer
    %s16 = sadd.s32 1, %s12
  $region7: #{basic_block_forward.5} parent=0 // loop_footer_branch
    %11 = sbr.rel target = $region3
  $region8: #{basic_block_forward.5} parent=0 // loop_exit
    _

// kernel: basic_block_forward.4
$region0: #{basic_block_forward.4}
  #allocation0 [shape = 'u32[]', space=smem, size = 0x4, offset = 0x4, fixed_abs, tag = 'smem constant byte address 0x4 - core index']
  #allocation1 [shape = 'u32[144,128]{1,0:T(1,128)}', space=vmem, size = 0x12000, scoped, tag = 'internal scratch']
  #allocation2 [shape = 'f32[10,10,128]{2,1,0:T(8,128)}', space=vmem, size = 0x14000, scoped, tag = 'scratch operand']
  %s0 = inlined_call_operand.vmem [shape: f32[2,8,8,128], index: 0, kind: input, shape index: {}]
  %s1 = inlined_call_operand.vmem [shape: f32[3,384,128], index: 1, kind: input, shape index: {}]
  %s2 = inlined_call_operand.vmem [shape: f32[1,128], index: 2, kind: input, shape index: {}]
  %s3 = inlined_call_operand.vmem [shape: f32[1,128], index: 3, kind: input, shape index: {}]
  %s4 = inlined_call_operand.vmem [shape: f32[2,8,8,128], index: 4, kind: output, shape index: {0}]
  %s5 = inlined_call_operand.vmem [shape: f32[8,128], index: 5, kind: output, shape index: {1}]
  %6 = xla_tuple %s4, %s5
  %s7 = sld [smem:[#allocation0]]
  $region69: #{basic_block_forward.4} parent=0
    _
  %s9 = ssub.s32 1, %s7
  %s10 = scalar_select 0, %s9, %s7
  loop: start=0, step=1, limit=4
  $region2: #{basic_block_forward.4} parent=0 // loop_pre_header
    _
  $region3: #{basic_block_forward.4} parent=0 // loop_header
    %s12 = sphi 0, %s16
    %p13 = scmp.ge.s32.totalorder %s12, 4
    %s22 = sphi 0, %s24
    %s25 = sphi 0, %s22
    %s26 = sphi 0, %s25
    %s42 = sphi 0, %s26
    %s46 = sphi 0, %s46
    %s48 = sphi 0, %s46
    %s49 = sphi 0, %s48
    %s63 = sphi 0, %s49
    %s67 = sphi 0, %s67
    %s69 = sphi 0, %s67
    %s70 = sphi 0, %s69
    %s84 = sphi 0, %s70
    %s88 = sphi 0, %s88
    %s90 = sphi 0, %s88
    %s91 = sphi 0, %s90
    %s105 = sphi 0, %s91
    %s111 = sphi 0, %s113
    %s114 = sphi 0, %s111
    %s115 = sphi 0, %s114
    %s131 = sphi 0, %s115
    %s135 = sphi 0, %s135
    %s137 = sphi 0, %s135
    %s138 = sphi 0, %s137
    %s152 = sphi 0, %s138
  $region4: #{basic_block_forward.4} parent=0 // loop_header_branch
    %15 = sbr.rel (%p13) target = $region8
  $region5: #{basic_block_forward.4} parent=0 // loop_body
    %s17 = ssub.s32 %s12, 1
    %s18 = ssub.s32 %s12, 2
    %s19 = sadd.s32 %s12, 1
    %s20 = ssub.s32 %s12, %s19
    %p21 = scmp.eq.s32.totalorder %s20, 0
    %s23 = sadd.s32 %s22, 1
    %s24 = scalar_select %p21, %s22, %s23
    %p27 = pneg %p21
    %p28 = scmp.eq.s32.totalorder %s12, 1
    %p29 = por %p27, %p28
    %p30 = scmp.ne.s32.totalorder %s22, %s25
    %p31 = scmp.eq.s32.totalorder %s12, 0
    %p32 = por %p30, %p31
    %p33 = scmp.ne.s32.totalorder %s22, %s25
    %p34 = scmp.eq.s32.totalorder %s17, 1
    %p35 = por %p33, %p34
    %p36 = scmp.ne.s32.totalorder %s25, %s26
    %p37 = scmp.eq.s32.totalorder %s17, 0
    %p38 = por %p36, %p37
    %p39 = scmp.ne.s32.totalorder %s25, %s26
    %p40 = scmp.eq.s32.totalorder %s18, 1
    %p41 = por %p39, %p40
    %p43 = scmp.ne.s32.totalorder %s26, %s42
    %p44 = scmp.eq.s32.totalorder %s18, 0
    %p45 = por %p43, %p44
    %s47 = sadd.s32 %s46, 1
    %p50 = scmp.eq.s32.totalorder %s12, 1
    %p51 = scmp.ne.s32.totalorder %s46, %s48
    %p52 = scmp.eq.s32.totalorder %s12, 0
    %p53 = por %p51, %p52
    %p54 = scmp.ne.s32.totalorder %s46, %s48
    %p55 = scmp.eq.s32.totalorder %s17, 1
    %p56 = por %p54, %p55
    %p57 = scmp.ne.s32.totalorder %s48, %s49
    %p58 = scmp.eq.s32.totalorder %s17, 0
    %p59 = por %p57, %p58
    %p60 = scmp.ne.s32.totalorder %s48, %s49
    %p61 = scmp.eq.s32.totalorder %s18, 1
    %p62 = por %p60, %p61
    %p64 = scmp.ne.s32.totalorder %s49, %s63
    %p65 = scmp.eq.s32.totalorder %s18, 0
    %p66 = por %p64, %p65
    %s68 = sadd.s32 %s67, 1
    %p71 = scmp.eq.s32.totalorder %s12, 1
    %p72 = scmp.ne.s32.totalorder %s67, %s69
    %p73 = scmp.eq.s32.totalorder %s12, 0
    %p74 = por %p72, %p73
    %p75 = scmp.ne.s32.totalorder %s67, %s69
    %p76 = scmp.eq.s32.totalorder %s17, 1
    %p77 = por %p75, %p76
    %p78 = scmp.ne.s32.totalorder %s69, %s70
    %p79 = scmp.eq.s32.totalorder %s17, 0
    %p80 = por %p78, %p79
    %p81 = scmp.ne.s32.totalorder %s69, %s70
    %p82 = scmp.eq.s32.totalorder %s18, 1
    %p83 = por %p81, %p82
    %p85 = scmp.ne.s32.totalorder %s70, %s84
    %p86 = scmp.eq.s32.totalorder %s18, 0
    %p87 = por %p85, %p86
    %s89 = sadd.s32 %s88, 1
    %p92 = scmp.eq.s32.totalorder %s12, 1
    %p93 = scmp.ne.s32.totalorder %s88, %s90
    %p94 = scmp.eq.s32.totalorder %s12, 0
    %p95 = por %p93, %p94
    %p96 = scmp.ne.s32.totalorder %s88, %s90
    %p97 = scmp.eq.s32.totalorder %s17, 1
    %p98 = por %p96, %p97
    %p99 = scmp.ne.s32.totalorder %s90, %s91
    %p100 = scmp.eq.s32.totalorder %s17, 0
    %p101 = por %p99, %p100
    %p102 = scmp.ne.s32.totalorder %s90, %s91
    %p103 = scmp.eq.s32.totalorder %s18, 1
    %p104 = por %p102, %p103
    %p106 = scmp.ne.s32.totalorder %s91, %s105
    %p107 = scmp.eq.s32.totalorder %s18, 0
    %p108 = por %p106, %p107
    %s109 = ssub.s32 %s12, %s19
    %p110 = scmp.eq.s32.totalorder %s109, 0
    %s112 = sadd.s32 %s111, 1
    %s113 = scalar_select %p110, %s111, %s112
    %p116 = pneg %p110
    %p117 = scmp.eq.s32.totalorder %s12, 1
    %p118 = por %p116, %p117
    %p119 = scmp.ne.s32.totalorder %s111, %s114
    %p120 = scmp.eq.s32.totalorder %s12, 0
    %p121 = por %p119, %p120
    %p122 = scmp.ne.s32.totalorder %s111, %s114
    %p123 = scmp.eq.s32.totalorder %s17, 1
    %p124 = por %p122, %p123
    %p125 = scmp.ne.s32.totalorder %s114, %s115
    %p126 = scmp.eq.s32.totalorder %s17, 0
    %p127 = por %p125, %p126
    %p128 = scmp.ne.s32.totalorder %s114, %s115
    %p129 = scmp.eq.s32.totalorder %s18, 1
    %p130 = por %p128, %p129
    %p132 = scmp.ne.s32.totalorder %s115, %s131
    %p133 = scmp.eq.s32.totalorder %s18, 0
    %p134 = por %p132, %p133
    %s136 = sadd.s32 %s135, 1
    %p139 = scmp.eq.s32.totalorder %s12, 1
    %p140 = scmp.ne.s32.totalorder %s135, %s137
    %p141 = scmp.eq.s32.totalorder %s12, 0
    %p142 = por %p140, %p141
    %p143 = scmp.ne.s32.totalorder %s135, %s137
    %p144 = scmp.eq.s32.totalorder %s17, 1
    %p145 = por %p143, %p144
    %p146 = scmp.ne.s32.totalorder %s137, %s138
    %p147 = scmp.eq.s32.totalorder %s17, 0
    %p148 = por %p146, %p147
    %p149 = scmp.ne.s32.totalorder %s137, %s138
    %p150 = scmp.eq.s32.totalorder %s18, 1
    %p151 = por %p149, %p150
    %p153 = scmp.ne.s32.totalorder %s138, %s152
    %p154 = scmp.eq.s32.totalorder %s18, 0
    %p155 = por %p153, %p154
    %p156 = scmp.le.s32.totalorder 1, %s12
    %p157 = scmp.lt.s32.totalorder %s12, 3
    %p158 = pnand %p156, %p157
    %p159 = pneg %p158
    // Predicated region
    $region9: #{basic_block_forward.4} parent=5 // pred_check
      _
    $region10: #{basic_block_forward.4} parent=5 // pred_check_branch
      %161 = sbr.rel (%p158) target = $region12
    $region11: #{basic_block_forward.4} parent=5 // pred_region
      %s162 = ssub.s32 %s12, 1
      // Predicated region
      $region13: #{basic_block_forward.4} parent=11 // pred_check
        %p163 = pneg %p59
      $region14: #{basic_block_forward.4} parent=11 // pred_check_branch
        %165 = sbr.rel (%p163) target = $region16
      $region15: #{basic_block_forward.4} parent=11 // pred_region
        _
      $region16: #{basic_block_forward.4} parent=11 // pred_fallthru
        _
      // Predicated region
      $region17: #{basic_block_forward.4} parent=11 // pred_check
        %p166 = pneg %p80
      $region18: #{basic_block_forward.4} parent=11 // pred_check_branch
        %168 = sbr.rel (%p166) target = $region20
      $region19: #{basic_block_forward.4} parent=11 // pred_region
        _
      $region20: #{basic_block_forward.4} parent=11 // pred_fallthru
        _
      // Predicated region
      $region21: #{basic_block_forward.4} parent=11 // pred_check
        %p169 = pneg %p101
      $region22: #{basic_block_forward.4} parent=11 // pred_check_branch
        %171 = sbr.rel (%p169) target = $region24
      $region23: #{basic_block_forward.4} parent=11 // pred_region
        _
      $region24: #{basic_block_forward.4} parent=11 // pred_fallthru
        _
    $region12: #{basic_block_forward.4} parent=5 // pred_fallthru
      _
    %p172 = scmp.lt.s32.totalorder %s12, 2
    // Predicated region
    $region25: #{basic_block_forward.4} parent=5 // pred_check
      %p173 = pneg %p172
    $region26: #{basic_block_forward.4} parent=5 // pred_check_branch
      %175 = sbr.rel (%p173) target = $region28
    $region27: #{basic_block_forward.4} parent=5 // pred_region
      // Predicated region
      $region29: #{basic_block_forward.4} parent=27 // pred_check
        %p176 = pneg %p32
      $region30: #{basic_block_forward.4} parent=27 // pred_check_branch
        %178 = sbr.rel (%p176) target = $region32
      $region31: #{basic_block_forward.4} parent=27 // pred_region
        %p179 = scmp.lt.s32.totalorder %s12, 1
        %s180 = scalar_select %p179, %s12, 1
        %s181 = smul.addr %s180, 8
        %s182 = smul.addr %s181, 8
        %s183 = scalar_lea.vmem %s0, %s182
      $region32: #{basic_block_forward.4} parent=27 // pred_fallthru
        _
    $region28: #{basic_block_forward.4} parent=5 // pred_fallthru
      _
    %p184 = scmp.le.s32.totalorder 1, %s12
    %p185 = scmp.lt.s32.totalorder %s12, 3
    %p186 = pnand %p184, %p185
    %p187 = pneg %p186
    // Predicated region
    $region33: #{basic_block_forward.4} parent=5 // pred_check
      _
    $region34: #{basic_block_forward.4} parent=5 // pred_check_branch
      %189 = sbr.rel (%p186) target = $region36
    $region35: #{basic_block_forward.4} parent=5 // pred_region
      %s190 = ssub.s32 %s12, 1
      %p191 = scmp.lt.s32.totalorder %s17, 1
      %s192 = scalar_select %p191, %s17, 1
      %s193 = smul.addr %s192, 8
      %s194 = smul.addr %s193, 8
      %s195 = scalar_lea.vmem %s0, %s194
      %p196 = pneg %p38
      %p197 = pneg %p35
      %p198 = pneg %p59
      %p199 = pneg %p56
      %p200 = pneg %p80
      %p201 = pneg %p77
      %p202 = pneg %p101
      %p203 = pneg %p98
      %p204 = pneg %p127
      %p205 = pneg %p124
      %p206 = scmp.lt.s32.totalorder %s17, 1
      %s207 = scalar_select %p206, %s17, 1
      %s208 = smul.addr %s207, 8
      %s209 = smul.addr %s208, 8
      %s210 = scalar_lea.vmem %s4, %s209
      %p211 = pneg %p148
      %p212 = pneg %p145
      %p213 = scmp.lt.s32.totalorder %s17, 1
      %s214 = scalar_select %p213, %s17, 1
      %s215 = smul.addr %s214, 8
      %s216 = smul.addr %s215, 8
      %s217 = scalar_lea.vmem %s0, %s216
      %p218 = scmp.lt.s32.totalorder %s17, 1
      %s219 = scalar_select %p218, %s17, 1
      %s220 = smul.addr %s219, 8
      %s221 = smul.addr %s220, 8
      %s222 = scalar_lea.vmem %s4, %s221
      %p223 = scmp.eq.s32.totalorder %s17, 0
      // Predicated region
      $region37: #{basic_block_forward.4} parent=35 // pred_check
        %p224 = pneg %p223
      $region38: #{basic_block_forward.4} parent=35 // pred_check_branch
        %226 = sbr.rel (%p224) target = $region40
      $region39: #{basic_block_forward.4} parent=35 // pred_region
        %227 = vst [vmem:[#allocation2] sm:$0xff] 0.0
        %228 = vst [vmem:[#allocation2 + $0x8] sm:$0x3] 0.0
        %229 = vst [vmem:[#allocation2 + $0x10] sm:$0xff] 0.0
        %230 = vst [vmem:[#allocation2 + $0x18] sm:$0x3] 0.0
        %231 = vst [vmem:[#allocation2 + $0x20] sm:$0xff] 0.0
        %232 = vst [vmem:[#allocation2 + $0x28] sm:$0x3] 0.0
        %233 = vst [vmem:[#allocation2 + $0x30] sm:$0xff] 0.0
        %234 = vst [vmem:[#allocation2 + $0x38] sm:$0x3] 0.0
        %235 = vst [vmem:[#allocation2 + $0x40] sm:$0xff] 0.0
        %236 = vst [vmem:[#allocation2 + $0x48] sm:$0x3] 0.0
        %237 = vst [vmem:[#allocation2 + $0x50] sm:$0xff] 0.0
        %238 = vst [vmem:[#allocation2 + $0x58] sm:$0x3] 0.0
        %239 = vst [vmem:[#allocation2 + $0x60] sm:$0xff] 0.0
        %240 = vst [vmem:[#allocation2 + $0x68] sm:$0x3] 0.0
        %241 = vst [vmem:[#allocation2 + $0x70] sm:$0xff] 0.0
        %242 = vst [vmem:[#allocation2 + $0x78] sm:$0x3] 0.0
        %243 = vst [vmem:[#allocation2 + $0x80] sm:$0xff] 0.0
        %244 = vst [vmem:[#allocation2 + $0x88] sm:$0x3] 0.0
        %245 = vst [vmem:[#allocation2 + $0x90] sm:$0xff] 0.0
        %246 = vst [vmem:[#allocation2 + $0x98] sm:$0x3] 0.0
      $region40: #{basic_block_forward.4} parent=35 // pred_fallthru
        _
      %v247 = vld [vmem:[%s217] sm:$0xff]
      %v248 = vld [vmem:[%s217 + $0x8] sm:$0xff]
      %v249 = vld [vmem:[%s217 + $0x10] sm:$0xff]
      %v250 = vld [vmem:[%s217 + $0x18] sm:$0xff]
      %v251 = vld [vmem:[%s217 + $0x20] sm:$0xff]
      %v252 = vld [vmem:[%s217 + $0x28] sm:$0xff]
      %v253 = vld [vmem:[%s217 + $0x30] sm:$0xff]
      %v254 = vld [vmem:[%s217 + $0x38] sm:$0xff]
      %v255 = vld [vmem:[%s2] sm:$0x1]
      %v257 = vlaneseq
      %v258 = vshrl.u32 %v257, 7
      %v259 = vsub.s32 0, %v258
      %v260 = vrot.slane %v255, %v259
      %v262 = vmul.f32 %v247, %v260
      %v263 = vmul.f32 %v248, %v260
      %v264 = vmul.f32 %v249, %v260
      %v265 = vmul.f32 %v250, %v260
      %v266 = vmul.f32 %v251, %v260
      %v267 = vmul.f32 %v252, %v260
      %v268 = vmul.f32 %v253, %v260
      %v269 = vmul.f32 %v254, %v260
      %v270 = vld [vmem:[%s3] sm:$0x1]
      %v272 = vlaneseq
      %v273 = vshrl.u32 %v272, 7
      %v274 = vsub.s32 0, %v273
      %v275 = vrot.slane %v270, %v274
      %v277 = vadd.f32 %v262, %v275
      %v278 = vadd.f32 %v263, %v275
      %v279 = vadd.f32 %v264, %v275
      %v280 = vadd.f32 %v265, %v275
      %v281 = vadd.f32 %v266, %v275
      %v282 = vadd.f32 %v267, %v275
      %v283 = vadd.f32 %v268, %v275
      %v284 = vadd.f32 %v269, %v275
      %v285 = vmax.f32 %v277, 0.0
      %v286 = vmax.f32 %v278, 0.0
      %v287 = vmax.f32 %v279, 0.0
      %v288 = vmax.f32 %v280, 0.0
      %v289 = vmax.f32 %v281, 0.0
      %v290 = vmax.f32 %v282, 0.0
      %v291 = vmax.f32 %v283, 0.0
      %v292 = vmax.f32 %v284, 0.0
      %s293 = scalar_lea.vmem [#allocation2], 16
      %294 = vst [vmem:[%s293 + $0x1] sm:$0xff] %v285
      %295 = vst [vmem:[%s293 + $0x11] sm:$0xff] %v286
      %296 = vst [vmem:[%s293 + $0x21] sm:$0xff] %v287
      %297 = vst [vmem:[%s293 + $0x31] sm:$0xff] %v288
      %298 = vst [vmem:[%s293 + $0x41] sm:$0xff] %v289
      %299 = vst [vmem:[%s293 + $0x51] sm:$0xff] %v290
      %300 = vst [vmem:[%s293 + $0x61] sm:$0xff] %v291
      %301 = vst [vmem:[%s293 + $0x71] sm:$0xff] %v292
      %v302 = vld [vmem:[#allocation2] sm:$0xff]
      %v303 = vld [vmem:[#allocation2 + $0x10] sm:$0xff]
      %v304 = vld [vmem:[#allocation2 + $0x20] sm:$0xff]
      %v305 = vld [vmem:[#allocation2 + $0x30] sm:$0xff]
      %v306 = vld [vmem:[#allocation2 + $0x40] sm:$0xff]
      %v307 = vld [vmem:[#allocation2 + $0x50] sm:$0xff]
      %v308 = vld [vmem:[#allocation2 + $0x60] sm:$0xff]
      %v309 = vld [vmem:[#allocation2 + $0x70] sm:$0xff]
      %v310 = vld [vmem:[#allocation2 + $0x1] sm:$0xff]
      %v311 = vld [vmem:[#allocation2 + $0x11] sm:$0xff]
      %v312 = vld [vmem:[#allocation2 + $0x21] sm:$0xff]
      %v313 = vld [vmem:[#allocation2 + $0x31] sm:$0xff]
      %v314 = vld [vmem:[#allocation2 + $0x41] sm:$0xff]
      %v315 = vld [vmem:[#allocation2 + $0x51] sm:$0xff]
      %v316 = vld [vmem:[#allocation2 + $0x61] sm:$0xff]
      %v317 = vld [vmem:[#allocation2 + $0x71] sm:$0xff]
      %v318 = vld [vmem:[#allocation2 + $0x2] sm:$0xff]
      %v319 = vld [vmem:[#allocation2 + $0x12] sm:$0xff]
      %v320 = vld [vmem:[#allocation2 + $0x22] sm:$0xff]
      %v321 = vld [vmem:[#allocation2 + $0x32] sm:$0xff]
      %v322 = vld [vmem:[#allocation2 + $0x42] sm:$0xff]
      %v323 = vld [vmem:[#allocation2 + $0x52] sm:$0xff]
      %v324 = vld [vmem:[#allocation2 + $0x62] sm:$0xff]
      %v325 = vld [vmem:[#allocation2 + $0x72] sm:$0xff]
      %v326 = vld [vmem:[%s1] sm:$0xff]
      %v327 = vld [vmem:[%s1 + $0x8] sm:$0xff]
      %v328 = vld [vmem:[%s1 + $0x10] sm:$0xff]
      %v329 = vld [vmem:[%s1 + $0x18] sm:$0xff]
      %v330 = vld [vmem:[%s1 + $0x20] sm:$0xff]
      %v331 = vld [vmem:[%s1 + $0x28] sm:$0xff]
      %v332 = vld [vmem:[%s1 + $0x30] sm:$0xff]
      %v333 = vld [vmem:[%s1 + $0x38] sm:$0xff]
      %v334 = vld [vmem:[%s1 + $0x40] sm:$0xff]
      %v335 = vld [vmem:[%s1 + $0x48] sm:$0xff]
      %v336 = vld [vmem:[%s1 + $0x50] sm:$0xff]
      %v337 = vld [vmem:[%s1 + $0x58] sm:$0xff]
      %v338 = vld [vmem:[%s1 + $0x60] sm:$0xff]
      %v339 = vld [vmem:[%s1 + $0x68] sm:$0xff]
      %v340 = vld [vmem:[%s1 + $0x70] sm:$0xff]
      %v341 = vld [vmem:[%s1 + $0x78] sm:$0xff]
      %v342 = vld [vmem:[%s1 + $0x80] sm:$0xff]
      %v343 = vld [vmem:[%s1 + $0x88] sm:$0xff]
      %v344 = vld [vmem:[%s1 + $0x90] sm:$0xff]
      %v345 = vld [vmem:[%s1 + $0x98] sm:$0xff]
      %v346 = vld [vmem:[%s1 + $0xa0] sm:$0xff]
      %v347 = vld [vmem:[%s1 + $0xa8] sm:$0xff]
      %v348 = vld [vmem:[%s1 + $0xb0] sm:$0xff]
      %v349 = vld [vmem:[%s1 + $0xb8] sm:$0xff]
      %v350 = vld [vmem:[%s1 + $0xc0] sm:$0xff]
      %v351 = vld [vmem:[%s1 + $0xc8] sm:$0xff]
      %v352 = vld [vmem:[%s1 + $0xd0] sm:$0xff]
      %v353 = vld [vmem:[%s1 + $0xd8] sm:$0xff]
      %v354 = vld [vmem:[%s1 + $0xe0] sm:$0xff]
      %v355 = vld [vmem:[%s1 + $0xe8] sm:$0xff]
      %v356 = vld [vmem:[%s1 + $0xf0] sm:$0xff]
      %v357 = vld [vmem:[%s1 + $0xf8] sm:$0xff]
      %v358 = vld [vmem:[%s1 + $0x100] sm:$0xff]
      %v359 = vld [vmem:[%s1 + $0x108] sm:$0xff]
      %v360 = vld [vmem:[%s1 + $0x110] sm:$0xff]
      %v361 = vld [vmem:[%s1 + $0x118] sm:$0xff]
      %v362 = vld [vmem:[%s1 + $0x120] sm:$0xff]
      %v363 = vld [vmem:[%s1 + $0x128] sm:$0xff]
      %v364 = vld [vmem:[%s1 + $0x130] sm:$0xff]
      %v365 = vld [vmem:[%s1 + $0x138] sm:$0xff]
      %v366 = vld [vmem:[%s1 + $0x140] sm:$0xff]
      %v367 = vld [vmem:[%s1 + $0x148] sm:$0xff]
      %v368 = vld [vmem:[%s1 + $0x150] sm:$0xff]
      %v369 = vld [vmem:[%s1 + $0x158] sm:$0xff]
      %v370 = vld [vmem:[%s1 + $0x160] sm:$0xff]
      %v371 = vld [vmem:[%s1 + $0x168] sm:$0xff]
      %v372 = vld [vmem:[%s1 + $0x170] sm:$0xff]
      %v373 = vld [vmem:[%s1 + $0x178] sm:$0xff]
      %v374 = vld [vmem:[%s293] sm:$0xff]
      %v375 = vld [vmem:[%s293 + $0x10] sm:$0xff]
      %v376 = vld [vmem:[%s293 + $0x20] sm:$0xff]
      %v377 = vld [vmem:[%s293 + $0x30] sm:$0xff]
      %v378 = vld [vmem:[%s293 + $0x40] sm:$0xff]
      %v379 = vld [vmem:[%s293 + $0x50] sm:$0xff]
      %v380 = vld [vmem:[%s293 + $0x60] sm:$0xff]
      %v381 = vld [vmem:[%s293 + $0x70] sm:$0xff]
      %v382 = vld [vmem:[%s293 + $0x1] sm:$0xff]
      %v383 = vld [vmem:[%s293 + $0x11] sm:$0xff]
      %v384 = vld [vmem:[%s293 + $0x21] sm:$0xff]
      %v385 = vld [vmem:[%s293 + $0x31] sm:$0xff]
      %v386 = vld [vmem:[%s293 + $0x41] sm:$0xff]
      %v387 = vld [vmem:[%s293 + $0x51] sm:$0xff]
      %v388 = vld [vmem:[%s293 + $0x61] sm:$0xff]
      %v389 = vld [vmem:[%s293 + $0x71] sm:$0xff]
      %v390 = vld [vmem:[%s293 + $0x2] sm:$0xff]
      %v391 = vld [vmem:[%s293 + $0x12] sm:$0xff]
      %v392 = vld [vmem:[%s293 + $0x22] sm:$0xff]
      %v393 = vld [vmem:[%s293 + $0x32] sm:$0xff]
      %v394 = vld [vmem:[%s293 + $0x42] sm:$0xff]
      %v395 = vld [vmem:[%s293 + $0x52] sm:$0xff]
      %v396 = vld [vmem:[%s293 + $0x62] sm:$0xff]
      %v397 = vld [vmem:[%s293 + $0x72] sm:$0xff]
      %s398 = scalar_lea.vmem %s1, 384
      %v399 = vld [vmem:[%s398] sm:$0xff]
      %v400 = vld [vmem:[%s398 + $0x8] sm:$0xff]
      %v401 = vld [vmem:[%s398 + $0x10] sm:$0xff]
      %v402 = vld [vmem:[%s398 + $0x18] sm:$0xff]
      %v403 = vld [vmem:[%s398 + $0x20] sm:$0xff]
      %v404 = vld [vmem:[%s398 + $0x28] sm:$0xff]
      %v405 = vld [vmem:[%s398 + $0x30] sm:$0xff]
      %v406 = vld [vmem:[%s398 + $0x38] sm:$0xff]
      %v407 = vld [vmem:[%s398 + $0x40] sm:$0xff]
      %v408 = vld [vmem:[%s398 + $0x48] sm:$0xff]
      %v409 = vld [vmem:[%s398 + $0x50] sm:$0xff]
      %v410 = vld [vmem:[%s398 + $0x58] sm:$0xff]
      %v411 = vld [vmem:[%s398 + $0x60] sm:$0xff]
      %v412 = vld [vmem:[%s398 + $0x68] sm:$0xff]
      %v413 = vld [vmem:[%s398 + $0x70] sm:$0xff]
      %v414 = vld [vmem:[%s398 + $0x78] sm:$0xff]
      %v415 = vld [vmem:[%s398 + $0x80] sm:$0xff]
      %v416 = vld [vmem:[%s398 + $0x88] sm:$0xff]
      %v417 = vld [vmem:[%s398 + $0x90] sm:$0xff]
      %v418 = vld [vmem:[%s398 + $0x98] sm:$0xff]
      %v419 = vld [vmem:[%s398 + $0xa0] sm:$0xff]
      %v420 = vld [vmem:[%s398 + $0xa8] sm:$0xff]
      %v421 = vld [vmem:[%s398 + $0xb0] sm:$0xff]
      %v422 = vld [vmem:[%s398 + $0xb8] sm:$0xff]
      %v423 = vld [vmem:[%s398 + $0xc0] sm:$0xff]
      %v424 = vld [vmem:[%s398 + $0xc8] sm:$0xff]
      %v425 = vld [vmem:[%s398 + $0xd0] sm:$0xff]
      %v426 = vld [vmem:[%s398 + $0xd8] sm:$0xff]
      %v427 = vld [vmem:[%s398 + $0xe0] sm:$0xff]
      %v428 = vld [vmem:[%s398 + $0xe8] sm:$0xff]
      %v429 = vld [vmem:[%s398 + $0xf0] sm:$0xff]
      %v430 = vld [vmem:[%s398 + $0xf8] sm:$0xff]
      %v431 = vld [vmem:[%s398 + $0x100] sm:$0xff]
      %v432 = vld [vmem:[%s398 + $0x108] sm:$0xff]
      %v433 = vld [vmem:[%s398 + $0x110] sm:$0xff]
      %v434 = vld [vmem:[%s398 + $0x118] sm:$0xff]
      %v435 = vld [vmem:[%s398 + $0x120] sm:$0xff]
      %v436 = vld [vmem:[%s398 + $0x128] sm:$0xff]
      %v437 = vld [vmem:[%s398 + $0x130] sm:$0xff]
      %v438 = vld [vmem:[%s398 + $0x138] sm:$0xff]
      %v439 = vld [vmem:[%s398 + $0x140] sm:$0xff]
      %v440 = vld [vmem:[%s398 + $0x148] sm:$0xff]
      %v441 = vld [vmem:[%s398 + $0x150] sm:$0xff]
      %v442 = vld [vmem:[%s398 + $0x158] sm:$0xff]
      %v443 = vld [vmem:[%s398 + $0x160] sm:$0xff]
      %v444 = vld [vmem:[%s398 + $0x168] sm:$0xff]
      %v445 = vld [vmem:[%s398 + $0x170] sm:$0xff]
      %v446 = vld [vmem:[%s398 + $0x178] sm:$0xff]
      %447 = vmatprep.subr.mxu0 0.0
      %448 = vmatpush1.msra.mxu0 %v399
      %449 = vmatprep.subr.mxu0 0.0
      %450 = vmatpush1.msra.mxu0 %v400
      %451 = vmatprep.subr.mxu0 0.0
      %452 = vmatpush1.msra.mxu0 %v401
      %453 = vmatprep.subr.mxu0 0.0
      %454 = vmatpush1.msra.mxu0 %v402
      %455 = vmatprep.subr.mxu0 0.0
      %456 = vmatpush1.msra.mxu0 %v403
      %457 = vmatprep.subr.mxu0 0.0
      %458 = vmatpush1.msra.mxu0 %v404
      %459 = vmatprep.subr.mxu0 0.0
      %460 = vmatpush1.msra.mxu0 %v405
      %461 = vmatprep.subr.mxu0 0.0
      %462 = vmatpush1.msra.mxu0 %v406
      %463 = vmatprep.subr.mxu0 0.0
      %464 = vmatpush1.msra.mxu0 %v407
      %465 = vmatprep.subr.mxu0 0.0
      %466 = vmatpush1.msra.mxu0 %v408
      %467 = vmatprep.subr.mxu0 0.0
      %468 = vmatpush1.msra.mxu0 %v409
      %469 = vmatprep.subr.mxu0 0.0
      %470 = vmatpush1.msra.mxu0 %v410
      %471 = vmatprep.subr.mxu0 0.0
      %472 = vmatpush1.msra.mxu0 %v411
      %473 = vmatprep.subr.mxu0 0.0
      %474 = vmatpush1.msra.mxu0 %v412
      %475 = vmatprep.subr.mxu0 0.0
      %476 = vmatpush1.msra.mxu0 %v413
      %477 = vmatprep.subr.mxu0 0.0
      %478 = vmatpush1.msra.mxu0 %v414
      %479 = vmatprep.subr.mxu0 0.0
      %480 = vmatpush1.msra.mxu0 %v415
      %481 = vmatprep.subr.mxu0 0.0
      %482 = vmatpush1.msra.mxu0 %v416
      %483 = vmatprep.subr.mxu0 0.0
      %484 = vmatpush1.msra.mxu0 %v417
      %485 = vmatprep.subr.mxu0 0.0
      %486 = vmatpush1.msra.mxu0 %v418
      %487 = vmatprep.subr.mxu0 0.0
      %488 = vmatpush1.msra.mxu0 %v419
      %489 = vmatprep.subr.mxu0 0.0
      %490 = vmatpush1.msra.mxu0 %v420
      %491 = vmatprep.subr.mxu0 0.0
      %492 = vmatpush1.msra.mxu0 %v421
      %493 = vmatprep.subr.mxu0 0.0
      %494 = vmatpush1.msra.mxu0 %v422
      %495 = vmatprep.subr.mxu0 0.0
      %496 = vmatpush1.msra.mxu0 %v423
      %497 = vmatprep.subr.mxu0 0.0
      %498 = vmatpush1.msra.mxu0 %v424
      %499 = vmatprep.subr.mxu0 0.0
      %500 = vmatpush1.msra.mxu0 %v425
      %501 = vmatprep.subr.mxu0 0.0
      %502 = vmatpush1.msra.mxu0 %v426
      %503 = vmatprep.subr.mxu0 0.0
      %504 = vmatpush1.msra.mxu0 %v427
      %505 = vmatprep.subr.mxu0 0.0
      %506 = vmatpush1.msra.mxu0 %v428
      %507 = vmatprep.subr.mxu0 0.0
      %508 = vmatpush1.msra.mxu0 %v429
      %509 = vmatprep.subr.mxu0 0.0
      %510 = vmatpush1.msra.mxu0 %v430
      %511 = vmatprep.mubr.f32.mxu0 %v382
      %512 = vmatmul.mubr.f32.gmra.mrb[0].mxu0 %v374
      %v513 = vpop.f32.mrb[0].mxu0
      %v514 = vadd.f32 0.0, %v513
      %v515 = vpop.f32.mrb[0].mxu0
      %516 = vmatprep.mubr.f32.mxu0 %v383
      %517 = vmatmul.mubr.f32.gmra.mrb[0].mxu0 %v375
      %v518 = vpop.f32.mrb[0].mxu0
      %v519 = vadd.f32 0.0, %v518
      %v520 = vpop.f32.mrb[0].mxu0
      %521 = vmatprep.mubr.f32.mxu0 %v384
      %522 = vmatmul.mubr.f32.gmra.mrb[0].mxu0 %v376
      %v523 = vpop.f32.mrb[0].mxu0
      %v524 = vadd.f32 0.0, %v523
      %v525 = vpop.f32.mrb[0].mxu0
      %526 = vmatprep.mubr.f32.mxu0 %v385
      %527 = vmatmul.mubr.f32.gmra.mrb[0].mxu0 %v377
      %v528 = vpop.f32.mrb[0].mxu0
      %v529 = vadd.f32 0.0, %v528
      %v530 = vpop.f32.mrb[0].mxu0
      %531 = vmatprep.mubr.f32.mxu0 %v386
      %532 = vmatmul.mubr.f32.gmra.mrb[0].mxu0 %v378
      %v533 = vpop.f32.mrb[0].mxu0
      %v534 = vadd.f32 0.0, %v533
      %v535 = vpop.f32.mrb[0].mxu0
      %536 = vmatprep.mubr.f32.mxu0 %v387
      %537 = vmatmul.mubr.f32.gmra.mrb[0].mxu0 %v379
      %v538 = vpop.f32.mrb[0].mxu0
      %v539 = vadd.f32 0.0, %v538
      %v540 = vpop.f32.mrb[0].mxu0
      %541 = vmatprep.mubr.f32.mxu0 %v388
      %542 = vmatmul.mubr.f32.gmra.mrb[0].mxu0 %v380
      %v543 = vpop.f32.mrb[0].mxu0
      %v544 = vadd.f32 0.0, %v543
      %v545 = vpop.f32.mrb[0].mxu0
      %546 = vmatprep.mubr.f32.mxu0 %v389
      %547 = vmatmul.mubr.f32.gmra.mrb[0].mxu0 %v381
      %v548 = vpop.f32.mrb[0].mxu0
      %v549 = vadd.f32 0.0, %v548
      %v550 = vpop.f32.mrb[0].mxu0
      %551 = vdwg.mxu0
      %552 = vmatprep.subr.mxu0 0.0
      %553 = vmatpush1.msra.mxu0 %v431
      %554 = vmatprep.subr.mxu0 0.0
      %555 = vmatpush1.msra.mxu0 %v432
      %556 = vmatprep.subr.mxu0 0.0
      %557 = vmatpush1.msra.mxu0 %v433
      %558 = vmatprep.subr.mxu0 0.0
      %559 = vmatpush1.msra.mxu0 %v434
      %560 = vmatprep.subr.mxu0 0.0
      %561 = vmatpush1.msra.mxu0 %v435
      %562 = vmatprep.subr.mxu0 0.0
      %563 = vmatpush1.msra.mxu0 %v436
      %564 = vmatprep.subr.mxu0 0.0
      %565 = vmatpush1.msra.mxu0 %v437
      %566 = vmatprep.subr.mxu0 0.0
      %567 = vmatpush1.msra.mxu0 %v438
      %568 = vmatprep.subr.mxu0 0.0
      %569 = vmatpush1.msra.mxu0 %v439
      %570 = vmatprep.subr.mxu0 0.0
      %571 = vmatpush1.msra.mxu0 %v440
      %572 = vmatprep.subr.mxu0 0.0
      %573 = vmatpush1.msra.mxu0 %v441
      %574 = vmatprep.subr.mxu0 0.0
      %575 = vmatpush1.msra.mxu0 %v442
      %576 = vmatprep.subr.mxu0 0.0
      %577 = vmatpush1.msra.mxu0 %v443
      %578 = vmatprep.subr.mxu0 0.0
      %579 = vmatpush1.msra.mxu0 %v444
      %580 = vmatprep.subr.mxu0 0.0
      %581 = vmatpush1.msra.mxu0 %v445
      %582 = vmatprep.subr.mxu0 0.0
      %583 = vmatpush1.msra.mxu0 %v446
      %584 = vmatprep.subr.mxu0 0.0
      %585 = vmatpush1.msra.mxu0 0.0
      %586 = vmatprep.subr.mxu0 0.0
      %587 = vmatpush1.msra.mxu0 0.0
      %588 = vmatprep.subr.mxu0 0.0
      %589 = vmatpush1.msra.mxu0 0.0
      %590 = vmatprep.subr.mxu0 0.0
      %591 = vmatpush1.msra.mxu0 0.0
      %592 = vmatprep.subr.mxu0 0.0
      %593 = vmatpush1.msra.mxu0 0.0
      %594 = vmatprep.subr.mxu0 0.0
      %595 = vmatpush1.msra.mxu0 0.0
      %596 = vmatprep.subr.mxu0 0.0
      %597 = vmatpush1.msra.mxu0 0.0
      %598 = vmatprep.subr.mxu0 0.0
      %599 = vmatpush1.msra.mxu0 0.0
      %600 = vmatprep.subr.mxu0 0.0
      %601 = vmatpush1.msra.mxu0 0.0
      %602 = vmatprep.subr.mxu0 0.0
      %603 = vmatpush1.msra.mxu0 0.0
      %604 = vmatprep.subr.mxu0 0.0
      %605 = vmatpush1.msra.mxu0 0.0
      %606 = vmatprep.subr.mxu0 0.0
      %607 = vmatpush1.msra.mxu0 0.0
      %608 = vmatprep.subr.mxu0 0.0
      %609 = vmatpush1.msra.mxu0 0.0
      %610 = vmatprep.subr.mxu0 0.0
      %611 = vmatpush1.msra.mxu0 0.0
      %612 = vmatprep.subr.mxu0 0.0
      %613 = vmatpush1.msra.mxu0 0.0
      %614 = vmatprep.subr.mxu0 0.0
      %615 = vmatpush1.msra.mxu0 0.0
      %616 = vmatprep.mubr.f32.mxu0 0.0
      %617 = vmatmul.mubr.f32.gmra.mrb[0].mxu0 %v390
      %v618 = vpop.f32.mrb[0].mxu0
      %v619 = vadd.f32 %v514, %v618
      %v620 = vpop.f32.mrb[0].mxu0
      %621 = vmatprep.mubr.f32.mxu0 0.0
      %622 = vmatmul.mubr.f32.gmra.mrb[0].mxu0 %v391
      %v623 = vpop.f32.mrb[0].mxu0
      %v624 = vadd.f32 %v519, %v623
      %v625 = vpop.f32.mrb[0].mxu0
      %626 = vmatprep.mubr.f32.mxu0 0.0
      %627 = vmatmul.mubr.f32.gmra.mrb[0].mxu0 %v392
      %v628 = vpop.f32.mrb[0].mxu0
      %v629 = vadd.f32 %v524, %v628
      %v630 = vpop.f32.mrb[0].mxu0
      %631 = vmatprep.mubr.f32.mxu0 0.0
      %632 = vmatmul.mubr.f32.gmra.mrb[0].mxu0 %v393
      %v633 = vpop.f32.mrb[0].mxu0
      %v634 = vadd.f32 %v529, %v633
      %v635 = vpop.f32.mrb[0].mxu0
      %636 = vmatprep.mubr.f32.mxu0 0.0
      %637 = vmatmul.mubr.f32.gmra.mrb[0].mxu0 %v394
      %v638 = vpop.f32.mrb[0].mxu0
      %v639 = vadd.f32 %v534, %v638
      %v640 = vpop.f32.mrb[0].mxu0
      %641 = vmatprep.mubr.f32.mxu0 0.0
      %642 = vmatmul.mubr.f32.gmra.mrb[0].mxu0 %v395
      %v643 = vpop.f32.mrb[0].mxu0
      %v644 = vadd.f32 %v539, %v643
      %v645 = vpop.f32.mrb[0].mxu0
      %646 = vmatprep.mubr.f32.mxu0 0.0
      %647 = vmatmul.mubr.f32.gmra.mrb[0].mxu0 %v396
      %v648 = vpop.f32.mrb[0].mxu0
      %v649 = vadd.f32 %v544, %v648
      %v650 = vpop.f32.mrb[0].mxu0
      %651 = vmatprep.mubr.f32.mxu0 0.0
      %652 = vmatmul.mubr.f32.gmra.mrb[0].mxu0 %v397
      %v653 = vpop.f32.mrb[0].mxu0
      %v654 = vadd.f32 %v549, %v653
      %v655 = vpop.f32.mrb[0].mxu0
      %656 = vdwg.mxu0
      %657 = vmatprep.subr.mxu0 0.0
      %658 = vmatpush1.msra.mxu0 %v326
      %659 = vmatprep.subr.mxu0 0.0
      %660 = vmatpush1.msra.mxu0 %v327
      %661 = vmatprep.subr.mxu0 0.0
      %662 = vmatpush1.msra.mxu0 %v328
      %663 = vmatprep.subr.mxu0 0.0
      %664 = vmatpush1.msra.mxu0 %v329
      %665 = vmatprep.subr.mxu0 0.0
      %666 = vmatpush1.msra.mxu0 %v330
      %667 = vmatprep.subr.mxu0 0.0
      %668 = vmatpush1.msra.mxu0 %v331
      %669 = vmatprep.subr.mxu0 0.0
      %670 = vmatpush1.msra.mxu0 %v332
      %671 = vmatprep.subr.mxu0 0.0
      %672 = vmatpush1.msra.mxu0 %v333
      %673 = vmatprep.subr.mxu0 0.0
      %674 = vmatpush1.msra.mxu0 %v334
      %675 = vmatprep.subr.mxu0 0.0
      %676 = vmatpush1.msra.mxu0 %v335
      %677 = vmatprep.subr.mxu0 0.0
      %678 = vmatpush1.msra.mxu0 %v336
      %679 = vmatprep.subr.mxu0 0.0
      %680 = vmatpush1.msra.mxu0 %v337
      %681 = vmatprep.subr.mxu0 0.0
      %682 = vmatpush1.msra.mxu0 %v338
      %683 = vmatprep.subr.mxu0 0.0
      %684 = vmatpush1.msra.mxu0 %v339
      %685 = vmatprep.subr.mxu0 0.0
      %686 = vmatpush1.msra.mxu0 %v340
      %687 = vmatprep.subr.mxu0 0.0
      %688 = vmatpush1.msra.mxu0 %v341
      %689 = vmatprep.subr.mxu0 0.0
      %690 = vmatpush1.msra.mxu0 %v342
      %691 = vmatprep.subr.mxu0 0.0
      %692 = vmatpush1.msra.mxu0 %v343
      %693 = vmatprep.subr.mxu0 0.0
      %694 = vmatpush1.msra.mxu0 %v344
      %695 = vmatprep.subr.mxu0 0.0
      %696 = vmatpush1.msra.mxu0 %v345
      %697 = vmatprep.subr.mxu0 0.0
      %698 = vmatpush1.msra.mxu0 %v346
      %699 = vmatprep.subr.mxu0 0.0
      %700 = vmatpush1.msra.mxu0 %v347
      %701 = vmatprep.subr.mxu0 0.0
      %702 = vmatpush1.msra.mxu0 %v348
      %703 = vmatprep.subr.mxu0 0.0
      %704 = vmatpush1.msra.mxu0 %v349
      %705 = vmatprep.subr.mxu0 0.0
      %706 = vmatpush1.msra.mxu0 %v350
      %707 = vmatprep.subr.mxu0 0.0
      %708 = vmatpush1.msra.mxu0 %v351
      %709 = vmatprep.subr.mxu0 0.0
      %710 = vmatpush1.msra.mxu0 %v352
      %711 = vmatprep.subr.mxu0 0.0
      %712 = vmatpush1.msra.mxu0 %v353
      %713 = vmatprep.subr.mxu0 0.0
      %714 = vmatpush1.msra.mxu0 %v354
      %715 = vmatprep.subr.mxu0 0.0
      %716 = vmatpush1.msra.mxu0 %v355
      %717 = vmatprep.subr.mxu0 0.0
      %718 = vmatpush1.msra.mxu0 %v356
      %719 = vmatprep.subr.mxu0 0.0
      %720 = vmatpush1.msra.mxu0 %v357
      %721 = vmatprep.mubr.f32.mxu0 %v310
      %722 = vmatmul.mubr.f32.gmra.mrb[0].mxu0 %v302
      %v723 = vpop.f32.mrb[0].mxu0
      %v724 = vadd.f32 %v619, %v723
      %v725 = vpop.f32.mrb[0].mxu0
      %726 = vmatprep.mubr.f32.mxu0 %v311
      %727 = vmatmul.mubr.f32.gmra.mrb[0].mxu0 %v303
      %v728 = vpop.f32.mrb[0].mxu0
      %v729 = vadd.f32 %v624, %v728
      %v730 = vpop.f32.mrb[0].mxu0
      %731 = vmatprep.mubr.f32.mxu0 %v312
      %732 = vmatmul.mubr.f32.gmra.mrb[0].mxu0 %v304
      %v733 = vpop.f32.mrb[0].mxu0
      %v734 = vadd.f32 %v629, %v733
      %v735 = vpop.f32.mrb[0].mxu0
      %736 = vmatprep.mubr.f32.mxu0 %v313
      %737 = vmatmul.mubr.f32.gmra.mrb[0].mxu0 %v305
      %v738 = vpop.f32.mrb[0].mxu0
      %v739 = vadd.f32 %v634, %v738
      %v740 = vpop.f32.mrb[0].mxu0
      %741 = vmatprep.mubr.f32.mxu0 %v314
      %742 = vmatmul.mubr.f32.gmra.mrb[0].mxu0 %v306
      %v743 = vpop.f32.mrb[0].mxu0
      %v744 = vadd.f32 %v639, %v743
      %v745 = vpop.f32.mrb[0].mxu0
      %746 = vmatprep.mubr.f32.mxu0 %v315
      %747 = vmatmul.mubr.f32.gmra.mrb[0].mxu0 %v307
      %v748 = vpop.f32.mrb[0].mxu0
      %v749 = vadd.f32 %v644, %v748
      %v750 = vpop.f32.mrb[0].mxu0
      %751 = vmatprep.mubr.f32.mxu0 %v316
      %752 = vmatmul.mubr.f32.gmra.mrb[0].mxu0 %v308
      %v753 = vpop.f32.mrb[0].mxu0
      %v754 = vadd.f32 %v649, %v753
      %v755 = vpop.f32.mrb[0].mxu0
      %756 = vmatprep.mubr.f32.mxu0 %v317
      %757 = vmatmul.mubr.f32.gmra.mrb[0].mxu0 %v309
      %v758 = vpop.f32.mrb[0].mxu0
      %v759 = vadd.f32 %v654, %v758
      %v760 = vpop.f32.mrb[0].mxu0
      %761 = vdwg.mxu0
      %762 = vmatprep.subr.mxu0 0.0
      %763 = vmatpush1.msra.mxu0 %v358
      %764 = vmatprep.subr.mxu0 0.0
      %765 = vmatpush1.msra.mxu0 %v359
      %766 = vmatprep.subr.mxu0 0.0
      %767 = vmatpush1.msra.mxu0 %v360
      %768 = vmatprep.subr.mxu0 0.0
      %769 = vmatpush1.msra.mxu0 %v361
      %770 = vmatprep.subr.mxu0 0.0
      %771 = vmatpush1.msra.mxu0 %v362
      %772 = vmatprep.subr.mxu0 0.0
      %773 = vmatpush1.msra.mxu0 %v363
      %774 = vmatprep.subr.mxu0 0.0
      %775 = vmatpush1.msra.mxu0 %v364
      %776 = vmatprep.subr.mxu0 0.0
      %777 = vmatpush1.msra.mxu0 %v365
      %778 = vmatprep.subr.mxu0 0.0
      %779 = vmatpush1.msra.mxu0 %v366
      %780 = vmatprep.subr.mxu0 0.0
      %781 = vmatpush1.msra.mxu0 %v367
      %782 = vmatprep.subr.mxu0 0.0
      %783 = vmatpush1.msra.mxu0 %v368
      %784 = vmatprep.subr.mxu0 0.0
      %785 = vmatpush1.msra.mxu0 %v369
      %786 = vmatprep.subr.mxu0 0.0
      %787 = vmatpush1.msra.mxu0 %v370
      %788 = vmatprep.subr.mxu0 0.0
      %789 = vmatpush1.msra.mxu0 %v371
      %790 = vmatprep.subr.mxu0 0.0
      %791 = vmatpush1.msra.mxu0 %v372
      %792 = vmatprep.subr.mxu0 0.0
      %793 = vmatpush1.msra.mxu0 %v373
      %794 = vmatprep.subr.mxu0 0.0
      %795 = vmatpush1.msra.mxu0 0.0
      %796 = vmatprep.subr.mxu0 0.0
      %797 = vmatpush1.msra.mxu0 0.0
      %798 = vmatprep.subr.mxu0 0.0
      %799 = vmatpush1.msra.mxu0 0.0
      %800 = vmatprep.subr.mxu0 0.0
      %801 = vmatpush1.msra.mxu0 0.0
      %802 = vmatprep.subr.mxu0 0.0
      %803 = vmatpush1.msra.mxu0 0.0
      %804 = vmatprep.subr.mxu0 0.0
      %805 = vmatpush1.msra.mxu0 0.0
      %806 = vmatprep.subr.mxu0 0.0
      %807 = vmatpush1.msra.mxu0 0.0
      %808 = vmatprep.subr.mxu0 0.0
      %809 = vmatpush1.msra.mxu0 0.0
      %810 = vmatprep.subr.mxu0 0.0
      %811 = vmatpush1.msra.mxu0 0.0
      %812 = vmatprep.subr.mxu0 0.0
      %813 = vmatpush1.msra.mxu0 0.0
      %814 = vmatprep.subr.mxu0 0.0
      %815 = vmatpush1.msra.mxu0 0.0
      %816 = vmatprep.subr.mxu0 0.0
      %817 = vmatpush1.msra.mxu0 0.0
      %818 = vmatprep.subr.mxu0 0.0
      %819 = vmatpush1.msra.mxu0 0.0
      %820 = vmatprep.subr.mxu0 0.0
      %821 = vmatpush1.msra.mxu0 0.0
      %822 = vmatprep.subr.mxu0 0.0
      %823 = vmatpush1.msra.mxu0 0.0
      %824 = vmatprep.subr.mxu0 0.0
      %825 = vmatpush1.msra.mxu0 0.0
      %826 = vmatprep.mubr.f32.mxu0 0.0
      %827 = vmatmul.mubr.f32.gmra.mrb[0].mxu0 %v318
      %v828 = vpop.f32.mrb[0].mxu0
      %v829 = vadd.f32 %v724, %v828
      %v830 = vpop.f32.mrb[0].mxu0
      %831 = vmatprep.mubr.f32.mxu0 0.0
      %832 = vmatmul.mubr.f32.gmra.mrb[0].mxu0 %v319
      %v833 = vpop.f32.mrb[0].mxu0
      %v834 = vadd.f32 %v729, %v833
      %v835 = vpop.f32.mrb[0].mxu0
      %836 = vmatprep.mubr.f32.mxu0 0.0
      %837 = vmatmul.mubr.f32.gmra.mrb[0].mxu0 %v320
      %v838 = vpop.f32.mrb[0].mxu0
      %v839 = vadd.f32 %v734, %v838
      %v840 = vpop.f32.mrb[0].mxu0
      %841 = vmatprep.mubr.f32.mxu0 0.0
      %842 = vmatmul.mubr.f32.gmra.mrb[0].mxu0 %v321
      %v843 = vpop.f32.mrb[0].mxu0
      %v844 = vadd.f32 %v739, %v843
      %v845 = vpop.f32.mrb[0].mxu0
      %846 = vmatprep.mubr.f32.mxu0 0.0
      %847 = vmatmul.mubr.f32.gmra.mrb[0].mxu0 %v322
      %v848 = vpop.f32.mrb[0].mxu0
      %v849 = vadd.f32 %v744, %v848
      %v850 = vpop.f32.mrb[0].mxu0
      %851 = vmatprep.mubr.f32.mxu0 0.0
      %852 = vmatmul.mubr.f32.gmra.mrb[0].mxu0 %v323
      %v853 = vpop.f32.mrb[0].mxu0
      %v854 = vadd.f32 %v749, %v853
      %v855 = vpop.f32.mrb[0].mxu0
      %856 = vmatprep.mubr.f32.mxu0 0.0
      %857 = vmatmul.mubr.f32.gmra.mrb[0].mxu0 %v324
      %v858 = vpop.f32.mrb[0].mxu0
      %v859 = vadd.f32 %v754, %v858
      %v860 = vpop.f32.mrb[0].mxu0
      %861 = vmatprep.mubr.f32.mxu0 0.0
      %862 = vmatmul.mubr.f32.gmra.mrb[0].mxu0 %v325
      %v863 = vpop.f32.mrb[0].mxu0
      %v864 = vadd.f32 %v759, %v863
      %v865 = vpop.f32.mrb[0].mxu0
      %866 = vdwg.mxu0
      %s867 = scalar_lea.vmem [#allocation2], 32
      %v868 = vld [vmem:[%s867] sm:$0xff]
      %v869 = vld [vmem:[%s867 + $0x10] sm:$0xff]
      %v870 = vld [vmem:[%s867 + $0x20] sm:$0xff]
      %v871 = vld [vmem:[%s867 + $0x30] sm:$0xff]
      %v872 = vld [vmem:[%s867 + $0x40] sm:$0xff]
      %v873 = vld [vmem:[%s867 + $0x50] sm:$0xff]
      %v874 = vld [vmem:[%s867 + $0x60] sm:$0xff]
      %v875 = vld [vmem:[%s867 + $0x70] sm:$0xff]
      %v876 = vld [vmem:[%s867 + $0x1] sm:$0xff]
      %v877 = vld [vmem:[%s867 + $0x11] sm:$0xff]
      %v878 = vld [vmem:[%s867 + $0x21] sm:$0xff]
      %v879 = vld [vmem:[%s867 + $0x31] sm:$0xff]
      %v880 = vld [vmem:[%s867 + $0x41] sm:$0xff]
      %v881 = vld [vmem:[%s867 + $0x51] sm:$0xff]
      %v882 = vld [vmem:[%s867 + $0x61] sm:$0xff]
      %v883 = vld [vmem:[%s867 + $0x71] sm:$0xff]
      %v884 = vld [vmem:[%s867 + $0x2] sm:$0xff]
      %v885 = vld [vmem:[%s867 + $0x12] sm:$0xff]
      %v886 = vld [vmem:[%s867 + $0x22] sm:$0xff]
      %v887 = vld [vmem:[%s867 + $0x32] sm:$0xff]
      %v888 = vld [vmem:[%s867 + $0x42] sm:$0xff]
      %v889 = vld [vmem:[%s867 + $0x52] sm:$0xff]
      %v890 = vld [vmem:[%s867 + $0x62] sm:$0xff]
      %v891 = vld [vmem:[%s867 + $0x72] sm:$0xff]
      %s892 = scalar_lea.vmem %s1, 768
      %v893 = vld [vmem:[%s892] sm:$0xff]
      %v894 = vld [vmem:[%s892 + $0x8] sm:$0xff]
      %v895 = vld [vmem:[%s892 + $0x10] sm:$0xff]
      %v896 = vld [vmem:[%s892 + $0x18] sm:$0xff]
      %v897 = vld [vmem:[%s892 + $0x20] sm:$0xff]
      %v898 = vld [vmem:[%s892 + $0x28] sm:$0xff]
      %v899 = vld [vmem:[%s892 + $0x30] sm:$0xff]
      %v900 = vld [vmem:[%s892 + $0x38] sm:$0xff]
      %v901 = vld [vmem:[%s892 + $0x40] sm:$0xff]
      %v902 = vld [vmem:[%s892 + $0x48] sm:$0xff]
      %v903 = vld [vmem:[%s892 + $0x50] sm:$0xff]
      %v904 = vld [vmem:[%s892 + $0x58] sm:$0xff]
      %v905 = vld [vmem:[%s892 + $0x60] sm:$0xff]
      %v906 = vld [vmem:[%s892 + $0x68] sm:$0xff]
      %v907 = vld [vmem:[%s892 + $0x70] sm:$0xff]
      %v908 = vld [vmem:[%s892 + $0x78] sm:$0xff]
      %v909 = vld [vmem:[%s892 + $0x80] sm:$0xff]
      %v910 = vld [vmem:[%s892 + $0x88] sm:$0xff]
      %v911 = vld [vmem:[%s892 + $0x90] sm:$0xff]
      %v912 = vld [vmem:[%s892 + $0x98] sm:$0xff]
      %v913 = vld [vmem:[%s892 + $0xa0] sm:$0xff]
      %v914 = vld [vmem:[%s892 + $0xa8] sm:$0xff]
      %v915 = vld [vmem:[%s892 + $0xb0] sm:$0xff]
      %v916 = vld [vmem:[%s892 + $0xb8] sm:$0xff]
      %v917 = vld [vmem:[%s892 + $0xc0] sm:$0xff]
      %v918 = vld [vmem:[%s892 + $0xc8] sm:$0xff]
      %v919 = vld [vmem:[%s892 + $0xd0] sm:$0xff]
      %v920 = vld [vmem:[%s892 + $0xd8] sm:$0xff]
      %v921 = vld [vmem:[%s892 + $0xe0] sm:$0xff]
      %v922 = vld [vmem:[%s892 + $0xe8] sm:$0xff]
      %v923 = vld [vmem:[%s892 + $0xf0] sm:$0xff]
      %v924 = vld [vmem:[%s892 + $0xf8] sm:$0xff]
      %v925 = vld [vmem:[%s892 + $0x100] sm:$0xff]
      %v926 = vld [vmem:[%s892 + $0x108] sm:$0xff]
      %v927 = vld [vmem:[%s892 + $0x110] sm:$0xff]
      %v928 = vld [vmem:[%s892 + $0x118] sm:$0xff]
      %v929 = vld [vmem:[%s892 + $0x120] sm:$0xff]
      %v930 = vld [vmem:[%s892 + $0x128] sm:$0xff]
      %v931 = vld [vmem:[%s892 + $0x130] sm:$0xff]
      %v932 = vld [vmem:[%s892 + $0x138] sm:$0xff]
      %v933 = vld [vmem:[%s892 + $0x140] sm:$0xff]
      %v934 = vld [vmem:[%s892 + $0x148] sm:$0xff]
      %v935 = vld [vmem:[%s892 + $0x150] sm:$0xff]
      %v936 = vld [vmem:[%s892 + $0x158] sm:$0xff]
      %v937 = vld [vmem:[%s892 + $0x160] sm:$0xff]
      %v938 = vld [vmem:[%s892 + $0x168] sm:$0xff]
      %v939 = vld [vmem:[%s892 + $0x170] sm:$0xff]
      %v940 = vld [vmem:[%s892 + $0x178] sm:$0xff]
      %941 = vmatprep.subr.mxu0 0.0
      %942 = vmatpush1.msra.mxu0 %v893
      %943 = vmatprep.subr.mxu0 0.0
      %944 = vmatpush1.msra.mxu0 %v894
      %945 = vmatprep.subr.mxu0 0.0
      %946 = vmatpush1.msra.mxu0 %v895
      %947 = vmatprep.subr.mxu0 0.0
      %948 = vmatpush1.msra.mxu0 %v896
      %949 = vmatprep.subr.mxu0 0.0
      %950 = vmatpush1.msra.mxu0 %v897
      %951 = vmatprep.subr.mxu0 0.0
      %952 = vmatpush1.msra.mxu0 %v898
      %953 = vmatprep.subr.mxu0 0.0
      %954 = vmatpush1.msra.mxu0 %v899
      %955 = vmatprep.subr.mxu0 0.0
      %956 = vmatpush1.msra.mxu0 %v900
      %957 = vmatprep.subr.mxu0 0.0
      %958 = vmatpush1.msra.mxu0 %v901
      %959 = vmatprep.subr.mxu0 0.0
      %960 = vmatpush1.msra.mxu0 %v902
      %961 = vmatprep.subr.mxu0 0.0
      %962 = vmatpush1.msra.mxu0 %v903
      %963 = vmatprep.subr.mxu0 0.0
      %964 = vmatpush1.msra.mxu0 %v904
      %965 = vmatprep.subr.mxu0 0.0
      %966 = vmatpush1.msra.mxu0 %v905
      %967 = vmatprep.subr.mxu0 0.0
      %968 = vmatpush1.msra.mxu0 %v906
      %969 = vmatprep.subr.mxu0 0.0
      %970 = vmatpush1.msra.mxu0 %v907
      %971 = vmatprep.subr.mxu0 0.0
      %972 = vmatpush1.msra.mxu0 %v908
      %973 = vmatprep.subr.mxu0 0.0
      %974 = vmatpush1.msra.mxu0 %v909
      %975 = vmatprep.subr.mxu0 0.0
      %976 = vmatpush1.msra.mxu0 %v910
      %977 = vmatprep.subr.mxu0 0.0
      %978 = vmatpush1.msra.mxu0 %v911
      %979 = vmatprep.subr.mxu0 0.0
      %980 = vmatpush1.msra.mxu0 %v912
      %981 = vmatprep.subr.mxu0 0.0
      %982 = vmatpush1.msra.mxu0 %v913
      %983 = vmatprep.subr.mxu0 0.0
      %984 = vmatpush1.msra.mxu0 %v914
      %985 = vmatprep.subr.mxu0 0.0
      %986 = vmatpush1.msra.mxu0 %v915
      %987 = vmatprep.subr.mxu0 0.0
      %988 = vmatpush1.msra.mxu0 %v916
      %989 = vmatprep.subr.mxu0 0.0
      %990 = vmatpush1.msra.mxu0 %v917
      %991 = vmatprep.subr.mxu0 0.0
      %992 = vmatpush1.msra.mxu0 %v918
      %993 = vmatprep.subr.mxu0 0.0
      %994 = vmatpush1.msra.mxu0 %v919
      %995 = vmatprep.subr.mxu0 0.0
      %996 = vmatpush1.msra.mxu0 %v920
      %997 = vmatprep.subr.mxu0 0.0
      %998 = vmatpush1.msra.mxu0 %v921
      %999 = vmatprep.subr.mxu0 0.0
      %1000 = vmatpush1.msra.mxu0 %v922
      %1001 = vmatprep.subr.mxu0 0.0
      %1002 = vmatpush1.msra.mxu0 %v923
      %1003 = vmatprep.subr.mxu0 0.0
      %1004 = vmatpush1.msra.mxu0 %v924
      %1005 = vmatprep.mubr.f32.mxu0 %v876
      %1006 = vmatmul.mubr.f32.gmra.mrb[0].mxu0 %v868
      %v1007 = vpop.f32.mrb[0].mxu0
      %v1008 = vadd.f32 0.0, %v1007
      %v1009 = vpop.f32.mrb[0].mxu0
      %1010 = vmatprep.mubr.f32.mxu0 %v877
      %1011 = vmatmul.mubr.f32.gmra.mrb[0].mxu0 %v869
      %v1012 = vpop.f32.mrb[0].mxu0
      %v1013 = vadd.f32 0.0, %v1012
      %v1014 = vpop.f32.mrb[0].mxu0
      %1015 = vmatprep.mubr.f32.mxu0 %v878
      %1016 = vmatmul.mubr.f32.gmra.mrb[0].mxu0 %v870
      %v1017 = vpop.f32.mrb[0].mxu0
      %v1018 = vadd.f32 0.0, %v1017
      %v1019 = vpop.f32.mrb[0].mxu0
      %1020 = vmatprep.mubr.f32.mxu0 %v879
      %1021 = vmatmul.mubr.f32.gmra.mrb[0].mxu0 %v871
      %v1022 = vpop.f32.mrb[0].mxu0
      %v1023 = vadd.f32 0.0, %v1022
      %v1024 = vpop.f32.mrb[0].mxu0
      %1025 = vmatprep.mubr.f32.mxu0 %v880
      %1026 = vmatmul.mubr.f32.gmra.mrb[0].mxu0 %v872
      %v1027 = vpop.f32.mrb[0].mxu0
      %v1028 = vadd.f32 0.0, %v1027
      %v1029 = vpop.f32.mrb[0].mxu0
      %1030 = vmatprep.mubr.f32.mxu0 %v881
      %1031 = vmatmul.mubr.f32.gmra.mrb[0].mxu0 %v873
      %v1032 = vpop.f32.mrb[0].mxu0
      %v1033 = vadd.f32 0.0, %v1032
      %v1034 = vpop.f32.mrb[0].mxu0
      %1035 = vmatprep.mubr.f32.mxu0 %v882
      %1036 = vmatmul.mubr.f32.gmra.mrb[0].mxu0 %v874
      %v1037 = vpop.f32.mrb[0].mxu0
      %v1038 = vadd.f32 0.0, %v1037
      %v1039 = vpop.f32.mrb[0].mxu0
      %1040 = vmatprep.mubr.f32.mxu0 %v883
      %1041 = vmatmul.mubr.f32.gmra.mrb[0].mxu0 %v875
      %v1042 = vpop.f32.mrb[0].mxu0
      %v1043 = vadd.f32 0.0, %v1042
      %v1044 = vpop.f32.mrb[0].mxu0
      %1045 = vdwg.mxu0
      %1046 = vmatprep.subr.mxu0 0.0
      %1047 = vmatpush1.msra.mxu0 %v925
      %1048 = vmatprep.subr.mxu0 0.0
      %1049 = vmatpush1.msra.mxu0 %v926
      %1050 = vmatprep.subr.mxu0 0.0
      %1051 = vmatpush1.msra.mxu0 %v927
      %1052 = vmatprep.subr.mxu0 0.0
      %1053 = vmatpush1.msra.mxu0 %v928
      %1054 = vmatprep.subr.mxu0 0.0
      %1055 = vmatpush1.msra.mxu0 %v929
      %1056 = vmatprep.subr.mxu0 0.0
      %1057 = vmatpush1.msra.mxu0 %v930
      %1058 = vmatprep.subr.mxu0 0.0
      %1059 = vmatpush1.msra.mxu0 %v931
      %1060 = vmatprep.subr.mxu0 0.0
      %1061 = vmatpush1.msra.mxu0 %v932
      %1062 = vmatprep.subr.mxu0 0.0
      %1063 = vmatpush1.msra.mxu0 %v933
      %1064 = vmatprep.subr.mxu0 0.0
      %1065 = vmatpush1.msra.mxu0 %v934
      %1066 = vmatprep.subr.mxu0 0.0
      %1067 = vmatpush1.msra.mxu0 %v935
      %1068 = vmatprep.subr.mxu0 0.0
      %1069 = vmatpush1.msra.mxu0 %v936
      %1070 = vmatprep.subr.mxu0 0.0
      %1071 = vmatpush1.msra.mxu0 %v937
      %1072 = vmatprep.subr.mxu0 0.0
      %1073 = vmatpush1.msra.mxu0 %v938
      %1074 = vmatprep.subr.mxu0 0.0
      %1075 = vmatpush1.msra.mxu0 %v939
      %1076 = vmatprep.subr.mxu0 0.0
      %1077 = vmatpush1.msra.mxu0 %v940
      %1078 = vmatprep.subr.mxu0 0.0
      %1079 = vmatpush1.msra.mxu0 0.0
      %1080 = vmatprep.subr.mxu0 0.0
      %1081 = vmatpush1.msra.mxu0 0.0
      %1082 = vmatprep.subr.mxu0 0.0
      %1083 = vmatpush1.msra.mxu0 0.0
      %1084 = vmatprep.subr.mxu0 0.0
      %1085 = vmatpush1.msra.mxu0 0.0
      %1086 = vmatprep.subr.mxu0 0.0
      %1087 = vmatpush1.msra.mxu0 0.0
      %1088 = vmatprep.subr.mxu0 0.0
      %1089 = vmatpush1.msra.mxu0 0.0
      %1090 = vmatprep.subr.mxu0 0.0
      %1091 = vmatpush1.msra.mxu0 0.0
      %1092 = vmatprep.subr.mxu0 0.0
      %1093 = vmatpush1.msra.mxu0 0.0
      %1094 = vmatprep.subr.mxu0 0.0
      %1095 = vmatpush1.msra.mxu0 0.0
      %1096 = vmatprep.subr.mxu0 0.0
      %1097 = vmatpush1.msra.mxu0 0.0
      %1098 = vmatprep.subr.mxu0 0.0
      %1099 = vmatpush1.msra.mxu0 0.0
      %1100 = vmatprep.subr.mxu0 0.0
      %1101 = vmatpush1.msra.mxu0 0.0
      %1102 = vmatprep.subr.mxu0 0.0
      %1103 = vmatpush1.msra.mxu0 0.0
      %1104 = vmatprep.subr.mxu0 0.0
      %1105 = vmatpush1.msra.mxu0 0.0
      %1106 = vmatprep.subr.mxu0 0.0
      %1107 = vmatpush1.msra.mxu0 0.0
      %1108 = vmatprep.subr.mxu0 0.0
      %1109 = vmatpush1.msra.mxu0 0.0
      %1110 = vmatprep.mubr.f32.mxu0 0.0
      %1111 = vmatmul.mubr.f32.gmra.mrb[0].mxu0 %v884
      %v1112 = vpop.f32.mrb[0].mxu0
      %v1113 = vadd.f32 %v1008, %v1112
      %v1114 = vpop.f32.mrb[0].mxu0
      %1115 = vmatprep.mubr.f32.mxu0 0.0
      %1116 = vmatmul.mubr.f32.gmra.mrb[0].mxu0 %v885
      %v1117 = vpop.f32.mrb[0].mxu0
      %v1118 = vadd.f32 %v1013, %v1117
      %v1119 = vpop.f32.mrb[0].mxu0
      %1120 = vmatprep.mubr.f32.mxu0 0.0
      %1121 = vmatmul.mubr.f32.gmra.mrb[0].mxu0 %v886
      %v1122 = vpop.f32.mrb[0].mxu0
      %v1123 = vadd.f32 %v1018, %v1122
      %v1124 = vpop.f32.mrb[0].mxu0
      %1125 = vmatprep.mubr.f32.mxu0 0.0
      %1126 = vmatmul.mubr.f32.gmra.mrb[0].mxu0 %v887
      %v1127 = vpop.f32.mrb[0].mxu0
      %v1128 = vadd.f32 %v1023, %v1127
      %v1129 = vpop.f32.mrb[0].mxu0
      %1130 = vmatprep.mubr.f32.mxu0 0.0
      %1131 = vmatmul.mubr.f32.gmra.mrb[0].mxu0 %v888
      %v1132 = vpop.f32.mrb[0].mxu0
      %v1133 = vadd.f32 %v1028, %v1132
      %v1134 = vpop.f32.mrb[0].mxu0
      %1135 = vmatprep.mubr.f32.mxu0 0.0
      %1136 = vmatmul.mubr.f32.gmra.mrb[0].mxu0 %v889
      %v1137 = vpop.f32.mrb[0].mxu0
      %v1138 = vadd.f32 %v1033, %v1137
      %v1139 = vpop.f32.mrb[0].mxu0
      %1140 = vmatprep.mubr.f32.mxu0 0.0
      %1141 = vmatmul.mubr.f32.gmra.mrb[0].mxu0 %v890
      %v1142 = vpop.f32.mrb[0].mxu0
      %v1143 = vadd.f32 %v1038, %v1142
      %v1144 = vpop.f32.mrb[0].mxu0
      %1145 = vmatprep.mubr.f32.mxu0 0.0
      %1146 = vmatmul.mubr.f32.gmra.mrb[0].mxu0 %v891
      %v1147 = vpop.f32.mrb[0].mxu0
      %v1148 = vadd.f32 %v1043, %v1147
      %v1149 = vpop.f32.mrb[0].mxu0
      %1150 = vdwg.mxu0
      %v1151 = vadd.f32 %v829, %v1113
      %v1152 = vadd.f32 %v834, %v1118
      %v1153 = vadd.f32 %v839, %v1123
      %v1154 = vadd.f32 %v844, %v1128
      %v1155 = vadd.f32 %v849, %v1133
      %v1156 = vadd.f32 %v854, %v1138
      %v1157 = vadd.f32 %v859, %v1143
      %v1158 = vadd.f32 %v864, %v1148
      %1159 = vst [vmem:[%s222] sm:$0xff] %v1151
      %1160 = vst [vmem:[%s222 + $0x8] sm:$0xff] %v1152
      %1161 = vst [vmem:[%s222 + $0x10] sm:$0xff] %v1153
      %1162 = vst [vmem:[%s222 + $0x18] sm:$0xff] %v1154
      %1163 = vst [vmem:[%s222 + $0x20] sm:$0xff] %v1155
      %1164 = vst [vmem:[%s222 + $0x28] sm:$0xff] %v1156
      %1165 = vst [vmem:[%s222 + $0x30] sm:$0xff] %v1157
      %1166 = vst [vmem:[%s222 + $0x38] sm:$0xff] %v1158
      %v1167 = vadd.f32 %v1151, %v1152
      %v1168 = vadd.f32 %v1167, %v1153
      %v1169 = vadd.f32 %v1168, %v1154
      %v1170 = vadd.f32 %v1169, %v1155
      %v1171 = vadd.f32 %v1170, %v1156
      %v1172 = vadd.f32 %v1171, %v1157
      %v1173 = vadd.f32 %v1172, %v1158
      %v1174 = vrot.slane %v1173, 4
      %v1175 = vadd.f32 %v1173, %v1174
      %v1176 = vrot.slane %v1175, 2
      %v1177 = vadd.f32 %v1175, %v1176
      %v1178 = vrot.slane %v1177, 1
      %v1179 = vadd.f32 %v1177, %v1178
      %v1180 = vmul.f32 %v1151, %v1151
      %v1181 = vmul.f32 %v1152, %v1152
      %v1182 = vmul.f32 %v1153, %v1153
      %v1183 = vmul.f32 %v1154, %v1154
      %v1184 = vmul.f32 %v1155, %v1155
      %v1185 = vmul.f32 %v1156, %v1156
      %v1186 = vmul.f32 %v1157, %v1157
      %v1187 = vmul.f32 %v1158, %v1158
      %v1188 = vadd.f32 %v1180, %v1181
      %v1189 = vadd.f32 %v1188, %v1182
      %v1190 = vadd.f32 %v1189, %v1183
      %v1191 = vadd.f32 %v1190, %v1184
      %v1192 = vadd.f32 %v1191, %v1185
      %v1193 = vadd.f32 %v1192, %v1186
      %v1194 = vadd.f32 %v1193, %v1187
      %v1195 = vrot.slane %v1194, 4
      %v1196 = vadd.f32 %v1194, %v1195
      %v1197 = vrot.slane %v1196, 2
      %v1198 = vadd.f32 %v1196, %v1197
      %v1199 = vrot.slane %v1198, 1
      %v1200 = vadd.f32 %v1198, %v1199
      %vm1201 = vcmask 1040384
      %v1202 = vsel %vm1201, %v1179, %v1200
      %vm1203 = vcmask 1041408
      %v1204 = vsel %vm1203, %v1202, 0.0
      // Predicated region
      $region41: #{basic_block_forward.4} parent=35 // pred_check
        %p1205 = pneg %p223
      $region42: #{basic_block_forward.4} parent=35 // pred_check_branch
        %1207 = sbr.rel (%p1205) target = $region44
      $region43: #{basic_block_forward.4} parent=35 // pred_region
        %1208 = vst [vmem:[%s5] sm:$0xff] %v1204
      $region44: #{basic_block_forward.4} parent=35 // pred_fallthru
        _
      %p1209 = scmp.ne.s32.totalorder %s17, 0
      // Predicated region
      $region45: #{basic_block_forward.4} parent=35 // pred_check
        %p1210 = pneg %p1209
      $region46: #{basic_block_forward.4} parent=35 // pred_check_branch
        %1212 = sbr.rel (%p1210) target = $region48
      $region47: #{basic_block_forward.4} parent=35 // pred_region
        %v1213 = vld [vmem:[%s5] sm:$0xff]
        %v1214 = vadd.f32 %v1213, %v1204
        %1215 = vst [vmem:[%s5] sm:$0xff] %v1214
      $region48: #{basic_block_forward.4} parent=35 // pred_fallthru
        _
      %p1216 = scmp.lt.s32.totalorder %s17, 1
      %s1217 = scalar_select %p1216, %s17, 1
      %s1218 = smul.addr %s1217, 8
      %s1219 = smul.addr %s1218, 8
      %s1220 = scalar_lea.vmem %s4, %s1219
      // Predicated region
      $region49: #{basic_block_forward.4} parent=35 // pred_check
        %p1221 = pneg %p124
      $region50: #{basic_block_forward.4} parent=35 // pred_check_branch
        %1223 = sbr.rel (%p1221) target = $region52
      $region51: #{basic_block_forward.4} parent=35 // pred_region
        _
      $region52: #{basic_block_forward.4} parent=35 // pred_fallthru
        _
      // Predicated region
      $region53: #{basic_block_forward.4} parent=35 // pred_check
        %p1224 = pneg %p145
      $region54: #{basic_block_forward.4} parent=35 // pred_check_branch
        %1226 = sbr.rel (%p1224) target = $region56
      $region55: #{basic_block_forward.4} parent=35 // pred_region
        _
      $region56: #{basic_block_forward.4} parent=35 // pred_fallthru
        _
      // Predicated region
      $region57: #{basic_block_forward.4} parent=35 // pred_check
        %p1227 = pneg %p145
      $region58: #{basic_block_forward.4} parent=35 // pred_check_branch
        %1229 = sbr.rel (%p1227) target = $region60
      $region59: #{basic_block_forward.4} parent=35 // pred_region
        _
      $region60: #{basic_block_forward.4} parent=35 // pred_fallthru
        _
    $region36: #{basic_block_forward.4} parent=5 // pred_fallthru
      _
    %p1230 = scmp.le.s32.totalorder 2, %s12
    // Predicated region
    $region61: #{basic_block_forward.4} parent=5 // pred_check
      %p1231 = pneg %p1230
    $region62: #{basic_block_forward.4} parent=5 // pred_check_branch
      %1233 = sbr.rel (%p1231) target = $region64
    $region63: #{basic_block_forward.4} parent=5 // pred_region
      %s1234 = ssub.s32 %s12, 2
      // Predicated region
      $region65: #{basic_block_forward.4} parent=63 // pred_check
        %p1235 = pneg %p130
      $region66: #{basic_block_forward.4} parent=63 // pred_check_branch
        %1237 = sbr.rel (%p1235) target = $region68
      $region67: #{basic_block_forward.4} parent=63 // pred_region
        %p1238 = scmp.lt.s32.totalorder %s18, 1
        %s1239 = scalar_select %p1238, %s18, 1
        %s1240 = smul.addr %s1239, 8
        %s1241 = smul.addr %s1240, 8
        %s1242 = scalar_lea.vmem %s4, %s1241
      $region68: #{basic_block_forward.4} parent=63 // pred_fallthru
        _
    $region64: #{basic_block_forward.4} parent=5 // pred_fallthru
      _
  $region6: #{basic_block_forward.4} parent=0 // loop_footer
    %s16 = sadd.s32 1, %s12
  $region7: #{basic_block_forward.4} parent=0 // loop_footer_branch
    %11 = sbr.rel target = $region3
  $region8: #{basic_block_forward.4} parent=0 // loop_exit
    _

// kernel: basic_block_forward.3
$region0: #{basic_block_forward.3}
  #allocation0 [shape = 'u32[]', space=smem, size = 0x4, offset = 0x4, fixed_abs, tag = 'smem constant byte address 0x4 - core index']
  #allocation1 [shape = 'u32[144,128]{1,0:T(1,128)}', space=vmem, size = 0x12000, scoped, tag = 'internal scratch']
  %s0 = inlined_call_operand.vmem [shape: f32[2,9,9,512], index: 0, kind: input, shape index: {}]
  %s1 = inlined_call_operand.vmem [shape: f32[3,384,128], index: 1, kind: input, shape index: {}]
  %s2 = inlined_call_operand.vmem [shape: f32[128,128], index: 2, kind: input, shape index: {}]
  %s3 = inlined_call_operand.vmem [shape: f32[2,8,8,128], index: 3, kind: output, shape index: {0}]
  %s4 = inlined_call_operand.vmem [shape: f32[2,8,8,128], index: 4, kind: output, shape index: {1}]
  %s5 = inlined_call_operand.vmem [shape: f32[8,128], index: 5, kind: output, shape index: {2}]
  %s6 = inlined_call_operand.vmem [shape: f32[8,128], index: 6, kind: output, shape index: {3}]
  %7 = xla_tuple %s3, %s4, %s5, %s6
  %s8 = sld [smem:[#allocation0]]
  $region85: #{basic_block_forward.3} parent=0
    _
  %s10 = ssub.s32 1, %s8
  %s11 = scalar_select 0, %s10, %s8
  loop: start=0, step=1, limit=4
  $region2: #{basic_block_forward.3} parent=0 // loop_pre_header
    _
  $region3: #{basic_block_forward.3} parent=0 // loop_header
    %s13 = sphi 0, %s17
    %p14 = scmp.ge.s32.totalorder %s13, 4
    %s23 = sphi 0, %s25
    %s26 = sphi 0, %s23
    %s27 = sphi 0, %s26
    %s43 = sphi 0, %s27
    %s47 = sphi 0, %s47
    %s49 = sphi 0, %s47
    %s50 = sphi 0, %s49
    %s64 = sphi 0, %s50
    %s68 = sphi 0, %s68
    %s70 = sphi 0, %s68
    %s71 = sphi 0, %s70
    %s85 = sphi 0, %s71
    %s91 = sphi 0, %s93
    %s94 = sphi 0, %s91
    %s95 = sphi 0, %s94
    %s111 = sphi 0, %s95
    %s117 = sphi 0, %s119
    %s120 = sphi 0, %s117
    %s121 = sphi 0, %s120
    %s137 = sphi 0, %s121
    %s141 = sphi 0, %s141
    %s143 = sphi 0, %s141
    %s144 = sphi 0, %s143
    %s158 = sphi 0, %s144
    %s162 = sphi 0, %s162
    %s164 = sphi 0, %s162
    %s165 = sphi 0, %s164
    %s179 = sphi 0, %s165
  $region4: #{basic_block_forward.3} parent=0 // loop_header_branch
    %16 = sbr.rel (%p14) target = $region8
  $region5: #{basic_block_forward.3} parent=0 // loop_body
    %s18 = ssub.s32 %s13, 1
    %s19 = ssub.s32 %s13, 2
    %s20 = sadd.s32 %s13, 1
    %s21 = ssub.s32 %s13, %s20
    %p22 = scmp.eq.s32.totalorder %s21, 0
    %s24 = sadd.s32 %s23, 1
    %s25 = scalar_select %p22, %s23, %s24
    %p28 = pneg %p22
    %p29 = scmp.eq.s32.totalorder %s13, 1
    %p30 = por %p28, %p29
    %p31 = scmp.ne.s32.totalorder %s23, %s26
    %p32 = scmp.eq.s32.totalorder %s13, 0
    %p33 = por %p31, %p32
    %p34 = scmp.ne.s32.totalorder %s23, %s26
    %p35 = scmp.eq.s32.totalorder %s18, 1
    %p36 = por %p34, %p35
    %p37 = scmp.ne.s32.totalorder %s26, %s27
    %p38 = scmp.eq.s32.totalorder %s18, 0
    %p39 = por %p37, %p38
    %p40 = scmp.ne.s32.totalorder %s26, %s27
    %p41 = scmp.eq.s32.totalorder %s19, 1
    %p42 = por %p40, %p41
    %p44 = scmp.ne.s32.totalorder %s27, %s43
    %p45 = scmp.eq.s32.totalorder %s19, 0
    %p46 = por %p44, %p45
    %s48 = sadd.s32 %s47, 1
    %p51 = scmp.eq.s32.totalorder %s13, 1
    %p52 = scmp.ne.s32.totalorder %s47, %s49
    %p53 = scmp.eq.s32.totalorder %s13, 0
    %p54 = por %p52, %p53
    %p55 = scmp.ne.s32.totalorder %s47, %s49
    %p56 = scmp.eq.s32.totalorder %s18, 1
    %p57 = por %p55, %p56
    %p58 = scmp.ne.s32.totalorder %s49, %s50
    %p59 = scmp.eq.s32.totalorder %s18, 0
    %p60 = por %p58, %p59
    %p61 = scmp.ne.s32.totalorder %s49, %s50
    %p62 = scmp.eq.s32.totalorder %s19, 1
    %p63 = por %p61, %p62
    %p65 = scmp.ne.s32.totalorder %s50, %s64
    %p66 = scmp.eq.s32.totalorder %s19, 0
    %p67 = por %p65, %p66
    %s69 = sadd.s32 %s68, 1
    %p72 = scmp.eq.s32.totalorder %s13, 1
    %p73 = scmp.ne.s32.totalorder %s68, %s70
    %p74 = scmp.eq.s32.totalorder %s13, 0
    %p75 = por %p73, %p74
    %p76 = scmp.ne.s32.totalorder %s68, %s70
    %p77 = scmp.eq.s32.totalorder %s18, 1
    %p78 = por %p76, %p77
    %p79 = scmp.ne.s32.totalorder %s70, %s71
    %p80 = scmp.eq.s32.totalorder %s18, 0
    %p81 = por %p79, %p80
    %p82 = scmp.ne.s32.totalorder %s70, %s71
    %p83 = scmp.eq.s32.totalorder %s19, 1
    %p84 = por %p82, %p83
    %p86 = scmp.ne.s32.totalorder %s71, %s85
    %p87 = scmp.eq.s32.totalorder %s19, 0
    %p88 = por %p86, %p87
    %s89 = ssub.s32 %s13, %s20
    %p90 = scmp.eq.s32.totalorder %s89, 0
    %s92 = sadd.s32 %s91, 1
    %s93 = scalar_select %p90, %s91, %s92
    %p96 = pneg %p90
    %p97 = scmp.eq.s32.totalorder %s13, 1
    %p98 = por %p96, %p97
    %p99 = scmp.ne.s32.totalorder %s91, %s94
    %p100 = scmp.eq.s32.totalorder %s13, 0
    %p101 = por %p99, %p100
    %p102 = scmp.ne.s32.totalorder %s91, %s94
    %p103 = scmp.eq.s32.totalorder %s18, 1
    %p104 = por %p102, %p103
    %p105 = scmp.ne.s32.totalorder %s94, %s95
    %p106 = scmp.eq.s32.totalorder %s18, 0
    %p107 = por %p105, %p106
    %p108 = scmp.ne.s32.totalorder %s94, %s95
    %p109 = scmp.eq.s32.totalorder %s19, 1
    %p110 = por %p108, %p109
    %p112 = scmp.ne.s32.totalorder %s95, %s111
    %p113 = scmp.eq.s32.totalorder %s19, 0
    %p114 = por %p112, %p113
    %s115 = ssub.s32 %s13, %s20
    %p116 = scmp.eq.s32.totalorder %s115, 0
    %s118 = sadd.s32 %s117, 1
    %s119 = scalar_select %p116, %s117, %s118
    %p122 = pneg %p116
    %p123 = scmp.eq.s32.totalorder %s13, 1
    %p124 = por %p122, %p123
    %p125 = scmp.ne.s32.totalorder %s117, %s120
    %p126 = scmp.eq.s32.totalorder %s13, 0
    %p127 = por %p125, %p126
    %p128 = scmp.ne.s32.totalorder %s117, %s120
    %p129 = scmp.eq.s32.totalorder %s18, 1
    %p130 = por %p128, %p129
    %p131 = scmp.ne.s32.totalorder %s120, %s121
    %p132 = scmp.eq.s32.totalorder %s18, 0
    %p133 = por %p131, %p132
    %p134 = scmp.ne.s32.totalorder %s120, %s121
    %p135 = scmp.eq.s32.totalorder %s19, 1
    %p136 = por %p134, %p135
    %p138 = scmp.ne.s32.totalorder %s121, %s137
    %p139 = scmp.eq.s32.totalorder %s19, 0
    %p140 = por %p138, %p139
    %s142 = sadd.s32 %s141, 1
    %p145 = scmp.eq.s32.totalorder %s13, 1
    %p146 = scmp.ne.s32.totalorder %s141, %s143
    %p147 = scmp.eq.s32.totalorder %s13, 0
    %p148 = por %p146, %p147
    %p149 = scmp.ne.s32.totalorder %s141, %s143
    %p150 = scmp.eq.s32.totalorder %s18, 1
    %p151 = por %p149, %p150
    %p152 = scmp.ne.s32.totalorder %s143, %s144
    %p153 = scmp.eq.s32.totalorder %s18, 0
    %p154 = por %p152, %p153
    %p155 = scmp.ne.s32.totalorder %s143, %s144
    %p156 = scmp.eq.s32.totalorder %s19, 1
    %p157 = por %p155, %p156
    %p159 = scmp.ne.s32.totalorder %s144, %s158
    %p160 = scmp.eq.s32.totalorder %s19, 0
    %p161 = por %p159, %p160
    %s163 = sadd.s32 %s162, 1
    %p166 = scmp.eq.s32.totalorder %s13, 1
    %p167 = scmp.ne.s32.totalorder %s162, %s164
    %p168 = scmp.eq.s32.totalorder %s13, 0
    %p169 = por %p167, %p168
    %p170 = scmp.ne.s32.totalorder %s162, %s164
    %p171 = scmp.eq.s32.totalorder %s18, 1
    %p172 = por %p170, %p171
    %p173 = scmp.ne.s32.totalorder %s164, %s165
    %p174 = scmp.eq.s32.totalorder %s18, 0
    %p175 = por %p173, %p174
    %p176 = scmp.ne.s32.totalorder %s164, %s165
    %p177 = scmp.eq.s32.totalorder %s19, 1
    %p178 = por %p176, %p177
    %p180 = scmp.ne.s32.totalorder %s165, %s179
    %p181 = scmp.eq.s32.totalorder %s19, 0
    %p182 = por %p180, %p181
    %p183 = scmp.le.s32.totalorder 1, %s13
    %p184 = scmp.lt.s32.totalorder %s13, 3
    %p185 = pnand %p183, %p184
    %p186 = pneg %p185
    // Predicated region
    $region9: #{basic_block_forward.3} parent=5 // pred_check
      _
    $region10: #{basic_block_forward.3} parent=5 // pred_check_branch
      %188 = sbr.rel (%p185) target = $region12
    $region11: #{basic_block_forward.3} parent=5 // pred_region
      %s189 = ssub.s32 %s13, 1
      // Predicated region
      $region13: #{basic_block_forward.3} parent=11 // pred_check
        %p190 = pneg %p60
      $region14: #{basic_block_forward.3} parent=11 // pred_check_branch
        %192 = sbr.rel (%p190) target = $region16
      $region15: #{basic_block_forward.3} parent=11 // pred_region
        _
      $region16: #{basic_block_forward.3} parent=11 // pred_fallthru
        _
      // Predicated region
      $region17: #{basic_block_forward.3} parent=11 // pred_check
        %p193 = pneg %p81
      $region18: #{basic_block_forward.3} parent=11 // pred_check_branch
        %195 = sbr.rel (%p193) target = $region20
      $region19: #{basic_block_forward.3} parent=11 // pred_region
        _
      $region20: #{basic_block_forward.3} parent=11 // pred_fallthru
        _
    $region12: #{basic_block_forward.3} parent=5 // pred_fallthru
      _
    %p196 = scmp.lt.s32.totalorder %s13, 2
    // Predicated region
    $region21: #{basic_block_forward.3} parent=5 // pred_check
      %p197 = pneg %p196
    $region22: #{basic_block_forward.3} parent=5 // pred_check_branch
      %199 = sbr.rel (%p197) target = $region24
    $region23: #{basic_block_forward.3} parent=5 // pred_region
      // Predicated region
      $region25: #{basic_block_forward.3} parent=23 // pred_check
        %p200 = pneg %p33
      $region26: #{basic_block_forward.3} parent=23 // pred_check_branch
        %202 = sbr.rel (%p200) target = $region28
      $region27: #{basic_block_forward.3} parent=23 // pred_region
        %p203 = scmp.lt.s32.totalorder %s13, 1
        %s204 = scalar_select %p203, %s13, 1
        %s205 = smul.addr %s204, 72
        %s206 = smul.addr %s205, 8
        %s207 = scalar_lea.vmem %s0, %s206
      $region28: #{basic_block_forward.3} parent=23 // pred_fallthru
        _
    $region24: #{basic_block_forward.3} parent=5 // pred_fallthru
      _
    %p208 = scmp.le.s32.totalorder 1, %s13
    %p209 = scmp.lt.s32.totalorder %s13, 3
    %p210 = pnand %p208, %p209
    %p211 = pneg %p210
    // Predicated region
    $region29: #{basic_block_forward.3} parent=5 // pred_check
      _
    $region30: #{basic_block_forward.3} parent=5 // pred_check_branch
      %213 = sbr.rel (%p210) target = $region32
    $region31: #{basic_block_forward.3} parent=5 // pred_region
      %s214 = ssub.s32 %s13, 1
      %p215 = scmp.lt.s32.totalorder %s18, 1
      %s216 = scalar_select %p215, %s18, 1
      %s217 = smul.addr %s216, 72
      %s218 = smul.addr %s217, 8
      %s219 = scalar_lea.vmem %s0, %s218
      %p220 = pneg %p39
      %p221 = pneg %p36
      %p222 = pneg %p60
      %p223 = pneg %p57
      %p224 = pneg %p81
      %p225 = pneg %p78
      %p226 = pneg %p107
      %p227 = pneg %p104
      %p228 = scmp.lt.s32.totalorder %s18, 1
      %s229 = scalar_select %p228, %s18, 1
      %s230 = smul.addr %s229, 8
      %s231 = smul.addr %s230, 8
      %s232 = scalar_lea.vmem %s3, %s231
      %p233 = pneg %p133
      %p234 = pneg %p130
      %p235 = scmp.lt.s32.totalorder %s18, 1
      %s236 = scalar_select %p235, %s18, 1
      %s237 = smul.addr %s236, 8
      %s238 = smul.addr %s237, 8
      %s239 = scalar_lea.vmem %s4, %s238
      %p240 = pneg %p154
      %p241 = pneg %p151
      %p242 = pneg %p175
      %p243 = pneg %p172
      %p244 = scmp.lt.s32.totalorder %s18, 1
      %s245 = scalar_select %p244, %s18, 1
      %s246 = smul.addr %s245, 72
      %s247 = smul.addr %s246, 8
      %s248 = scalar_lea.vmem %s0, %s247
      %p249 = scmp.lt.s32.totalorder %s18, 1
      %s250 = scalar_select %p249, %s18, 1
      %s251 = smul.addr %s250, 8
      %s252 = smul.addr %s251, 8
      %s253 = scalar_lea.vmem %s3, %s252
      %p254 = scmp.lt.s32.totalorder %s18, 1
      %s255 = scalar_select %p254, %s18, 1
      %s256 = smul.addr %s255, 8
      %s257 = smul.addr %s256, 8
      %s258 = scalar_lea.vmem %s4, %s257
      %v259 = vld [vmem:[%s248] sm:$0xff]
      %v260 = vld [vmem:[%s248 + $0x40] sm:$0xff]
      %v261 = vld [vmem:[%s248 + $0x80] sm:$0xff]
      %v262 = vld [vmem:[%s248 + $0xc0] sm:$0xff]
      %v263 = vld [vmem:[%s248 + $0x100] sm:$0xff]
      %v264 = vld [vmem:[%s248 + $0x140] sm:$0xff]
      %v265 = vld [vmem:[%s248 + $0x180] sm:$0xff]
      %v266 = vld [vmem:[%s248 + $0x1c0] sm:$0xff]
      %v267 = vld [vmem:[%s248 + $0x8] sm:$0xff]
      %v268 = vld [vmem:[%s248 + $0x48] sm:$0xff]
      %v269 = vld [vmem:[%s248 + $0x88] sm:$0xff]
      %v270 = vld [vmem:[%s248 + $0xc8] sm:$0xff]
      %v271 = vld [vmem:[%s248 + $0x108] sm:$0xff]
      %v272 = vld [vmem:[%s248 + $0x148] sm:$0xff]
      %v273 = vld [vmem:[%s248 + $0x188] sm:$0xff]
      %v274 = vld [vmem:[%s248 + $0x1c8] sm:$0xff]
      %v275 = vld [vmem:[%s248] sm:$0xfe]
      %v276 = vld [vmem:[%s248 + $0x20] sm:$0x1]
      %v277 = vld [vmem:[%s248 + $0x40] sm:$0xfe]
      %v278 = vld [vmem:[%s248 + $0x60] sm:$0x1]
      %v279 = vld [vmem:[%s248 + $0x80] sm:$0xfe]
      %v280 = vld [vmem:[%s248 + $0xa0] sm:$0x1]
      %v281 = vld [vmem:[%s248 + $0xc0] sm:$0xfe]
      %v282 = vld [vmem:[%s248 + $0xe0] sm:$0x1]
      %v283 = vld [vmem:[%s248 + $0x100] sm:$0xfe]
      %v284 = vld [vmem:[%s248 + $0x120] sm:$0x1]
      %v285 = vld [vmem:[%s248 + $0x140] sm:$0xfe]
      %v286 = vld [vmem:[%s248 + $0x160] sm:$0x1]
      %v287 = vld [vmem:[%s248 + $0x180] sm:$0xfe]
      %v288 = vld [vmem:[%s248 + $0x1a0] sm:$0x1]
      %v289 = vld [vmem:[%s248 + $0x1c0] sm:$0xfe]
      %v290 = vld [vmem:[%s248 + $0x1e0] sm:$0x1]
      %vm307 = vcmask 1046528
      %v308 = vrot.slane %v275, 1
      %v309 = vrot.slane %v276, 1
      %v310 = vsel %vm307, %v308, %v309
      %v311 = vrot.slane %v277, 1
      %v312 = vrot.slane %v278, 1
      %v313 = vsel %vm307, %v311, %v312
      %v314 = vrot.slane %v279, 1
      %v315 = vrot.slane %v280, 1
      %v316 = vsel %vm307, %v314, %v315
      %v317 = vrot.slane %v281, 1
      %v318 = vrot.slane %v282, 1
      %v319 = vsel %vm307, %v317, %v318
      %v320 = vrot.slane %v283, 1
      %v321 = vrot.slane %v284, 1
      %v322 = vsel %vm307, %v320, %v321
      %v323 = vrot.slane %v285, 1
      %v324 = vrot.slane %v286, 1
      %v325 = vsel %vm307, %v323, %v324
      %v326 = vrot.slane %v287, 1
      %v327 = vrot.slane %v288, 1
      %v328 = vsel %vm307, %v326, %v327
      %v329 = vrot.slane %v289, 1
      %v330 = vrot.slane %v290, 1
      %v331 = vsel %vm307, %v329, %v330
      %v340 = vld [vmem:[%s1] sm:$0xff]
      %v341 = vld [vmem:[%s1 + $0x8] sm:$0xff]
      %v342 = vld [vmem:[%s1 + $0x10] sm:$0xff]
      %v343 = vld [vmem:[%s1 + $0x18] sm:$0xff]
      %v344 = vld [vmem:[%s1 + $0x20] sm:$0xff]
      %v345 = vld [vmem:[%s1 + $0x28] sm:$0xff]
      %v346 = vld [vmem:[%s1 + $0x30] sm:$0xff]
      %v347 = vld [vmem:[%s1 + $0x38] sm:$0xff]
      %v348 = vld [vmem:[%s1 + $0x40] sm:$0xff]
      %v349 = vld [vmem:[%s1 + $0x48] sm:$0xff]
      %v350 = vld [vmem:[%s1 + $0x50] sm:$0xff]
      %v351 = vld [vmem:[%s1 + $0x58] sm:$0xff]
      %v352 = vld [vmem:[%s1 + $0x60] sm:$0xff]
      %v353 = vld [vmem:[%s1 + $0x68] sm:$0xff]
      %v354 = vld [vmem:[%s1 + $0x70] sm:$0xff]
      %v355 = vld [vmem:[%s1 + $0x78] sm:$0xff]
      %v356 = vld [vmem:[%s1 + $0x80] sm:$0xff]
      %v357 = vld [vmem:[%s1 + $0x88] sm:$0xff]
      %v358 = vld [vmem:[%s1 + $0x90] sm:$0xff]
      %v359 = vld [vmem:[%s1 + $0x98] sm:$0xff]
      %v360 = vld [vmem:[%s1 + $0xa0] sm:$0xff]
      %v361 = vld [vmem:[%s1 + $0xa8] sm:$0xff]
      %v362 = vld [vmem:[%s1 + $0xb0] sm:$0xff]
      %v363 = vld [vmem:[%s1 + $0xb8] sm:$0xff]
      %v364 = vld [vmem:[%s1 + $0xc0] sm:$0xff]
      %v365 = vld [vmem:[%s1 + $0xc8] sm:$0xff]
      %v366 = vld [vmem:[%s1 + $0xd0] sm:$0xff]
      %v367 = vld [vmem:[%s1 + $0xd8] sm:$0xff]
      %v368 = vld [vmem:[%s1 + $0xe0] sm:$0xff]
      %v369 = vld [vmem:[%s1 + $0xe8] sm:$0xff]
      %v370 = vld [vmem:[%s1 + $0xf0] sm:$0xff]
      %v371 = vld [vmem:[%s1 + $0xf8] sm:$0xff]
      %v372 = vld [vmem:[%s1 + $0x100] sm:$0xff]
      %v373 = vld [vmem:[%s1 + $0x108] sm:$0xff]
      %v374 = vld [vmem:[%s1 + $0x110] sm:$0xff]
      %v375 = vld [vmem:[%s1 + $0x118] sm:$0xff]
      %v376 = vld [vmem:[%s1 + $0x120] sm:$0xff]
      %v377 = vld [vmem:[%s1 + $0x128] sm:$0xff]
      %v378 = vld [vmem:[%s1 + $0x130] sm:$0xff]
      %v379 = vld [vmem:[%s1 + $0x138] sm:$0xff]
      %v380 = vld [vmem:[%s1 + $0x140] sm:$0xff]
      %v381 = vld [vmem:[%s1 + $0x148] sm:$0xff]
      %v382 = vld [vmem:[%s1 + $0x150] sm:$0xff]
      %v383 = vld [vmem:[%s1 + $0x158] sm:$0xff]
      %v384 = vld [vmem:[%s1 + $0x160] sm:$0xff]
      %v385 = vld [vmem:[%s1 + $0x168] sm:$0xff]
      %v386 = vld [vmem:[%s1 + $0x170] sm:$0xff]
      %v387 = vld [vmem:[%s1 + $0x178] sm:$0xff]
      %v388 = vld [vmem:[%s248 + $0x10] sm:$0xff]
      %v389 = vld [vmem:[%s248 + $0x50] sm:$0xff]
      %v390 = vld [vmem:[%s248 + $0x90] sm:$0xff]
      %v391 = vld [vmem:[%s248 + $0xd0] sm:$0xff]
      %v392 = vld [vmem:[%s248 + $0x110] sm:$0xff]
      %v393 = vld [vmem:[%s248 + $0x150] sm:$0xff]
      %v394 = vld [vmem:[%s248 + $0x190] sm:$0xff]
      %v395 = vld [vmem:[%s248 + $0x1d0] sm:$0xff]
      %v396 = vld [vmem:[%s248 + $0x18] sm:$0xff]
      %v397 = vld [vmem:[%s248 + $0x58] sm:$0xff]
      %v398 = vld [vmem:[%s248 + $0x98] sm:$0xff]
      %v399 = vld [vmem:[%s248 + $0xd8] sm:$0xff]
      %v400 = vld [vmem:[%s248 + $0x118] sm:$0xff]
      %v401 = vld [vmem:[%s248 + $0x158] sm:$0xff]
      %v402 = vld [vmem:[%s248 + $0x198] sm:$0xff]
      %v403 = vld [vmem:[%s248 + $0x1d8] sm:$0xff]
      %v404 = vld [vmem:[%s248 + $0x10] sm:$0xfe]
      %v405 = vld [vmem:[%s248 + $0x30] sm:$0x1]
      %v406 = vld [vmem:[%s248 + $0x50] sm:$0xfe]
      %v407 = vld [vmem:[%s248 + $0x70] sm:$0x1]
      %v408 = vld [vmem:[%s248 + $0x90] sm:$0xfe]
      %v409 = vld [vmem:[%s248 + $0xb0] sm:$0x1]
      %v410 = vld [vmem:[%s248 + $0xd0] sm:$0xfe]
      %v411 = vld [vmem:[%s248 + $0xf0] sm:$0x1]
      %v412 = vld [vmem:[%s248 + $0x110] sm:$0xfe]
      %v413 = vld [vmem:[%s248 + $0x130] sm:$0x1]
      %v414 = vld [vmem:[%s248 + $0x150] sm:$0xfe]
      %v415 = vld [vmem:[%s248 + $0x170] sm:$0x1]
      %v416 = vld [vmem:[%s248 + $0x190] sm:$0xfe]
      %v417 = vld [vmem:[%s248 + $0x1b0] sm:$0x1]
      %v418 = vld [vmem:[%s248 + $0x1d0] sm:$0xfe]
      %v419 = vld [vmem:[%s248 + $0x1f0] sm:$0x1]
      %v436 = vrot.slane %v404, 1
      %v437 = vrot.slane %v405, 1
      %v438 = vsel %vm307, %v436, %v437
      %v439 = vrot.slane %v406, 1
      %v440 = vrot.slane %v407, 1
      %v441 = vsel %vm307, %v439, %v440
      %v442 = vrot.slane %v408, 1
      %v443 = vrot.slane %v409, 1
      %v444 = vsel %vm307, %v442, %v443
      %v445 = vrot.slane %v410, 1
      %v446 = vrot.slane %v411, 1
      %v447 = vsel %vm307, %v445, %v446
      %v448 = vrot.slane %v412, 1
      %v449 = vrot.slane %v413, 1
      %v450 = vsel %vm307, %v448, %v449
      %v451 = vrot.slane %v414, 1
      %v452 = vrot.slane %v415, 1
      %v453 = vsel %vm307, %v451, %v452
      %v454 = vrot.slane %v416, 1
      %v455 = vrot.slane %v417, 1
      %v456 = vsel %vm307, %v454, %v455
      %v457 = vrot.slane %v418, 1
      %v458 = vrot.slane %v419, 1
      %v459 = vsel %vm307, %v457, %v458
      %s468 = scalar_lea.vmem %s1, 384
      %v469 = vld [vmem:[%s468] sm:$0xff]
      %v470 = vld [vmem:[%s468 + $0x8] sm:$0xff]
      %v471 = vld [vmem:[%s468 + $0x10] sm:$0xff]
      %v472 = vld [vmem:[%s468 + $0x18] sm:$0xff]
      %v473 = vld [vmem:[%s468 + $0x20] sm:$0xff]
      %v474 = vld [vmem:[%s468 + $0x28] sm:$0xff]
      %v475 = vld [vmem:[%s468 + $0x30] sm:$0xff]
      %v476 = vld [vmem:[%s468 + $0x38] sm:$0xff]
      %v477 = vld [vmem:[%s468 + $0x40] sm:$0xff]
      %v478 = vld [vmem:[%s468 + $0x48] sm:$0xff]
      %v479 = vld [vmem:[%s468 + $0x50] sm:$0xff]
      %v480 = vld [vmem:[%s468 + $0x58] sm:$0xff]
      %v481 = vld [vmem:[%s468 + $0x60] sm:$0xff]
      %v482 = vld [vmem:[%s468 + $0x68] sm:$0xff]
      %v483 = vld [vmem:[%s468 + $0x70] sm:$0xff]
      %v484 = vld [vmem:[%s468 + $0x78] sm:$0xff]
      %v485 = vld [vmem:[%s468 + $0x80] sm:$0xff]
      %v486 = vld [vmem:[%s468 + $0x88] sm:$0xff]
      %v487 = vld [vmem:[%s468 + $0x90] sm:$0xff]
      %v488 = vld [vmem:[%s468 + $0x98] sm:$0xff]
      %v489 = vld [vmem:[%s468 + $0xa0] sm:$0xff]
      %v490 = vld [vmem:[%s468 + $0xa8] sm:$0xff]
      %v491 = vld [vmem:[%s468 + $0xb0] sm:$0xff]
      %v492 = vld [vmem:[%s468 + $0xb8] sm:$0xff]
      %v493 = vld [vmem:[%s468 + $0xc0] sm:$0xff]
      %v494 = vld [vmem:[%s468 + $0xc8] sm:$0xff]
      %v495 = vld [vmem:[%s468 + $0xd0] sm:$0xff]
      %v496 = vld [vmem:[%s468 + $0xd8] sm:$0xff]
      %v497 = vld [vmem:[%s468 + $0xe0] sm:$0xff]
      %v498 = vld [vmem:[%s468 + $0xe8] sm:$0xff]
      %v499 = vld [vmem:[%s468 + $0xf0] sm:$0xff]
      %v500 = vld [vmem:[%s468 + $0xf8] sm:$0xff]
      %v501 = vld [vmem:[%s468 + $0x100] sm:$0xff]
      %v502 = vld [vmem:[%s468 + $0x108] sm:$0xff]
      %v503 = vld [vmem:[%s468 + $0x110] sm:$0xff]
      %v504 = vld [vmem:[%s468 + $0x118] sm:$0xff]
      %v505 = vld [vmem:[%s468 + $0x120] sm:$0xff]
      %v506 = vld [vmem:[%s468 + $0x128] sm:$0xff]
      %v507 = vld [vmem:[%s468 + $0x130] sm:$0xff]
      %v508 = vld [vmem:[%s468 + $0x138] sm:$0xff]
      %v509 = vld [vmem:[%s468 + $0x140] sm:$0xff]
      %v510 = vld [vmem:[%s468 + $0x148] sm:$0xff]
      %v511 = vld [vmem:[%s468 + $0x150] sm:$0xff]
      %v512 = vld [vmem:[%s468 + $0x158] sm:$0xff]
      %v513 = vld [vmem:[%s468 + $0x160] sm:$0xff]
      %v514 = vld [vmem:[%s468 + $0x168] sm:$0xff]
      %v515 = vld [vmem:[%s468 + $0x170] sm:$0xff]
      %v516 = vld [vmem:[%s468 + $0x178] sm:$0xff]
      %517 = vmatprep.subr.mxu0 0.0
      %518 = vmatpush1.msra.mxu0 %v469
      %519 = vmatprep.subr.mxu0 0.0
      %520 = vmatpush1.msra.mxu0 %v470
      %521 = vmatprep.subr.mxu0 0.0
      %522 = vmatpush1.msra.mxu0 %v471
      %523 = vmatprep.subr.mxu0 0.0
      %524 = vmatpush1.msra.mxu0 %v472
      %525 = vmatprep.subr.mxu0 0.0
      %526 = vmatpush1.msra.mxu0 %v473
      %527 = vmatprep.subr.mxu0 0.0
      %528 = vmatpush1.msra.mxu0 %v474
      %529 = vmatprep.subr.mxu0 0.0
      %530 = vmatpush1.msra.mxu0 %v475
      %531 = vmatprep.subr.mxu0 0.0
      %532 = vmatpush1.msra.mxu0 %v476
      %533 = vmatprep.subr.mxu0 0.0
      %534 = vmatpush1.msra.mxu0 %v477
      %535 = vmatprep.subr.mxu0 0.0
      %536 = vmatpush1.msra.mxu0 %v478
      %537 = vmatprep.subr.mxu0 0.0
      %538 = vmatpush1.msra.mxu0 %v479
      %539 = vmatprep.subr.mxu0 0.0
      %540 = vmatpush1.msra.mxu0 %v480
      %541 = vmatprep.subr.mxu0 0.0
      %542 = vmatpush1.msra.mxu0 %v481
      %543 = vmatprep.subr.mxu0 0.0
      %544 = vmatpush1.msra.mxu0 %v482
      %545 = vmatprep.subr.mxu0 0.0
      %546 = vmatpush1.msra.mxu0 %v483
      %547 = vmatprep.subr.mxu0 0.0
      %548 = vmatpush1.msra.mxu0 %v484
      %549 = vmatprep.subr.mxu0 0.0
      %550 = vmatpush1.msra.mxu0 %v485
      %551 = vmatprep.subr.mxu0 0.0
      %552 = vmatpush1.msra.mxu0 %v486
      %553 = vmatprep.subr.mxu0 0.0
      %554 = vmatpush1.msra.mxu0 %v487
      %555 = vmatprep.subr.mxu0 0.0
      %556 = vmatpush1.msra.mxu0 %v488
      %557 = vmatprep.subr.mxu0 0.0
      %558 = vmatpush1.msra.mxu0 %v489
      %559 = vmatprep.subr.mxu0 0.0
      %560 = vmatpush1.msra.mxu0 %v490
      %561 = vmatprep.subr.mxu0 0.0
      %562 = vmatpush1.msra.mxu0 %v491
      %563 = vmatprep.subr.mxu0 0.0
      %564 = vmatpush1.msra.mxu0 %v492
      %565 = vmatprep.subr.mxu0 0.0
      %566 = vmatpush1.msra.mxu0 %v493
      %567 = vmatprep.subr.mxu0 0.0
      %568 = vmatpush1.msra.mxu0 %v494
      %569 = vmatprep.subr.mxu0 0.0
      %570 = vmatpush1.msra.mxu0 %v495
      %571 = vmatprep.subr.mxu0 0.0
      %572 = vmatpush1.msra.mxu0 %v496
      %573 = vmatprep.subr.mxu0 0.0
      %574 = vmatpush1.msra.mxu0 %v497
      %575 = vmatprep.subr.mxu0 0.0
      %576 = vmatpush1.msra.mxu0 %v498
      %577 = vmatprep.subr.mxu0 0.0
      %578 = vmatpush1.msra.mxu0 %v499
      %579 = vmatprep.subr.mxu0 0.0
      %580 = vmatpush1.msra.mxu0 %v500
      %581 = vmatprep.mubr.f32.mxu0 %v396
      %582 = vmatmul.mubr.f32.gmra.mrb[0].mxu0 %v388
      %v583 = vpop.f32.mrb[0].mxu0
      %v584 = vadd.f32 0.0, %v583
      %v585 = vpop.f32.mrb[0].mxu0
      %586 = vmatprep.mubr.f32.mxu0 %v397
      %587 = vmatmul.mubr.f32.gmra.mrb[0].mxu0 %v389
      %v588 = vpop.f32.mrb[0].mxu0
      %v589 = vadd.f32 0.0, %v588
      %v590 = vpop.f32.mrb[0].mxu0
      %591 = vmatprep.mubr.f32.mxu0 %v398
      %592 = vmatmul.mubr.f32.gmra.mrb[0].mxu0 %v390
      %v593 = vpop.f32.mrb[0].mxu0
      %v594 = vadd.f32 0.0, %v593
      %v595 = vpop.f32.mrb[0].mxu0
      %596 = vmatprep.mubr.f32.mxu0 %v399
      %597 = vmatmul.mubr.f32.gmra.mrb[0].mxu0 %v391
      %v598 = vpop.f32.mrb[0].mxu0
      %v599 = vadd.f32 0.0, %v598
      %v600 = vpop.f32.mrb[0].mxu0
      %601 = vmatprep.mubr.f32.mxu0 %v400
      %602 = vmatmul.mubr.f32.gmra.mrb[0].mxu0 %v392
      %v603 = vpop.f32.mrb[0].mxu0
      %v604 = vadd.f32 0.0, %v603
      %v605 = vpop.f32.mrb[0].mxu0
      %606 = vmatprep.mubr.f32.mxu0 %v401
      %607 = vmatmul.mubr.f32.gmra.mrb[0].mxu0 %v393
      %v608 = vpop.f32.mrb[0].mxu0
      %v609 = vadd.f32 0.0, %v608
      %v610 = vpop.f32.mrb[0].mxu0
      %611 = vmatprep.mubr.f32.mxu0 %v402
      %612 = vmatmul.mubr.f32.gmra.mrb[0].mxu0 %v394
      %v613 = vpop.f32.mrb[0].mxu0
      %v614 = vadd.f32 0.0, %v613
      %v615 = vpop.f32.mrb[0].mxu0
      %616 = vmatprep.mubr.f32.mxu0 %v403
      %617 = vmatmul.mubr.f32.gmra.mrb[0].mxu0 %v395
      %v618 = vpop.f32.mrb[0].mxu0
      %v619 = vadd.f32 0.0, %v618
      %v620 = vpop.f32.mrb[0].mxu0
      %621 = vdwg.mxu0
      %622 = vmatprep.subr.mxu0 0.0
      %623 = vmatpush1.msra.mxu0 %v501
      %624 = vmatprep.subr.mxu0 0.0
      %625 = vmatpush1.msra.mxu0 %v502
      %626 = vmatprep.subr.mxu0 0.0
      %627 = vmatpush1.msra.mxu0 %v503
      %628 = vmatprep.subr.mxu0 0.0
      %629 = vmatpush1.msra.mxu0 %v504
      %630 = vmatprep.subr.mxu0 0.0
      %631 = vmatpush1.msra.mxu0 %v505
      %632 = vmatprep.subr.mxu0 0.0
      %633 = vmatpush1.msra.mxu0 %v506
      %634 = vmatprep.subr.mxu0 0.0
      %635 = vmatpush1.msra.mxu0 %v507
      %636 = vmatprep.subr.mxu0 0.0
      %637 = vmatpush1.msra.mxu0 %v508
      %638 = vmatprep.subr.mxu0 0.0
      %639 = vmatpush1.msra.mxu0 %v509
      %640 = vmatprep.subr.mxu0 0.0
      %641 = vmatpush1.msra.mxu0 %v510
      %642 = vmatprep.subr.mxu0 0.0
      %643 = vmatpush1.msra.mxu0 %v511
      %644 = vmatprep.subr.mxu0 0.0
      %645 = vmatpush1.msra.mxu0 %v512
      %646 = vmatprep.subr.mxu0 0.0
      %647 = vmatpush1.msra.mxu0 %v513
      %648 = vmatprep.subr.mxu0 0.0
      %649 = vmatpush1.msra.mxu0 %v514
      %650 = vmatprep.subr.mxu0 0.0
      %651 = vmatpush1.msra.mxu0 %v515
      %652 = vmatprep.subr.mxu0 0.0
      %653 = vmatpush1.msra.mxu0 %v516
      %654 = vmatprep.subr.mxu0 0.0
      %655 = vmatpush1.msra.mxu0 0.0
      %656 = vmatprep.subr.mxu0 0.0
      %657 = vmatpush1.msra.mxu0 0.0
      %658 = vmatprep.subr.mxu0 0.0
      %659 = vmatpush1.msra.mxu0 0.0
      %660 = vmatprep.subr.mxu0 0.0
      %661 = vmatpush1.msra.mxu0 0.0
      %662 = vmatprep.subr.mxu0 0.0
      %663 = vmatpush1.msra.mxu0 0.0
      %664 = vmatprep.subr.mxu0 0.0
      %665 = vmatpush1.msra.mxu0 0.0
      %666 = vmatprep.subr.mxu0 0.0
      %667 = vmatpush1.msra.mxu0 0.0
      %668 = vmatprep.subr.mxu0 0.0
      %669 = vmatpush1.msra.mxu0 0.0
      %670 = vmatprep.subr.mxu0 0.0
      %671 = vmatpush1.msra.mxu0 0.0
      %672 = vmatprep.subr.mxu0 0.0
      %673 = vmatpush1.msra.mxu0 0.0
      %674 = vmatprep.subr.mxu0 0.0
      %675 = vmatpush1.msra.mxu0 0.0
      %676 = vmatprep.subr.mxu0 0.0
      %677 = vmatpush1.msra.mxu0 0.0
      %678 = vmatprep.subr.mxu0 0.0
      %679 = vmatpush1.msra.mxu0 0.0
      %680 = vmatprep.subr.mxu0 0.0
      %681 = vmatpush1.msra.mxu0 0.0
      %682 = vmatprep.subr.mxu0 0.0
      %683 = vmatpush1.msra.mxu0 0.0
      %684 = vmatprep.subr.mxu0 0.0
      %685 = vmatpush1.msra.mxu0 0.0
      %686 = vmatprep.mubr.f32.mxu0 0.0
      %687 = vmatmul.mubr.f32.gmra.mrb[0].mxu0 %v438
      %v688 = vpop.f32.mrb[0].mxu0
      %v689 = vadd.f32 %v584, %v688
      %v690 = vpop.f32.mrb[0].mxu0
      %691 = vmatprep.mubr.f32.mxu0 0.0
      %692 = vmatmul.mubr.f32.gmra.mrb[0].mxu0 %v441
      %v693 = vpop.f32.mrb[0].mxu0
      %v694 = vadd.f32 %v589, %v693
      %v695 = vpop.f32.mrb[0].mxu0
      %696 = vmatprep.mubr.f32.mxu0 0.0
      %697 = vmatmul.mubr.f32.gmra.mrb[0].mxu0 %v444
      %v698 = vpop.f32.mrb[0].mxu0
      %v699 = vadd.f32 %v594, %v698
      %v700 = vpop.f32.mrb[0].mxu0
      %701 = vmatprep.mubr.f32.mxu0 0.0
      %702 = vmatmul.mubr.f32.gmra.mrb[0].mxu0 %v447
      %v703 = vpop.f32.mrb[0].mxu0
      %v704 = vadd.f32 %v599, %v703
      %v705 = vpop.f32.mrb[0].mxu0
      %706 = vmatprep.mubr.f32.mxu0 0.0
      %707 = vmatmul.mubr.f32.gmra.mrb[0].mxu0 %v450
      %v708 = vpop.f32.mrb[0].mxu0
      %v709 = vadd.f32 %v604, %v708
      %v710 = vpop.f32.mrb[0].mxu0
      %711 = vmatprep.mubr.f32.mxu0 0.0
      %712 = vmatmul.mubr.f32.gmra.mrb[0].mxu0 %v453
      %v713 = vpop.f32.mrb[0].mxu0
      %v714 = vadd.f32 %v609, %v713
      %v715 = vpop.f32.mrb[0].mxu0
      %716 = vmatprep.mubr.f32.mxu0 0.0
      %717 = vmatmul.mubr.f32.gmra.mrb[0].mxu0 %v456
      %v718 = vpop.f32.mrb[0].mxu0
      %v719 = vadd.f32 %v614, %v718
      %v720 = vpop.f32.mrb[0].mxu0
      %721 = vmatprep.mubr.f32.mxu0 0.0
      %722 = vmatmul.mubr.f32.gmra.mrb[0].mxu0 %v459
      %v723 = vpop.f32.mrb[0].mxu0
      %v724 = vadd.f32 %v619, %v723
      %v725 = vpop.f32.mrb[0].mxu0
      %726 = vdwg.mxu0
      %727 = vmatprep.subr.mxu0 0.0
      %728 = vmatpush1.msra.mxu0 %v340
      %729 = vmatprep.subr.mxu0 0.0
      %730 = vmatpush1.msra.mxu0 %v341
      %731 = vmatprep.subr.mxu0 0.0
      %732 = vmatpush1.msra.mxu0 %v342
      %733 = vmatprep.subr.mxu0 0.0
      %734 = vmatpush1.msra.mxu0 %v343
      %735 = vmatprep.subr.mxu0 0.0
      %736 = vmatpush1.msra.mxu0 %v344
      %737 = vmatprep.subr.mxu0 0.0
      %738 = vmatpush1.msra.mxu0 %v345
      %739 = vmatprep.subr.mxu0 0.0
      %740 = vmatpush1.msra.mxu0 %v346
      %741 = vmatprep.subr.mxu0 0.0
      %742 = vmatpush1.msra.mxu0 %v347
      %743 = vmatprep.subr.mxu0 0.0
      %744 = vmatpush1.msra.mxu0 %v348
      %745 = vmatprep.subr.mxu0 0.0
      %746 = vmatpush1.msra.mxu0 %v349
      %747 = vmatprep.subr.mxu0 0.0
      %748 = vmatpush1.msra.mxu0 %v350
      %749 = vmatprep.subr.mxu0 0.0
      %750 = vmatpush1.msra.mxu0 %v351
      %751 = vmatprep.subr.mxu0 0.0
      %752 = vmatpush1.msra.mxu0 %v352
      %753 = vmatprep.subr.mxu0 0.0
      %754 = vmatpush1.msra.mxu0 %v353
      %755 = vmatprep.subr.mxu0 0.0
      %756 = vmatpush1.msra.mxu0 %v354
      %757 = vmatprep.subr.mxu0 0.0
      %758 = vmatpush1.msra.mxu0 %v355
      %759 = vmatprep.subr.mxu0 0.0
      %760 = vmatpush1.msra.mxu0 %v356
      %761 = vmatprep.subr.mxu0 0.0
      %762 = vmatpush1.msra.mxu0 %v357
      %763 = vmatprep.subr.mxu0 0.0
      %764 = vmatpush1.msra.mxu0 %v358
      %765 = vmatprep.subr.mxu0 0.0
      %766 = vmatpush1.msra.mxu0 %v359
      %767 = vmatprep.subr.mxu0 0.0
      %768 = vmatpush1.msra.mxu0 %v360
      %769 = vmatprep.subr.mxu0 0.0
      %770 = vmatpush1.msra.mxu0 %v361
      %771 = vmatprep.subr.mxu0 0.0
      %772 = vmatpush1.msra.mxu0 %v362
      %773 = vmatprep.subr.mxu0 0.0
      %774 = vmatpush1.msra.mxu0 %v363
      %775 = vmatprep.subr.mxu0 0.0
      %776 = vmatpush1.msra.mxu0 %v364
      %777 = vmatprep.subr.mxu0 0.0
      %778 = vmatpush1.msra.mxu0 %v365
      %779 = vmatprep.subr.mxu0 0.0
      %780 = vmatpush1.msra.mxu0 %v366
      %781 = vmatprep.subr.mxu0 0.0
      %782 = vmatpush1.msra.mxu0 %v367
      %783 = vmatprep.subr.mxu0 0.0
      %784 = vmatpush1.msra.mxu0 %v368
      %785 = vmatprep.subr.mxu0 0.0
      %786 = vmatpush1.msra.mxu0 %v369
      %787 = vmatprep.subr.mxu0 0.0
      %788 = vmatpush1.msra.mxu0 %v370
      %789 = vmatprep.subr.mxu0 0.0
      %790 = vmatpush1.msra.mxu0 %v371
      %791 = vmatprep.mubr.f32.mxu0 %v267
      %792 = vmatmul.mubr.f32.gmra.mrb[0].mxu0 %v259
      %v793 = vpop.f32.mrb[0].mxu0
      %v794 = vadd.f32 %v689, %v793
      %v795 = vpop.f32.mrb[0].mxu0
      %796 = vmatprep.mubr.f32.mxu0 %v268
      %797 = vmatmul.mubr.f32.gmra.mrb[0].mxu0 %v260
      %v798 = vpop.f32.mrb[0].mxu0
      %v799 = vadd.f32 %v694, %v798
      %v800 = vpop.f32.mrb[0].mxu0
      %801 = vmatprep.mubr.f32.mxu0 %v269
      %802 = vmatmul.mubr.f32.gmra.mrb[0].mxu0 %v261
      %v803 = vpop.f32.mrb[0].mxu0
      %v804 = vadd.f32 %v699, %v803
      %v805 = vpop.f32.mrb[0].mxu0
      %806 = vmatprep.mubr.f32.mxu0 %v270
      %807 = vmatmul.mubr.f32.gmra.mrb[0].mxu0 %v262
      %v808 = vpop.f32.mrb[0].mxu0
      %v809 = vadd.f32 %v704, %v808
      %v810 = vpop.f32.mrb[0].mxu0
      %811 = vmatprep.mubr.f32.mxu0 %v271
      %812 = vmatmul.mubr.f32.gmra.mrb[0].mxu0 %v263
      %v813 = vpop.f32.mrb[0].mxu0
      %v814 = vadd.f32 %v709, %v813
      %v815 = vpop.f32.mrb[0].mxu0
      %816 = vmatprep.mubr.f32.mxu0 %v272
      %817 = vmatmul.mubr.f32.gmra.mrb[0].mxu0 %v264
      %v818 = vpop.f32.mrb[0].mxu0
      %v819 = vadd.f32 %v714, %v818
      %v820 = vpop.f32.mrb[0].mxu0
      %821 = vmatprep.mubr.f32.mxu0 %v273
      %822 = vmatmul.mubr.f32.gmra.mrb[0].mxu0 %v265
      %v823 = vpop.f32.mrb[0].mxu0
      %v824 = vadd.f32 %v719, %v823
      %v825 = vpop.f32.mrb[0].mxu0
      %826 = vmatprep.mubr.f32.mxu0 %v274
      %827 = vmatmul.mubr.f32.gmra.mrb[0].mxu0 %v266
      %v828 = vpop.f32.mrb[0].mxu0
      %v829 = vadd.f32 %v724, %v828
      %v830 = vpop.f32.mrb[0].mxu0
      %831 = vdwg.mxu0
      %832 = vmatprep.subr.mxu0 0.0
      %833 = vmatpush1.msra.mxu0 %v372
      %834 = vmatprep.subr.mxu0 0.0
      %835 = vmatpush1.msra.mxu0 %v373
      %836 = vmatprep.subr.mxu0 0.0
      %837 = vmatpush1.msra.mxu0 %v374
      %838 = vmatprep.subr.mxu0 0.0
      %839 = vmatpush1.msra.mxu0 %v375
      %840 = vmatprep.subr.mxu0 0.0
      %841 = vmatpush1.msra.mxu0 %v376
      %842 = vmatprep.subr.mxu0 0.0
      %843 = vmatpush1.msra.mxu0 %v377
      %844 = vmatprep.subr.mxu0 0.0
      %845 = vmatpush1.msra.mxu0 %v378
      %846 = vmatprep.subr.mxu0 0.0
      %847 = vmatpush1.msra.mxu0 %v379
      %848 = vmatprep.subr.mxu0 0.0
      %849 = vmatpush1.msra.mxu0 %v380
      %850 = vmatprep.subr.mxu0 0.0
      %851 = vmatpush1.msra.mxu0 %v381
      %852 = vmatprep.subr.mxu0 0.0
      %853 = vmatpush1.msra.mxu0 %v382
      %854 = vmatprep.subr.mxu0 0.0
      %855 = vmatpush1.msra.mxu0 %v383
      %856 = vmatprep.subr.mxu0 0.0
      %857 = vmatpush1.msra.mxu0 %v384
      %858 = vmatprep.subr.mxu0 0.0
      %859 = vmatpush1.msra.mxu0 %v385
      %860 = vmatprep.subr.mxu0 0.0
      %861 = vmatpush1.msra.mxu0 %v386
      %862 = vmatprep.subr.mxu0 0.0
      %863 = vmatpush1.msra.mxu0 %v387
      %864 = vmatprep.subr.mxu0 0.0
      %865 = vmatpush1.msra.mxu0 0.0
      %866 = vmatprep.subr.mxu0 0.0
      %867 = vmatpush1.msra.mxu0 0.0
      %868 = vmatprep.subr.mxu0 0.0
      %869 = vmatpush1.msra.mxu0 0.0
      %870 = vmatprep.subr.mxu0 0.0
      %871 = vmatpush1.msra.mxu0 0.0
      %872 = vmatprep.subr.mxu0 0.0
      %873 = vmatpush1.msra.mxu0 0.0
      %874 = vmatprep.subr.mxu0 0.0
      %875 = vmatpush1.msra.mxu0 0.0
      %876 = vmatprep.subr.mxu0 0.0
      %877 = vmatpush1.msra.mxu0 0.0
      %878 = vmatprep.subr.mxu0 0.0
      %879 = vmatpush1.msra.mxu0 0.0
      %880 = vmatprep.subr.mxu0 0.0
      %881 = vmatpush1.msra.mxu0 0.0
      %882 = vmatprep.subr.mxu0 0.0
      %883 = vmatpush1.msra.mxu0 0.0
      %884 = vmatprep.subr.mxu0 0.0
      %885 = vmatpush1.msra.mxu0 0.0
      %886 = vmatprep.subr.mxu0 0.0
      %887 = vmatpush1.msra.mxu0 0.0
      %888 = vmatprep.subr.mxu0 0.0
      %889 = vmatpush1.msra.mxu0 0.0
      %890 = vmatprep.subr.mxu0 0.0
      %891 = vmatpush1.msra.mxu0 0.0
      %892 = vmatprep.subr.mxu0 0.0
      %893 = vmatpush1.msra.mxu0 0.0
      %894 = vmatprep.subr.mxu0 0.0
      %895 = vmatpush1.msra.mxu0 0.0
      %896 = vmatprep.mubr.f32.mxu0 0.0
      %897 = vmatmul.mubr.f32.gmra.mrb[0].mxu0 %v310
      %v898 = vpop.f32.mrb[0].mxu0
      %v899 = vadd.f32 %v794, %v898
      %v900 = vpop.f32.mrb[0].mxu0
      %901 = vmatprep.mubr.f32.mxu0 0.0
      %902 = vmatmul.mubr.f32.gmra.mrb[0].mxu0 %v313
      %v903 = vpop.f32.mrb[0].mxu0
      %v904 = vadd.f32 %v799, %v903
      %v905 = vpop.f32.mrb[0].mxu0
      %906 = vmatprep.mubr.f32.mxu0 0.0
      %907 = vmatmul.mubr.f32.gmra.mrb[0].mxu0 %v316
      %v908 = vpop.f32.mrb[0].mxu0
      %v909 = vadd.f32 %v804, %v908
      %v910 = vpop.f32.mrb[0].mxu0
      %911 = vmatprep.mubr.f32.mxu0 0.0
      %912 = vmatmul.mubr.f32.gmra.mrb[0].mxu0 %v319
      %v913 = vpop.f32.mrb[0].mxu0
      %v914 = vadd.f32 %v809, %v913
      %v915 = vpop.f32.mrb[0].mxu0
      %916 = vmatprep.mubr.f32.mxu0 0.0
      %917 = vmatmul.mubr.f32.gmra.mrb[0].mxu0 %v322
      %v918 = vpop.f32.mrb[0].mxu0
      %v919 = vadd.f32 %v814, %v918
      %v920 = vpop.f32.mrb[0].mxu0
      %921 = vmatprep.mubr.f32.mxu0 0.0
      %922 = vmatmul.mubr.f32.gmra.mrb[0].mxu0 %v325
      %v923 = vpop.f32.mrb[0].mxu0
      %v924 = vadd.f32 %v819, %v923
      %v925 = vpop.f32.mrb[0].mxu0
      %926 = vmatprep.mubr.f32.mxu0 0.0
      %927 = vmatmul.mubr.f32.gmra.mrb[0].mxu0 %v328
      %v928 = vpop.f32.mrb[0].mxu0
      %v929 = vadd.f32 %v824, %v928
      %v930 = vpop.f32.mrb[0].mxu0
      %931 = vmatprep.mubr.f32.mxu0 0.0
      %932 = vmatmul.mubr.f32.gmra.mrb[0].mxu0 %v331
      %v933 = vpop.f32.mrb[0].mxu0
      %v934 = vadd.f32 %v829, %v933
      %v935 = vpop.f32.mrb[0].mxu0
      %936 = vdwg.mxu0
      %s937 = scalar_lea.vmem %s248, 64
      %v938 = vld [vmem:[%s937] sm:$0xff]
      %v939 = vld [vmem:[%s937 + $0x40] sm:$0xff]
      %v940 = vld [vmem:[%s937 + $0x80] sm:$0xff]
      %v941 = vld [vmem:[%s937 + $0xc0] sm:$0xff]
      %v942 = vld [vmem:[%s937 + $0x100] sm:$0xff]
      %v943 = vld [vmem:[%s937 + $0x140] sm:$0xff]
      %v944 = vld [vmem:[%s937 + $0x180] sm:$0xff]
      %v945 = vld [vmem:[%s937 + $0x1c0] sm:$0xff]
      %v946 = vld [vmem:[%s937 + $0x8] sm:$0xff]
      %v947 = vld [vmem:[%s937 + $0x48] sm:$0xff]
      %v948 = vld [vmem:[%s937 + $0x88] sm:$0xff]
      %v949 = vld [vmem:[%s937 + $0xc8] sm:$0xff]
      %v950 = vld [vmem:[%s937 + $0x108] sm:$0xff]
      %v951 = vld [vmem:[%s937 + $0x148] sm:$0xff]
      %v952 = vld [vmem:[%s937 + $0x188] sm:$0xff]
      %v953 = vld [vmem:[%s937 + $0x1c8] sm:$0xff]
      %v954 = vld [vmem:[%s937] sm:$0xfe]
      %v955 = vld [vmem:[%s937 + $0x20] sm:$0x1]
      %v956 = vld [vmem:[%s937 + $0x40] sm:$0xfe]
      %v957 = vld [vmem:[%s937 + $0x60] sm:$0x1]
      %v958 = vld [vmem:[%s937 + $0x80] sm:$0xfe]
      %v959 = vld [vmem:[%s937 + $0xa0] sm:$0x1]
      %v960 = vld [vmem:[%s937 + $0xc0] sm:$0xfe]
      %v961 = vld [vmem:[%s937 + $0xe0] sm:$0x1]
      %v962 = vld [vmem:[%s937 + $0x100] sm:$0xfe]
      %v963 = vld [vmem:[%s937 + $0x120] sm:$0x1]
      %v964 = vld [vmem:[%s937 + $0x140] sm:$0xfe]
      %v965 = vld [vmem:[%s937 + $0x160] sm:$0x1]
      %v966 = vld [vmem:[%s937 + $0x180] sm:$0xfe]
      %v967 = vld [vmem:[%s937 + $0x1a0] sm:$0x1]
      %v968 = vld [vmem:[%s937 + $0x1c0] sm:$0xfe]
      %v969 = vld [vmem:[%s937 + $0x1e0] sm:$0x1]
      %v986 = vrot.slane %v954, 1
      %v987 = vrot.slane %v955, 1
      %v988 = vsel %vm307, %v986, %v987
      %v989 = vrot.slane %v956, 1
      %v990 = vrot.slane %v957, 1
      %v991 = vsel %vm307, %v989, %v990
      %v992 = vrot.slane %v958, 1
      %v993 = vrot.slane %v959, 1
      %v994 = vsel %vm307, %v992, %v993
      %v995 = vrot.slane %v960, 1
      %v996 = vrot.slane %v961, 1
      %v997 = vsel %vm307, %v995, %v996
      %v998 = vrot.slane %v962, 1
      %v999 = vrot.slane %v963, 1
      %v1000 = vsel %vm307, %v998, %v999
      %v1001 = vrot.slane %v964, 1
      %v1002 = vrot.slane %v965, 1
      %v1003 = vsel %vm307, %v1001, %v1002
      %v1004 = vrot.slane %v966, 1
      %v1005 = vrot.slane %v967, 1
      %v1006 = vsel %vm307, %v1004, %v1005
      %v1007 = vrot.slane %v968, 1
      %v1008 = vrot.slane %v969, 1
      %v1009 = vsel %vm307, %v1007, %v1008
      %s1018 = scalar_lea.vmem %s1, 768
      %v1019 = vld [vmem:[%s1018] sm:$0xff]
      %v1020 = vld [vmem:[%s1018 + $0x8] sm:$0xff]
      %v1021 = vld [vmem:[%s1018 + $0x10] sm:$0xff]
      %v1022 = vld [vmem:[%s1018 + $0x18] sm:$0xff]
      %v1023 = vld [vmem:[%s1018 + $0x20] sm:$0xff]
      %v1024 = vld [vmem:[%s1018 + $0x28] sm:$0xff]
      %v1025 = vld [vmem:[%s1018 + $0x30] sm:$0xff]
      %v1026 = vld [vmem:[%s1018 + $0x38] sm:$0xff]
      %v1027 = vld [vmem:[%s1018 + $0x40] sm:$0xff]
      %v1028 = vld [vmem:[%s1018 + $0x48] sm:$0xff]
      %v1029 = vld [vmem:[%s1018 + $0x50] sm:$0xff]
      %v1030 = vld [vmem:[%s1018 + $0x58] sm:$0xff]
      %v1031 = vld [vmem:[%s1018 + $0x60] sm:$0xff]
      %v1032 = vld [vmem:[%s1018 + $0x68] sm:$0xff]
      %v1033 = vld [vmem:[%s1018 + $0x70] sm:$0xff]
      %v1034 = vld [vmem:[%s1018 + $0x78] sm:$0xff]
      %v1035 = vld [vmem:[%s1018 + $0x80] sm:$0xff]
      %v1036 = vld [vmem:[%s1018 + $0x88] sm:$0xff]
      %v1037 = vld [vmem:[%s1018 + $0x90] sm:$0xff]
      %v1038 = vld [vmem:[%s1018 + $0x98] sm:$0xff]
      %v1039 = vld [vmem:[%s1018 + $0xa0] sm:$0xff]
      %v1040 = vld [vmem:[%s1018 + $0xa8] sm:$0xff]
      %v1041 = vld [vmem:[%s1018 + $0xb0] sm:$0xff]
      %v1042 = vld [vmem:[%s1018 + $0xb8] sm:$0xff]
      %v1043 = vld [vmem:[%s1018 + $0xc0] sm:$0xff]
      %v1044 = vld [vmem:[%s1018 + $0xc8] sm:$0xff]
      %v1045 = vld [vmem:[%s1018 + $0xd0] sm:$0xff]
      %v1046 = vld [vmem:[%s1018 + $0xd8] sm:$0xff]
      %v1047 = vld [vmem:[%s1018 + $0xe0] sm:$0xff]
      %v1048 = vld [vmem:[%s1018 + $0xe8] sm:$0xff]
      %v1049 = vld [vmem:[%s1018 + $0xf0] sm:$0xff]
      %v1050 = vld [vmem:[%s1018 + $0xf8] sm:$0xff]
      %v1051 = vld [vmem:[%s1018 + $0x100] sm:$0xff]
      %v1052 = vld [vmem:[%s1018 + $0x108] sm:$0xff]
      %v1053 = vld [vmem:[%s1018 + $0x110] sm:$0xff]
      %v1054 = vld [vmem:[%s1018 + $0x118] sm:$0xff]
      %v1055 = vld [vmem:[%s1018 + $0x120] sm:$0xff]
      %v1056 = vld [vmem:[%s1018 + $0x128] sm:$0xff]
      %v1057 = vld [vmem:[%s1018 + $0x130] sm:$0xff]
      %v1058 = vld [vmem:[%s1018 + $0x138] sm:$0xff]
      %v1059 = vld [vmem:[%s1018 + $0x140] sm:$0xff]
      %v1060 = vld [vmem:[%s1018 + $0x148] sm:$0xff]
      %v1061 = vld [vmem:[%s1018 + $0x150] sm:$0xff]
      %v1062 = vld [vmem:[%s1018 + $0x158] sm:$0xff]
      %v1063 = vld [vmem:[%s1018 + $0x160] sm:$0xff]
      %v1064 = vld [vmem:[%s1018 + $0x168] sm:$0xff]
      %v1065 = vld [vmem:[%s1018 + $0x170] sm:$0xff]
      %v1066 = vld [vmem:[%s1018 + $0x178] sm:$0xff]
      %1067 = vmatprep.subr.mxu0 0.0
      %1068 = vmatpush1.msra.mxu0 %v1019
      %1069 = vmatprep.subr.mxu0 0.0
      %1070 = vmatpush1.msra.mxu0 %v1020
      %1071 = vmatprep.subr.mxu0 0.0
      %1072 = vmatpush1.msra.mxu0 %v1021
      %1073 = vmatprep.subr.mxu0 0.0
      %1074 = vmatpush1.msra.mxu0 %v1022
      %1075 = vmatprep.subr.mxu0 0.0
      %1076 = vmatpush1.msra.mxu0 %v1023
      %1077 = vmatprep.subr.mxu0 0.0
      %1078 = vmatpush1.msra.mxu0 %v1024
      %1079 = vmatprep.subr.mxu0 0.0
      %1080 = vmatpush1.msra.mxu0 %v1025
      %1081 = vmatprep.subr.mxu0 0.0
      %1082 = vmatpush1.msra.mxu0 %v1026
      %1083 = vmatprep.subr.mxu0 0.0
      %1084 = vmatpush1.msra.mxu0 %v1027
      %1085 = vmatprep.subr.mxu0 0.0
      %1086 = vmatpush1.msra.mxu0 %v1028
      %1087 = vmatprep.subr.mxu0 0.0
      %1088 = vmatpush1.msra.mxu0 %v1029
      %1089 = vmatprep.subr.mxu0 0.0
      %1090 = vmatpush1.msra.mxu0 %v1030
      %1091 = vmatprep.subr.mxu0 0.0
      %1092 = vmatpush1.msra.mxu0 %v1031
      %1093 = vmatprep.subr.mxu0 0.0
      %1094 = vmatpush1.msra.mxu0 %v1032
      %1095 = vmatprep.subr.mxu0 0.0
      %1096 = vmatpush1.msra.mxu0 %v1033
      %1097 = vmatprep.subr.mxu0 0.0
      %1098 = vmatpush1.msra.mxu0 %v1034
      %1099 = vmatprep.subr.mxu0 0.0
      %1100 = vmatpush1.msra.mxu0 %v1035
      %1101 = vmatprep.subr.mxu0 0.0
      %1102 = vmatpush1.msra.mxu0 %v1036
      %1103 = vmatprep.subr.mxu0 0.0
      %1104 = vmatpush1.msra.mxu0 %v1037
      %1105 = vmatprep.subr.mxu0 0.0
      %1106 = vmatpush1.msra.mxu0 %v1038
      %1107 = vmatprep.subr.mxu0 0.0
      %1108 = vmatpush1.msra.mxu0 %v1039
      %1109 = vmatprep.subr.mxu0 0.0
      %1110 = vmatpush1.msra.mxu0 %v1040
      %1111 = vmatprep.subr.mxu0 0.0
      %1112 = vmatpush1.msra.mxu0 %v1041
      %1113 = vmatprep.subr.mxu0 0.0
      %1114 = vmatpush1.msra.mxu0 %v1042
      %1115 = vmatprep.subr.mxu0 0.0
      %1116 = vmatpush1.msra.mxu0 %v1043
      %1117 = vmatprep.subr.mxu0 0.0
      %1118 = vmatpush1.msra.mxu0 %v1044
      %1119 = vmatprep.subr.mxu0 0.0
      %1120 = vmatpush1.msra.mxu0 %v1045
      %1121 = vmatprep.subr.mxu0 0.0
      %1122 = vmatpush1.msra.mxu0 %v1046
      %1123 = vmatprep.subr.mxu0 0.0
      %1124 = vmatpush1.msra.mxu0 %v1047
      %1125 = vmatprep.subr.mxu0 0.0
      %1126 = vmatpush1.msra.mxu0 %v1048
      %1127 = vmatprep.subr.mxu0 0.0
      %1128 = vmatpush1.msra.mxu0 %v1049
      %1129 = vmatprep.subr.mxu0 0.0
      %1130 = vmatpush1.msra.mxu0 %v1050
      %1131 = vmatprep.mubr.f32.mxu0 %v946
      %1132 = vmatmul.mubr.f32.gmra.mrb[0].mxu0 %v938
      %v1133 = vpop.f32.mrb[0].mxu0
      %v1134 = vadd.f32 0.0, %v1133
      %v1135 = vpop.f32.mrb[0].mxu0
      %1136 = vmatprep.mubr.f32.mxu0 %v947
      %1137 = vmatmul.mubr.f32.gmra.mrb[0].mxu0 %v939
      %v1138 = vpop.f32.mrb[0].mxu0
      %v1139 = vadd.f32 0.0, %v1138
      %v1140 = vpop.f32.mrb[0].mxu0
      %1141 = vmatprep.mubr.f32.mxu0 %v948
      %1142 = vmatmul.mubr.f32.gmra.mrb[0].mxu0 %v940
      %v1143 = vpop.f32.mrb[0].mxu0
      %v1144 = vadd.f32 0.0, %v1143
      %v1145 = vpop.f32.mrb[0].mxu0
      %1146 = vmatprep.mubr.f32.mxu0 %v949
      %1147 = vmatmul.mubr.f32.gmra.mrb[0].mxu0 %v941
      %v1148 = vpop.f32.mrb[0].mxu0
      %v1149 = vadd.f32 0.0, %v1148
      %v1150 = vpop.f32.mrb[0].mxu0
      %1151 = vmatprep.mubr.f32.mxu0 %v950
      %1152 = vmatmul.mubr.f32.gmra.mrb[0].mxu0 %v942
      %v1153 = vpop.f32.mrb[0].mxu0
      %v1154 = vadd.f32 0.0, %v1153
      %v1155 = vpop.f32.mrb[0].mxu0
      %1156 = vmatprep.mubr.f32.mxu0 %v951
      %1157 = vmatmul.mubr.f32.gmra.mrb[0].mxu0 %v943
      %v1158 = vpop.f32.mrb[0].mxu0
      %v1159 = vadd.f32 0.0, %v1158
      %v1160 = vpop.f32.mrb[0].mxu0
      %1161 = vmatprep.mubr.f32.mxu0 %v952
      %1162 = vmatmul.mubr.f32.gmra.mrb[0].mxu0 %v944
      %v1163 = vpop.f32.mrb[0].mxu0
      %v1164 = vadd.f32 0.0, %v1163
      %v1165 = vpop.f32.mrb[0].mxu0
      %1166 = vmatprep.mubr.f32.mxu0 %v953
      %1167 = vmatmul.mubr.f32.gmra.mrb[0].mxu0 %v945
      %v1168 = vpop.f32.mrb[0].mxu0
      %v1169 = vadd.f32 0.0, %v1168
      %v1170 = vpop.f32.mrb[0].mxu0
      %1171 = vdwg.mxu0
      %1172 = vmatprep.subr.mxu0 0.0
      %1173 = vmatpush1.msra.mxu0 %v1051
      %1174 = vmatprep.subr.mxu0 0.0
      %1175 = vmatpush1.msra.mxu0 %v1052
      %1176 = vmatprep.subr.mxu0 0.0
      %1177 = vmatpush1.msra.mxu0 %v1053
      %1178 = vmatprep.subr.mxu0 0.0
      %1179 = vmatpush1.msra.mxu0 %v1054
      %1180 = vmatprep.subr.mxu0 0.0
      %1181 = vmatpush1.msra.mxu0 %v1055
      %1182 = vmatprep.subr.mxu0 0.0
      %1183 = vmatpush1.msra.mxu0 %v1056
      %1184 = vmatprep.subr.mxu0 0.0
      %1185 = vmatpush1.msra.mxu0 %v1057
      %1186 = vmatprep.subr.mxu0 0.0
      %1187 = vmatpush1.msra.mxu0 %v1058
      %1188 = vmatprep.subr.mxu0 0.0
      %1189 = vmatpush1.msra.mxu0 %v1059
      %1190 = vmatprep.subr.mxu0 0.0
      %1191 = vmatpush1.msra.mxu0 %v1060
      %1192 = vmatprep.subr.mxu0 0.0
      %1193 = vmatpush1.msra.mxu0 %v1061
      %1194 = vmatprep.subr.mxu0 0.0
      %1195 = vmatpush1.msra.mxu0 %v1062
      %1196 = vmatprep.subr.mxu0 0.0
      %1197 = vmatpush1.msra.mxu0 %v1063
      %1198 = vmatprep.subr.mxu0 0.0
      %1199 = vmatpush1.msra.mxu0 %v1064
      %1200 = vmatprep.subr.mxu0 0.0
      %1201 = vmatpush1.msra.mxu0 %v1065
      %1202 = vmatprep.subr.mxu0 0.0
      %1203 = vmatpush1.msra.mxu0 %v1066
      %1204 = vmatprep.subr.mxu0 0.0
      %1205 = vmatpush1.msra.mxu0 0.0
      %1206 = vmatprep.subr.mxu0 0.0
      %1207 = vmatpush1.msra.mxu0 0.0
      %1208 = vmatprep.subr.mxu0 0.0
      %1209 = vmatpush1.msra.mxu0 0.0
      %1210 = vmatprep.subr.mxu0 0.0
      %1211 = vmatpush1.msra.mxu0 0.0
      %1212 = vmatprep.subr.mxu0 0.0
      %1213 = vmatpush1.msra.mxu0 0.0
      %1214 = vmatprep.subr.mxu0 0.0
      %1215 = vmatpush1.msra.mxu0 0.0
      %1216 = vmatprep.subr.mxu0 0.0
      %1217 = vmatpush1.msra.mxu0 0.0
      %1218 = vmatprep.subr.mxu0 0.0
      %1219 = vmatpush1.msra.mxu0 0.0
      %1220 = vmatprep.subr.mxu0 0.0
      %1221 = vmatpush1.msra.mxu0 0.0
      %1222 = vmatprep.subr.mxu0 0.0
      %1223 = vmatpush1.msra.mxu0 0.0
      %1224 = vmatprep.subr.mxu0 0.0
      %1225 = vmatpush1.msra.mxu0 0.0
      %1226 = vmatprep.subr.mxu0 0.0
      %1227 = vmatpush1.msra.mxu0 0.0
      %1228 = vmatprep.subr.mxu0 0.0
      %1229 = vmatpush1.msra.mxu0 0.0
      %1230 = vmatprep.subr.mxu0 0.0
      %1231 = vmatpush1.msra.mxu0 0.0
      %1232 = vmatprep.subr.mxu0 0.0
      %1233 = vmatpush1.msra.mxu0 0.0
      %1234 = vmatprep.subr.mxu0 0.0
      %1235 = vmatpush1.msra.mxu0 0.0
      %1236 = vmatprep.mubr.f32.mxu0 0.0
      %1237 = vmatmul.mubr.f32.gmra.mrb[0].mxu0 %v988
      %v1238 = vpop.f32.mrb[0].mxu0
      %v1239 = vadd.f32 %v1134, %v1238
      %v1240 = vpop.f32.mrb[0].mxu0
      %1241 = vmatprep.mubr.f32.mxu0 0.0
      %1242 = vmatmul.mubr.f32.gmra.mrb[0].mxu0 %v991
      %v1243 = vpop.f32.mrb[0].mxu0
      %v1244 = vadd.f32 %v1139, %v1243
      %v1245 = vpop.f32.mrb[0].mxu0
      %1246 = vmatprep.mubr.f32.mxu0 0.0
      %1247 = vmatmul.mubr.f32.gmra.mrb[0].mxu0 %v994
      %v1248 = vpop.f32.mrb[0].mxu0
      %v1249 = vadd.f32 %v1144, %v1248
      %v1250 = vpop.f32.mrb[0].mxu0
      %1251 = vmatprep.mubr.f32.mxu0 0.0
      %1252 = vmatmul.mubr.f32.gmra.mrb[0].mxu0 %v997
      %v1253 = vpop.f32.mrb[0].mxu0
      %v1254 = vadd.f32 %v1149, %v1253
      %v1255 = vpop.f32.mrb[0].mxu0
      %1256 = vmatprep.mubr.f32.mxu0 0.0
      %1257 = vmatmul.mubr.f32.gmra.mrb[0].mxu0 %v1000
      %v1258 = vpop.f32.mrb[0].mxu0
      %v1259 = vadd.f32 %v1154, %v1258
      %v1260 = vpop.f32.mrb[0].mxu0
      %1261 = vmatprep.mubr.f32.mxu0 0.0
      %1262 = vmatmul.mubr.f32.gmra.mrb[0].mxu0 %v1003
      %v1263 = vpop.f32.mrb[0].mxu0
      %v1264 = vadd.f32 %v1159, %v1263
      %v1265 = vpop.f32.mrb[0].mxu0
      %1266 = vmatprep.mubr.f32.mxu0 0.0
      %1267 = vmatmul.mubr.f32.gmra.mrb[0].mxu0 %v1006
      %v1268 = vpop.f32.mrb[0].mxu0
      %v1269 = vadd.f32 %v1164, %v1268
      %v1270 = vpop.f32.mrb[0].mxu0
      %1271 = vmatprep.mubr.f32.mxu0 0.0
      %1272 = vmatmul.mubr.f32.gmra.mrb[0].mxu0 %v1009
      %v1273 = vpop.f32.mrb[0].mxu0
      %v1274 = vadd.f32 %v1169, %v1273
      %v1275 = vpop.f32.mrb[0].mxu0
      %1276 = vdwg.mxu0
      %v1277 = vadd.f32 %v899, %v1239
      %v1278 = vadd.f32 %v904, %v1244
      %v1279 = vadd.f32 %v909, %v1249
      %v1280 = vadd.f32 %v914, %v1254
      %v1281 = vadd.f32 %v919, %v1259
      %v1282 = vadd.f32 %v924, %v1264
      %v1283 = vadd.f32 %v929, %v1269
      %v1284 = vadd.f32 %v934, %v1274
      %1285 = vst [vmem:[%s253] sm:$0xff] %v1277
      %1286 = vst [vmem:[%s253 + $0x8] sm:$0xff] %v1278
      %1287 = vst [vmem:[%s253 + $0x10] sm:$0xff] %v1279
      %1288 = vst [vmem:[%s253 + $0x18] sm:$0xff] %v1280
      %1289 = vst [vmem:[%s253 + $0x20] sm:$0xff] %v1281
      %1290 = vst [vmem:[%s253 + $0x28] sm:$0xff] %v1282
      %1291 = vst [vmem:[%s253 + $0x30] sm:$0xff] %v1283
      %1292 = vst [vmem:[%s253 + $0x38] sm:$0xff] %v1284
      %v1293 = vadd.f32 %v1277, %v1278
      %v1294 = vadd.f32 %v1293, %v1279
      %v1295 = vadd.f32 %v1294, %v1280
      %v1296 = vadd.f32 %v1295, %v1281
      %v1297 = vadd.f32 %v1296, %v1282
      %v1298 = vadd.f32 %v1297, %v1283
      %v1299 = vadd.f32 %v1298, %v1284
      %v1300 = vrot.slane %v1299, 4
      %v1301 = vadd.f32 %v1299, %v1300
      %v1302 = vrot.slane %v1301, 2
      %v1303 = vadd.f32 %v1301, %v1302
      %v1304 = vrot.slane %v1303, 1
      %v1305 = vadd.f32 %v1303, %v1304
      %v1306 = vmul.f32 %v1277, %v1277
      %v1307 = vmul.f32 %v1278, %v1278
      %v1308 = vmul.f32 %v1279, %v1279
      %v1309 = vmul.f32 %v1280, %v1280
      %v1310 = vmul.f32 %v1281, %v1281
      %v1311 = vmul.f32 %v1282, %v1282
      %v1312 = vmul.f32 %v1283, %v1283
      %v1313 = vmul.f32 %v1284, %v1284
      %v1314 = vadd.f32 %v1306, %v1307
      %v1315 = vadd.f32 %v1314, %v1308
      %v1316 = vadd.f32 %v1315, %v1309
      %v1317 = vadd.f32 %v1316, %v1310
      %v1318 = vadd.f32 %v1317, %v1311
      %v1319 = vadd.f32 %v1318, %v1312
      %v1320 = vadd.f32 %v1319, %v1313
      %v1321 = vrot.slane %v1320, 4
      %v1322 = vadd.f32 %v1320, %v1321
      %v1323 = vrot.slane %v1322, 2
      %v1324 = vadd.f32 %v1322, %v1323
      %v1325 = vrot.slane %v1324, 1
      %v1326 = vadd.f32 %v1324, %v1325
      %vm1327 = vcmask 1040384
      %v1328 = vsel %vm1327, %v1305, %v1326
      %vm1329 = vcmask 1041408
      %v1330 = vsel %vm1329, %v1328, 0.0
      %p1331 = scmp.eq.s32.totalorder %s18, 0
      // Predicated region
      $region33: #{basic_block_forward.3} parent=31 // pred_check
        %p1332 = pneg %p1331
      $region34: #{basic_block_forward.3} parent=31 // pred_check_branch
        %1334 = sbr.rel (%p1332) target = $region36
      $region35: #{basic_block_forward.3} parent=31 // pred_region
        %1335 = vst [vmem:[%s5] sm:$0xff] %v1330
      $region36: #{basic_block_forward.3} parent=31 // pred_fallthru
        _
      %p1336 = scmp.ne.s32.totalorder %s18, 0
      // Predicated region
      $region37: #{basic_block_forward.3} parent=31 // pred_check
        %p1337 = pneg %p1336
      $region38: #{basic_block_forward.3} parent=31 // pred_check_branch
        %1339 = sbr.rel (%p1337) target = $region40
      $region39: #{basic_block_forward.3} parent=31 // pred_region
        %v1340 = vld [vmem:[%s5] sm:$0xff]
        %v1341 = vadd.f32 %v1340, %v1330
        %1342 = vst [vmem:[%s5] sm:$0xff] %v1341
      $region40: #{basic_block_forward.3} parent=31 // pred_fallthru
        _
      %v1343 = vld [vmem:[%s248 + $0x18] sm:$0xff]
      %v1344 = vld [vmem:[%s248 + $0x58] sm:$0xff]
      %v1345 = vld [vmem:[%s248 + $0x98] sm:$0xff]
      %v1346 = vld [vmem:[%s248 + $0xd8] sm:$0xff]
      %v1347 = vld [vmem:[%s248 + $0x118] sm:$0xff]
      %v1348 = vld [vmem:[%s248 + $0x158] sm:$0xff]
      %v1349 = vld [vmem:[%s248 + $0x198] sm:$0xff]
      %v1350 = vld [vmem:[%s248 + $0x1d8] sm:$0xff]
      %v1351 = vld [vmem:[%s2] sm:$0xff]
      %v1352 = vld [vmem:[%s2 + $0x8] sm:$0xff]
      %v1353 = vld [vmem:[%s2 + $0x10] sm:$0xff]
      %v1354 = vld [vmem:[%s2 + $0x18] sm:$0xff]
      %v1355 = vld [vmem:[%s2 + $0x20] sm:$0xff]
      %v1356 = vld [vmem:[%s2 + $0x28] sm:$0xff]
      %v1357 = vld [vmem:[%s2 + $0x30] sm:$0xff]
      %v1358 = vld [vmem:[%s2 + $0x38] sm:$0xff]
      %v1359 = vld [vmem:[%s2 + $0x40] sm:$0xff]
      %v1360 = vld [vmem:[%s2 + $0x48] sm:$0xff]
      %v1361 = vld [vmem:[%s2 + $0x50] sm:$0xff]
      %v1362 = vld [vmem:[%s2 + $0x58] sm:$0xff]
      %v1363 = vld [vmem:[%s2 + $0x60] sm:$0xff]
      %v1364 = vld [vmem:[%s2 + $0x68] sm:$0xff]
      %v1365 = vld [vmem:[%s2 + $0x70] sm:$0xff]
      %v1366 = vld [vmem:[%s2 + $0x78] sm:$0xff]
      %1367 = vmatprep.subr.mxu0 0.0
      %1368 = vmatpush1.msra.mxu0 %v1351
      %1369 = vmatprep.subr.mxu0 0.0
      %1370 = vmatpush1.msra.mxu0 %v1352
      %1371 = vmatprep.subr.mxu0 0.0
      %1372 = vmatpush1.msra.mxu0 %v1353
      %1373 = vmatprep.subr.mxu0 0.0
      %1374 = vmatpush1.msra.mxu0 %v1354
      %1375 = vmatprep.subr.mxu0 0.0
      %1376 = vmatpush1.msra.mxu0 %v1355
      %1377 = vmatprep.subr.mxu0 0.0
      %1378 = vmatpush1.msra.mxu0 %v1356
      %1379 = vmatprep.subr.mxu0 0.0
      %1380 = vmatpush1.msra.mxu0 %v1357
      %1381 = vmatprep.subr.mxu0 0.0
      %1382 = vmatpush1.msra.mxu0 %v1358
      %1383 = vmatprep.subr.mxu0 0.0
      %1384 = vmatpush1.msra.mxu0 %v1359
      %1385 = vmatprep.subr.mxu0 0.0
      %1386 = vmatpush1.msra.mxu0 %v1360
      %1387 = vmatprep.subr.mxu0 0.0
      %1388 = vmatpush1.msra.mxu0 %v1361
      %1389 = vmatprep.subr.mxu0 0.0
      %1390 = vmatpush1.msra.mxu0 %v1362
      %1391 = vmatprep.subr.mxu0 0.0
      %1392 = vmatpush1.msra.mxu0 %v1363
      %1393 = vmatprep.subr.mxu0 0.0
      %1394 = vmatpush1.msra.mxu0 %v1364
      %1395 = vmatprep.subr.mxu0 0.0
      %1396 = vmatpush1.msra.mxu0 %v1365
      %1397 = vmatprep.subr.mxu0 0.0
      %1398 = vmatpush1.msra.mxu0 %v1366
      %1399 = vmatprep.subr.mxu0 0.0
      %1400 = vmatpush1.msra.mxu0 0.0
      %1401 = vmatprep.subr.mxu0 0.0
      %1402 = vmatpush1.msra.mxu0 0.0
      %1403 = vmatprep.subr.mxu0 0.0
      %1404 = vmatpush1.msra.mxu0 0.0
      %1405 = vmatprep.subr.mxu0 0.0
      %1406 = vmatpush1.msra.mxu0 0.0
      %1407 = vmatprep.subr.mxu0 0.0
      %1408 = vmatpush1.msra.mxu0 0.0
      %1409 = vmatprep.subr.mxu0 0.0
      %1410 = vmatpush1.msra.mxu0 0.0
      %1411 = vmatprep.subr.mxu0 0.0
      %1412 = vmatpush1.msra.mxu0 0.0
      %1413 = vmatprep.subr.mxu0 0.0
      %1414 = vmatpush1.msra.mxu0 0.0
      %1415 = vmatprep.subr.mxu0 0.0
      %1416 = vmatpush1.msra.mxu0 0.0
      %1417 = vmatprep.subr.mxu0 0.0
      %1418 = vmatpush1.msra.mxu0 0.0
      %1419 = vmatprep.subr.mxu0 0.0
      %1420 = vmatpush1.msra.mxu0 0.0
      %1421 = vmatprep.subr.mxu0 0.0
      %1422 = vmatpush1.msra.mxu0 0.0
      %1423 = vmatprep.subr.mxu0 0.0
      %1424 = vmatpush1.msra.mxu0 0.0
      %1425 = vmatprep.subr.mxu0 0.0
      %1426 = vmatpush1.msra.mxu0 0.0
      %1427 = vmatprep.subr.mxu0 0.0
      %1428 = vmatpush1.msra.mxu0 0.0
      %1429 = vmatprep.subr.mxu0 0.0
      %1430 = vmatpush1.msra.mxu0 0.0
      %1431 = vmatprep.mubr.f32.mxu0 0.0
      %1432 = vmatmul.mubr.f32.gmra.mrb[0].mxu0 %v1343
      %v1433 = vpop.f32.mrb[0].mxu0
      %v1434 = vadd.f32 0.0, %v1433
      %v1435 = vpop.f32.mrb[0].mxu0
      %1436 = vmatprep.mubr.f32.mxu0 0.0
      %1437 = vmatmul.mubr.f32.gmra.mrb[0].mxu0 %v1344
      %v1438 = vpop.f32.mrb[0].mxu0
      %v1439 = vadd.f32 0.0, %v1438
      %v1440 = vpop.f32.mrb[0].mxu0
      %1441 = vmatprep.mubr.f32.mxu0 0.0
      %1442 = vmatmul.mubr.f32.gmra.mrb[0].mxu0 %v1345
      %v1443 = vpop.f32.mrb[0].mxu0
      %v1444 = vadd.f32 0.0, %v1443
      %v1445 = vpop.f32.mrb[0].mxu0
      %1446 = vmatprep.mubr.f32.mxu0 0.0
      %1447 = vmatmul.mubr.f32.gmra.mrb[0].mxu0 %v1346
      %v1448 = vpop.f32.mrb[0].mxu0
      %v1449 = vadd.f32 0.0, %v1448
      %v1450 = vpop.f32.mrb[0].mxu0
      %1451 = vmatprep.mubr.f32.mxu0 0.0
      %1452 = vmatmul.mubr.f32.gmra.mrb[0].mxu0 %v1347
      %v1453 = vpop.f32.mrb[0].mxu0
      %v1454 = vadd.f32 0.0, %v1453
      %v1455 = vpop.f32.mrb[0].mxu0
      %1456 = vmatprep.mubr.f32.mxu0 0.0
      %1457 = vmatmul.mubr.f32.gmra.mrb[0].mxu0 %v1348
      %v1458 = vpop.f32.mrb[0].mxu0
      %v1459 = vadd.f32 0.0, %v1458
      %v1460 = vpop.f32.mrb[0].mxu0
      %1461 = vmatprep.mubr.f32.mxu0 0.0
      %1462 = vmatmul.mubr.f32.gmra.mrb[0].mxu0 %v1349
      %v1463 = vpop.f32.mrb[0].mxu0
      %v1464 = vadd.f32 0.0, %v1463
      %v1465 = vpop.f32.mrb[0].mxu0
      %1466 = vmatprep.mubr.f32.mxu0 0.0
      %1467 = vmatmul.mubr.f32.gmra.mrb[0].mxu0 %v1350
      %v1468 = vpop.f32.mrb[0].mxu0
      %v1469 = vadd.f32 0.0, %v1468
      %v1470 = vpop.f32.mrb[0].mxu0
      %1471 = vdwg.mxu0
      %1472 = vst [vmem:[%s258] sm:$0xff] %v1434
      %1473 = vst [vmem:[%s258 + $0x8] sm:$0xff] %v1439
      %1474 = vst [vmem:[%s258 + $0x10] sm:$0xff] %v1444
      %1475 = vst [vmem:[%s258 + $0x18] sm:$0xff] %v1449
      %1476 = vst [vmem:[%s258 + $0x20] sm:$0xff] %v1454
      %1477 = vst [vmem:[%s258 + $0x28] sm:$0xff] %v1459
      %1478 = vst [vmem:[%s258 + $0x30] sm:$0xff] %v1464
      %1479 = vst [vmem:[%s258 + $0x38] sm:$0xff] %v1469
      %v1480 = vadd.f32 %v1434, %v1439
      %v1481 = vadd.f32 %v1480, %v1444
      %v1482 = vadd.f32 %v1481, %v1449
      %v1483 = vadd.f32 %v1482, %v1454
      %v1484 = vadd.f32 %v1483, %v1459
      %v1485 = vadd.f32 %v1484, %v1464
      %v1486 = vadd.f32 %v1485, %v1469
      %v1487 = vrot.slane %v1486, 4
      %v1488 = vadd.f32 %v1486, %v1487
      %v1489 = vrot.slane %v1488, 2
      %v1490 = vadd.f32 %v1488, %v1489
      %v1491 = vrot.slane %v1490, 1
      %v1492 = vadd.f32 %v1490, %v1491
      %v1493 = vmul.f32 %v1434, %v1434
      %v1494 = vmul.f32 %v1439, %v1439
      %v1495 = vmul.f32 %v1444, %v1444
      %v1496 = vmul.f32 %v1449, %v1449
      %v1497 = vmul.f32 %v1454, %v1454
      %v1498 = vmul.f32 %v1459, %v1459
      %v1499 = vmul.f32 %v1464, %v1464
      %v1500 = vmul.f32 %v1469, %v1469
      %v1501 = vadd.f32 %v1493, %v1494
      %v1502 = vadd.f32 %v1501, %v1495
      %v1503 = vadd.f32 %v1502, %v1496
      %v1504 = vadd.f32 %v1503, %v1497
      %v1505 = vadd.f32 %v1504, %v1498
      %v1506 = vadd.f32 %v1505, %v1499
      %v1507 = vadd.f32 %v1506, %v1500
      %v1508 = vrot.slane %v1507, 4
      %v1509 = vadd.f32 %v1507, %v1508
      %v1510 = vrot.slane %v1509, 2
      %v1511 = vadd.f32 %v1509, %v1510
      %v1512 = vrot.slane %v1511, 1
      %v1513 = vadd.f32 %v1511, %v1512
      %v1514 = vsel %vm1327, %v1492, %v1513
      %v1515 = vsel %vm1329, %v1514, 0.0
      // Predicated region
      $region41: #{basic_block_forward.3} parent=31 // pred_check
        %p1516 = pneg %p1331
      $region42: #{basic_block_forward.3} parent=31 // pred_check_branch
        %1518 = sbr.rel (%p1516) target = $region44
      $region43: #{basic_block_forward.3} parent=31 // pred_region
        %1519 = vst [vmem:[%s6] sm:$0xff] %v1515
      $region44: #{basic_block_forward.3} parent=31 // pred_fallthru
        _
      // Predicated region
      $region45: #{basic_block_forward.3} parent=31 // pred_check
        %p1520 = pneg %p1336
      $region46: #{basic_block_forward.3} parent=31 // pred_check_branch
        %1522 = sbr.rel (%p1520) target = $region48
      $region47: #{basic_block_forward.3} parent=31 // pred_region
        %v1523 = vld [vmem:[%s6] sm:$0xff]
        %v1524 = vadd.f32 %v1523, %v1515
        %1525 = vst [vmem:[%s6] sm:$0xff] %v1524
      $region48: #{basic_block_forward.3} parent=31 // pred_fallthru
        _
      %p1526 = scmp.lt.s32.totalorder %s18, 1
      %s1527 = scalar_select %p1526, %s18, 1
      %s1528 = smul.addr %s1527, 8
      %s1529 = smul.addr %s1528, 8
      %s1530 = scalar_lea.vmem %s3, %s1529
      %p1531 = scmp.lt.s32.totalorder %s18, 1
      %s1532 = scalar_select %p1531, %s18, 1
      %s1533 = smul.addr %s1532, 8
      %s1534 = smul.addr %s1533, 8
      %s1535 = scalar_lea.vmem %s4, %s1534
      // Predicated region
      $region49: #{basic_block_forward.3} parent=31 // pred_check
        %p1536 = pneg %p104
      $region50: #{basic_block_forward.3} parent=31 // pred_check_branch
        %1538 = sbr.rel (%p1536) target = $region52
      $region51: #{basic_block_forward.3} parent=31 // pred_region
        _
      $region52: #{basic_block_forward.3} parent=31 // pred_fallthru
        _
      // Predicated region
      $region53: #{basic_block_forward.3} parent=31 // pred_check
        %p1539 = pneg %p130
      $region54: #{basic_block_forward.3} parent=31 // pred_check_branch
        %1541 = sbr.rel (%p1539) target = $region56
      $region55: #{basic_block_forward.3} parent=31 // pred_region
        _
      $region56: #{basic_block_forward.3} parent=31 // pred_fallthru
        _
      // Predicated region
      $region57: #{basic_block_forward.3} parent=31 // pred_check
        %p1542 = pneg %p151
      $region58: #{basic_block_forward.3} parent=31 // pred_check_branch
        %1544 = sbr.rel (%p1542) target = $region60
      $region59: #{basic_block_forward.3} parent=31 // pred_region
        _
      $region60: #{basic_block_forward.3} parent=31 // pred_fallthru
        _
      // Predicated region
      $region61: #{basic_block_forward.3} parent=31 // pred_check
        %p1545 = pneg %p172
      $region62: #{basic_block_forward.3} parent=31 // pred_check_branch
        %1547 = sbr.rel (%p1545) target = $region64
      $region63: #{basic_block_forward.3} parent=31 // pred_region
        _
      $region64: #{basic_block_forward.3} parent=31 // pred_fallthru
        _
      // Predicated region
      $region65: #{basic_block_forward.3} parent=31 // pred_check
        %p1548 = pneg %p151
      $region66: #{basic_block_forward.3} parent=31 // pred_check_branch
        %1550 = sbr.rel (%p1548) target = $region68
      $region67: #{basic_block_forward.3} parent=31 // pred_region
        _
      $region68: #{basic_block_forward.3} parent=31 // pred_fallthru
        _
      // Predicated region
      $region69: #{basic_block_forward.3} parent=31 // pred_check
        %p1551 = pneg %p172
      $region70: #{basic_block_forward.3} parent=31 // pred_check_branch
        %1553 = sbr.rel (%p1551) target = $region72
      $region71: #{basic_block_forward.3} parent=31 // pred_region
        _
      $region72: #{basic_block_forward.3} parent=31 // pred_fallthru
        _
    $region32: #{basic_block_forward.3} parent=5 // pred_fallthru
      _
    %p1554 = scmp.le.s32.totalorder 2, %s13
    // Predicated region
    $region73: #{basic_block_forward.3} parent=5 // pred_check
      %p1555 = pneg %p1554
    $region74: #{basic_block_forward.3} parent=5 // pred_check_branch
      %1557 = sbr.rel (%p1555) target = $region76
    $region75: #{basic_block_forward.3} parent=5 // pred_region
      %s1558 = ssub.s32 %s13, 2
      // Predicated region
      $region77: #{basic_block_forward.3} parent=75 // pred_check
        %p1559 = pneg %p110
      $region78: #{basic_block_forward.3} parent=75 // pred_check_branch
        %1561 = sbr.rel (%p1559) target = $region80
      $region79: #{basic_block_forward.3} parent=75 // pred_region
        %p1562 = scmp.lt.s32.totalorder %s19, 1
        %s1563 = scalar_select %p1562, %s19, 1
        %s1564 = smul.addr %s1563, 8
        %s1565 = smul.addr %s1564, 8
        %s1566 = scalar_lea.vmem %s3, %s1565
      $region80: #{basic_block_forward.3} parent=75 // pred_fallthru
        _
      // Predicated region
      $region81: #{basic_block_forward.3} parent=75 // pred_check
        %p1567 = pneg %p136
      $region82: #{basic_block_forward.3} parent=75 // pred_check_branch
        %1569 = sbr.rel (%p1567) target = $region84
      $region83: #{basic_block_forward.3} parent=75 // pred_region
        %p1570 = scmp.lt.s32.totalorder %s19, 1
        %s1571 = scalar_select %p1570, %s19, 1
        %s1572 = smul.addr %s1571, 8
        %s1573 = smul.addr %s1572, 8
        %s1574 = scalar_lea.vmem %s4, %s1573
      $region84: #{basic_block_forward.3} parent=75 // pred_fallthru
        _
    $region76: #{basic_block_forward.3} parent=5 // pred_fallthru
      _
  $region6: #{basic_block_forward.3} parent=0 // loop_footer
    %s17 = sadd.s32 1, %s13
  $region7: #{basic_block_forward.3} parent=0 // loop_footer_branch
    %12 = sbr.rel target = $region3
  $region8: #{basic_block_forward.3} parent=0 // loop_exit
    _

</llo_original>
